<compile_context>
chip_gen: v7x
topology: tpu7x:2x2x1
jax: 0.10.0
libtpu: 0.0.40
codegen_flags: <defaults>
</compile_context>

<pallas_src>
import functools

import numpy as np
import jax
import jax.numpy as jnp
from jax.experimental import pallas as pl
from jax.experimental.pallas import tpu as pltpu

_NEG_BIG = np.float32(-1e30)          # large-negative mask value (avoids -inf NaN traps)
_INV_SQRT2 = np.float32(0.7071067811865476)


def _round_up(x, m):
    return ((x + m - 1) // m) * m


def _pick_tile(dim, cap):
    """Largest lane-aligned tile <= cap that divides round_up(dim, 128); avoids
    padding the dimension beyond the 128-alignment minimum whenever possible."""
    p = _round_up(dim, 128)
    if p <= cap:
        return p
    for cand in range(cap - cap % 128, 0, -128):
        if p % cand == 0:
            return cand
    return max(128, cap - cap % 128)


@functools.lru_cache(maxsize=None)
def _default_vmem_limit():
    """Generation-aware scoped-VMEM budget: ~3/4 of physical VMEM (96 MiB on
    v5e/v6e's 128 MiB, 48 MiB on v7x's 64 MiB); conservative fallback otherwise."""
    try:
        cap = int(pltpu.get_tpu_info().vmem_capacity_bytes)
        return max(32 * 1024 * 1024, min(96 * 1024 * 1024, (cap * 3) // 4))
    except Exception:
        return 48 * 1024 * 1024


# ----------------------------- matmul kernel --------------------------------

def _epilogue(acc, b_ref, r_ref, act):
    if b_ref is not None:
        acc = acc + b_ref[...]
    if act == "gelu":
        # exact (erf) GELU, matching torch.nn.GELU(approximate='none') / F.gelu
        acc = 0.5 * acc * (1.0 + jax.lax.erf(acc * _INV_SQRT2))
    if r_ref is not None:
        acc = acc + r_ref[...].astype(jnp.float32)
    return acc


def _matmul_kernel(*refs, act, nk, has_bias, has_res):
    # refs = (x, w, [bias], [residual], out, [acc_scratch if nk > 1])
    x_ref, w_ref = refs[0], refs[1]
    idx = 2
    b_ref = refs[idx] if has_bias else None
    idx += int(has_bias)
    r_ref = refs[idx] if has_res else None
    idx += int(has_res)
    o_ref = refs[idx]

    if nk == 1:
        # full-K tile: no accumulator scratch, no init/finalize branches
        acc = jnp.dot(x_ref[...], w_ref[...], preferred_element_type=jnp.float32)
        o_ref[...] = _epilogue(acc, b_ref, r_ref, act).astype(o_ref.dtype)
        return

    acc_ref = refs[idx + 1]
    k = pl.program_id(2)

    @pl.when(k == 0)
    def _():
        acc_ref[...] = jnp.zeros_like(acc_ref)

    acc_ref[...] += jnp.dot(x_ref[...], w_ref[...],
                            preferred_element_type=jnp.float32)

    @pl.when(k == nk - 1)
    def _():
        o_ref[...] = _epilogue(acc_ref[...], b_ref, r_ref, act).astype(o_ref.dtype)


def pallas_linear(x, w, b=None, act=None, residual=None, out_dtype=jnp.bfloat16,
                  tm=256, tn=1280, tk=2560, vmem_limit=None):
    """y = act(x @ w + b) (+ residual).  x: (..., K), w: (K, N) (stored bf16).

    bf16 operands feed the MXU; accumulation, bias/GELU/residual epilogue in f32;
    output dtype is bf16 by default (f32 only for the final logits)."""
    lead = x.shape[:-1]
    K = x.shape[-1]
    N = w.shape[-1]
    x2 = x.reshape(-1, K)
    M = x2.shape[0]

    tm = min(tm, _round_up(M, 8))
    tn = _pick_tile(N, tn)
    tk = _pick_tile(K, tk)
    Mp, Np, Kp = _round_up(M, tm), _round_up(N, tn), _round_up(K, tk)
    nk = Kp // tk

    xb = x2.astype(jnp.bfloat16)
    if (Mp, Kp) != (M, K):
        xb = jnp.pad(xb, ((0, Mp - M), (0, Kp - K)))
    wb = w.astype(jnp.bfloat16)          # no-op: params stored bf16 at init
    if (Kp, Np) != wb.shape:
        wb = jnp.pad(wb, ((0, Kp - K), (0, Np - N)))

    args = [xb, wb]
    in_specs = [pl.BlockSpec((tm, tk), lambda i, j, k: (i, k)),
                pl.BlockSpec((tk, tn), lambda i, j, k: (k, j))]

    has_bias = b is not None
    if has_bias:
        bb = b.astype(jnp.float32).reshape(1, N)
        if Np != N:
            bb = jnp.pad(bb, ((0, 0), (0, Np - N)))
        args.append(bb)
        in_specs.append(pl.BlockSpec((1, tn), lambda i, j, k: (0, j)))

    has_res = residual is not None
    if has_res:
        rb = residual.reshape(-1, N)     # kept in its native (bf16) dtype
        if (Mp, Np) != rb.shape:
            rb = jnp.pad(rb, ((0, Mp - M), (0, Np - N)))
        args.append(rb)
        in_specs.append(pl.BlockSpec((tm, tn), lambda i, j, k: (i, j)))

    out = pl.pallas_call(
        functools.partial(_matmul_kernel, act=act, nk=nk,
                          has_bias=has_bias, has_res=has_res),
        out_shape=jax.ShapeDtypeStruct((Mp, Np), out_dtype),
        grid=(Mp // tm, Np // tn, nk),
        in_specs=in_specs,
        out_specs=pl.BlockSpec((tm, tn), lambda i, j, k: (i, j)),
        scratch_shapes=([pltpu.VMEM((tm, tn), jnp.float32)] if nk > 1 else []),
        compiler_params=pltpu.CompilerParams(
            dimension_semantics=("parallel", "parallel", "arbitrary"),
            vmem_limit_bytes=(vmem_limit or _default_vmem_limit())),
    )(*args)
    if (Mp, Np) != (M, N):
        out = out[:M, :N]
    return out.reshape(*lead, N)


# ----------------------------- layernorm kernel -----------------------------

def _layernorm_kernel(x_ref, g_ref, b_ref, o_ref, *, eps):
    x = x_ref[...].astype(jnp.float32)
    mu = jnp.mean(x, axis=-1, keepdims=True)
    xc = x - mu
    var = jnp.mean(xc * xc, axis=-1, keepdims=True)
    y = xc * jax.lax.rsqrt(var + eps)
    o_ref[...] = (y * g_ref[...] + b_ref[...]).astype(o_ref.dtype)


def pallas_layernorm(x, gamma, beta, eps=1e-5, tm=512, out_dtype=jnp.bfloat16):
    lead = x.shape[:-1]
    D = x.shape[-1]
    x2 = x.reshape(-1, D)                 # stays bf16; stats computed in f32 in-kernel
    M = x2.shape[0]
    tm = min(tm, _round_up(M, 8))
    Mp = _round_up(M, tm)
    if Mp != M:
        x2 = jnp.pad(x2, ((0, Mp - M), (0, 0)))
    out = pl.pallas_call(
        functools.partial(_layernorm_kernel, eps=eps),
        out_shape=jax.ShapeDtypeStruct((Mp, D), out_dtype),
        grid=(Mp // tm,),
        in_specs=[pl.BlockSpec((tm, D), lambda i: (i, 0)),
                  pl.BlockSpec((1, D), lambda i: (0, 0)),
                  pl.BlockSpec((1, D), lambda i: (0, 0))],
        out_specs=pl.BlockSpec((tm, D), lambda i: (i, 0)),
        compiler_params=pltpu.CompilerParams(
            dimension_semantics=("parallel",)),
    )(x2, gamma.reshape(1, D).astype(jnp.float32),
      beta.reshape(1, D).astype(jnp.float32))
    if Mp != M:
        out = out[:M]
    return out.reshape(*lead, D)


# --------------------------- flash attention kernel -------------------------

def _attention_kernel(q_ref, k_ref, v_ref, o_ref, m_ref, l_ref, acc_ref,
                      *, scale, n_head, dh, causal, mask_kv, tq, tk, kv_len, nkv):
    i = pl.program_id(1)
    j = pl.program_id(2)

    @pl.when(j == 0)
    def _():
        m_ref[...] = jnp.full_like(m_ref, -jnp.inf)
        l_ref[...] = jnp.zeros_like(l_ref)
        acc_ref[...] = jnp.zeros_like(acc_ref)

    def process_tile():
        valid = None
        if causal or mask_kv:
            col = j * tk + jax.lax.broadcasted_iota(jnp.int32, (tq, tk), 1)
            valid = col < kv_len
            if causal:
                row = i * tq + jax.lax.broadcasted_iota(jnp.int32, (tq, tk), 0)
                valid = jnp.logical_and(valid, col <= row)

        q = q_ref[0]                      # (tq, n_head*dh) bf16, heads packed on lanes
        k = k_ref[0]                      # (tk, n_head*dh)
        v = v_ref[0]
        # Heads stay lane-packed; per-head dots keep loads/stores 128-lane dense.
        for h in range(n_head):
            sl = slice(h * dh, (h + 1) * dh)
            qh, kh, vh = q[:, sl], k[:, sl], v[:, sl]
            s = jax.lax.dot_general(qh, kh, (((1,), (1,)), ((), ())),
                                    preferred_element_type=jnp.float32) * scale
            if valid is not None:
                s = jnp.where(valid, s, _NEG_BIG)
            m_prev = m_ref[h]                                  # (tq, 1)
            m_new = jnp.maximum(m_prev, jnp.max(s, axis=-1, keepdims=True))
            p = jnp.exp(s - m_new)
            if valid is not None:
                p = jnp.where(valid, p, 0.0)   # load-bearing for fully-masked rows
            alpha = jnp.exp(m_prev - m_new)
            l_ref[h] = alpha * l_ref[h] + jnp.sum(p, axis=-1, keepdims=True)
            acc_ref[h] = alpha * acc_ref[h] + jnp.dot(p.astype(vh.dtype), vh,
                                                      preferred_element_type=jnp.float32)
            m_ref[h] = m_new

    if causal:
        # skip kv tiles that lie entirely above the diagonal for this q tile
        @pl.when(j * tk <= (i + 1) * tq - 1)
        def _():
            process_tile()
    else:
        process_tile()

    @pl.when(j == nkv - 1)
    def _():
        outs = [acc_ref[h] / l_ref[h] for h in range(n_head)]   # exact divide
        o_ref[0] = jnp.concatenate(outs, axis=-1).astype(o_ref.dtype)


def pallas_attention(q_src, k_src, v_src, n_head, d_model, causal,
                     out_dtype=jnp.bfloat16, tq=256, tk=512):
    """Flash-style attention.  Each *_src is (array, col_block): array has shape
    (B, T, n_blocks*d_model) and the heads-packed data sits in columns
    [col_block*d_model : (col_block+1)*d_model].  This lets the kernel read Q/K/V
    straight out of a fused QKV / KV projection output (zero-copy wrapper)."""
    q_arr, q_col = q_src
    k_arr, k_col = k_src
    v_arr, v_col = v_src
    B = q_arr.shape[0]
    Lq = q_arr.shape[1]
    Lk = k_arr.shape[1]
    D = d_model
    dh = D // n_head
    scale = float(1.0 / np.sqrt(dh))

    tq = min(tq, _round_up(Lq, 8))
    tk = min(tk, _round_up(Lk, 8))
    Lqp = _round_up(Lq, tq)
    Lkp = _round_up(Lk, tk)

    # Pad each *distinct* source array once along T (no-op when already aligned).
    need = {}
    for arr, rows in ((q_arr, Lqp), (k_arr, Lkp), (v_arr, Lkp)):
        need[id(arr)] = max(need.get(id(arr), 0), rows)
    padded = {}
    for arr in (q_arr, k_arr, v_arr):
        if id(arr) not in padded:
            a = arr.astype(jnp.bfloat16)
            rows = need[id(arr)]
            if arr.shape[1] < rows:
                a = jnp.pad(a, ((0, 0), (0, rows - arr.shape[1]), (0, 0)))
            padded[id(arr)] = a
    qb, kb, vb = padded[id(q_arr)], padded[id(k_arr)], padded[id(v_arr)]

    nkv = Lkp // tk
    out = pl.pallas_call(
        functools.partial(_attention_kernel, scale=scale, n_head=n_head, dh=dh,
                          causal=causal, mask_kv=(Lkp != Lk), tq=tq, tk=tk,
                          kv_len=Lk, nkv=nkv),
        out_shape=jax.ShapeDtypeStruct((B, Lqp, D), out_dtype),
        grid=(B, Lqp // tq, nkv),
        in_specs=[pl.BlockSpec((1, tq, D), lambda b, i, j, c=q_col: (b, i, c)),
                  pl.BlockSpec((1, tk, D), lambda b, i, j, c=k_col: (b, j, c)),
                  pl.BlockSpec((1, tk, D), lambda b, i, j, c=v_col: (b, j, c))],
        out_specs=pl.BlockSpec((1, tq, D), lambda b, i, j: (b, i, 0)),
        scratch_shapes=[pltpu.VMEM((n_head, tq, 1), jnp.float32),
                        pltpu.VMEM((n_head, tq, 1), jnp.float32),
                        pltpu.VMEM((n_head, tq, dh), jnp.float32)],
        compiler_params=pltpu.CompilerParams(
            dimension_semantics=("parallel", "parallel", "arbitrary"),
            vmem_limit_bytes=_default_vmem_limit()),
    )(qb, kb, vb)
    if Lqp != Lq:
        out = out[:, :Lq, :]
    return out


# ----------------------------- model pieces ---------------------------------

def conv1d_gelu(x, wmat, b, stride, kw=3, padding=1, channels_last_out=False):
    """PyTorch-equivalent Conv1d (NCL input) + exact GELU.

    wmat is the pre-rearranged (kw*Cin, Cout) bf16 weight built at init.
    Built from kw strided bf16 taps + concat feeding the tiled Pallas matmul."""
    B, Cin, L = x.shape
    out_len = (L + 2 * padding - kw) // stride + 1
    xt = jnp.transpose(x, (0, 2, 1)).astype(jnp.bfloat16)      # (B, L, Cin) bf16
    xp = jnp.pad(xt, ((0, 0), (padding, padding), (0, 0)))
    taps = [jax.lax.slice_in_dim(xp, j, j + (out_len - 1) * stride + 1, stride, axis=1)
            for j in range(kw)]                                # each (B, out_len, Cin)
    # TODO(synk): stream the taps via manual DMA (pl.ANY + make_async_copy) instead
    # of materializing the bf16 im2col patches; only runs twice per utterance.
    patches = jnp.concatenate(taps, axis=-1)                   # (B, out_len, kw*Cin) bf16
    y = pallas_linear(patches, wmat, b, act="gelu")            # (B, out_len, Cout) bf16
    return y if channels_last_out else jnp.transpose(y, (0, 2, 1))


def sinusoids(length, channels, max_timescale=10000):
    assert channels % 2 == 0
    log_inc = np.log(max_timescale) / (channels // 2 - 1)
    inv = np.exp(-log_inc * np.arange(channels // 2))
    scaled = np.arange(length)[:, None] * inv[None, :]
    return jnp.asarray(np.concatenate([np.sin(scaled), np.cos(scaled)], axis=1),
                       dtype=jnp.float32)


def self_attention(x, p, n_head, causal):
    D = x.shape[-1]
    qkv = pallas_linear(x, p["w_qkv"], p["b_qkv"])             # fused Q|K|V, (B,T,3D) bf16
    if D % 128 == 0:
        # zero-copy: attention BlockSpecs select the Q/K/V column blocks directly
        return pallas_attention((qkv, 0), (qkv, 1), (qkv, 2), n_head, D, causal)
    q, k, v = qkv[..., :D], qkv[..., D:2 * D], qkv[..., 2 * D:]
    return pallas_attention((q, 0), (k, 0), (v, 0), n_head, D, causal)


def cross_attention(x, xa, p, n_head):
    D = x.shape[-1]
    q = pallas_linear(x, p["wq"], p["bq"])
    kv = pallas_linear(xa, p["w_kv"], p["b_kv"])               # fused K|V, (B,Tk,2D) bf16
    if D % 128 == 0:
        return pallas_attention((q, 0), (kv, 0), (kv, 1), n_head, D, causal=False)
    k, v = kv[..., :D], kv[..., D:]
    return pallas_attention((q, 0), (k, 0), (v, 0), n_head, D, causal=False)


def residual_block(x, p, n_head, xa=None, causal=False):
    h = pallas_layernorm(x, p["attn_ln_g"], p["attn_ln_b"])
    a = self_attention(h, p["attn"], n_head, causal=causal)
    x = pallas_linear(a, p["attn"]["wo"], p["attn"]["bo"], residual=x)
    if xa is not None:
        h = pallas_layernorm(x, p["cross_ln_g"], p["cross_ln_b"])
        a = cross_attention(h, xa, p["cross"], n_head)
        x = pallas_linear(a, p["cross"]["wo"], p["cross"]["bo"], residual=x)
    h = pallas_layernorm(x, p["mlp_ln_g"], p["mlp_ln_b"])
    h = pallas_linear(h, p["mlp_w1"], p["mlp_b1"], act="gelu")
    x = pallas_linear(h, p["mlp_w2"], p["mlp_b2"], residual=x)
    return x


def encoder_forward(params, mel, n_head):
    p = params["encoder"]
    x = conv1d_gelu(mel, p["conv1_w"], p["conv1_b"], stride=1)
    x = conv1d_gelu(x, p["conv2_w"], p["conv2_b"], stride=2,
                    channels_last_out=True)                    # (B, n_audio_ctx, n_state)
    x = (x + p["pos_emb"]).astype(jnp.bfloat16)
    for bp in p["blocks"]:
        x = residual_block(x, bp, n_head, causal=False)
    return pallas_layernorm(x, p["ln_post_g"], p["ln_post_b"])


def decoder_forward(params, tokens, xa, n_head):
    p = params["decoder"]
    T = tokens.shape[-1]
    x = jnp.take(p["tok_emb"], tokens, axis=0) + p["pos_emb"][:T]
    x = x.astype(xa.dtype)
    for bp in p["blocks"]:
        x = residual_block(x, bp, n_head, xa=xa, causal=True)
    x = pallas_layernorm(x, p["ln_g"], p["ln_b"])
    # tied weights, no bias; tok_emb_T is a pre-transposed bf16 copy from init
    logits = pallas_linear(x, p["tok_emb_T"], out_dtype=jnp.float32, tn=2048)
    return logits


def whisper_forward(params, mel, tokens, dims):
    audio_features = encoder_forward(params, mel, dims["n_audio_head"])
    return decoder_forward(params, tokens, audio_features, dims["n_text_head"])


# TODO(synk): install_kv_cache_hooks / detect_language / transcribe / decode are
# runtime decoding machinery (module hooks, beam search), not forward compute; not ported.


# ----------------------------- parameter init -------------------------------

def _key_stream(key):
    i = 0
    while True:
        yield jax.random.fold_in(key, i)
        i += 1


def _normal(key, shape, scale=0.02):
    return scale * jax.random.normal(key, shape, jnp.float32)


def _conv_wmat(w):
    """(Cout, Cin, Kw) PyTorch conv weight -> (Kw*Cin, Cout) bf16 matmul weight."""
    cout, cin, kw = w.shape
    return jnp.transpose(w, (2, 1, 0)).reshape(kw * cin, cout).astype(jnp.bfloat16)


def _init_self_mha(ks, n_state):
    wq = _normal(next(ks), (n_state, n_state))
    wk = _normal(next(ks), (n_state, n_state))
    wv = _normal(next(ks), (n_state, n_state))
    return {
        # fused query|key|value weights (bf16); key slice of the bias stays zero (no key bias)
        "w_qkv": jnp.concatenate([wq, wk, wv], axis=1).astype(jnp.bfloat16),
        "b_qkv": jnp.zeros((3 * n_state,), jnp.float32),
        "wo": _normal(next(ks), (n_state, n_state)).astype(jnp.bfloat16),
        "bo": jnp.zeros((n_state,), jnp.float32),
    }


def _init_cross_mha(ks, n_state):
    wk = _normal(next(ks), (n_state, n_state))
    wv = _normal(next(ks), (n_state, n_state))
    return {
        "wq": _normal(next(ks), (n_state, n_state)).astype(jnp.bfloat16),
        "bq": jnp.zeros((n_state,), jnp.float32),
        "w_kv": jnp.concatenate([wk, wv], axis=1).astype(jnp.bfloat16),
        "b_kv": jnp.zeros((2 * n_state,), jnp.float32),
        "wo": _normal(next(ks), (n_state, n_state)).astype(jnp.bfloat16),
        "bo": jnp.zeros((n_state,), jnp.float32),
    }


def _init_block(ks, n_state, cross):
    p = {
        "attn": _init_self_mha(ks, n_state),
        "attn_ln_g": jnp.ones((n_state,), jnp.float32),
        "attn_ln_b": jnp.zeros((n_state,), jnp.float32),
        "mlp_w1": _normal(next(ks), (n_state, 4 * n_state)).astype(jnp.bfloat16),
        "mlp_b1": jnp.zeros((4 * n_state,), jnp.float32),
        "mlp_w2": _normal(next(ks), (4 * n_state, n_state)).astype(jnp.bfloat16),
        "mlp_b2": jnp.zeros((n_state,), jnp.float32),
        "mlp_ln_g": jnp.ones((n_state,), jnp.float32),
        "mlp_ln_b": jnp.zeros((n_state,), jnp.float32),
    }
    if cross:
        p["cross"] = _init_cross_mha(ks, n_state)
        p["cross_ln_g"] = jnp.ones((n_state,), jnp.float32)
        p["cross_ln_b"] = jnp.zeros((n_state,), jnp.float32)
    return p


def init_params(key, dims):
    ks = _key_stream(key)
    na, nt = dims["n_audio_state"], dims["n_text_state"]
    enc = {
        "conv1_w": _conv_wmat(_normal(next(ks), (na, dims["n_mels"], 3))),
        "conv1_b": jnp.zeros((na,), jnp.float32),
        "conv2_w": _conv_wmat(_normal(next(ks), (na, na, 3))),
        "conv2_b": jnp.zeros((na,), jnp.float32),
        "pos_emb": sinusoids(dims["n_audio_ctx"], na).astype(jnp.bfloat16),
        "blocks": [_init_block(ks, na, cross=False)
                   for _ in range(dims["n_audio_layer"])],
        "ln_post_g": jnp.ones((na,), jnp.float32),
        "ln_post_b": jnp.zeros((na,), jnp.float32),
    }
    tok = _normal(next(ks), (dims["n_vocab"], nt))
    dec = {
        "tok_emb": tok.astype(jnp.bfloat16),
        "tok_emb_T": tok.T.astype(jnp.bfloat16),   # pre-transposed copy for tied logits
        "pos_emb": _normal(next(ks), (dims["n_text_ctx"], nt)).astype(jnp.bfloat16),
        "blocks": [_init_block(ks, nt, cross=True)
                   for _ in range(dims["n_text_layer"])],
        "ln_g": jnp.ones((nt,), jnp.float32),
        "ln_b": jnp.zeros((nt,), jnp.float32),
        # causal mask is generated inside the attention kernel (broadcasted_iota)
    }
    return {"encoder": enc, "decoder": dec}


# ----------------------------------- main -----------------------------------

if __name__ == "__main__":
    dims = dict(n_mels=8, n_audio_ctx=8, n_audio_state=32, n_audio_head=2,
                n_audio_layer=2, n_vocab=64, n_text_ctx=8, n_text_state=32,
                n_text_head=2, n_text_layer=2)

    key = jax.random.PRNGKey(0)
    pkey, mkey, tkey = jax.random.split(key, 3)

    params = init_params(pkey, dims)
    # mel: (batch, n_mels, 2 * n_audio_ctx) -- conv2 stride 2 brings it to n_audio_ctx
    mel = jax.random.normal(mkey, (2, dims["n_mels"], dims["n_audio_ctx"] * 2),
                            jnp.float32)
    tokens = jax.random.randint(tkey, (2, dims["n_text_ctx"]), 0, dims["n_vocab"],
                                dtype=jnp.int32)

    fwd = jax.jit(lambda p, m, t: whisper_forward(p, m, t, dims))
    logits = fwd(params, mel, tokens)
    jax.block_until_ready(logits)

    assert logits.shape == (2, dims["n_text_ctx"], dims["n_vocab"]), logits.shape
    assert logits.dtype == jnp.float32
    assert bool(jnp.all(jnp.isfinite(logits)))
    print("KERNEL_OK")
</pallas_src>

<mosaic_0001>
module attributes {stable_mosaic.version = 11 : i64} {
  func.func @_matmul_kernel(%arg0: i32, %arg1: i32, %arg2: i32, %arg3: memref<32x128xbf16, #tpu.memory_space<vmem>>, %arg4: memref<128x128xbf16, #tpu.memory_space<vmem>>, %arg5: memref<1x128xf32, #tpu.memory_space<vmem>>, %arg6: memref<32x128xbf16, #tpu.memory_space<vmem>>) attributes {dimension_semantics = [#tpu.dimension_semantics<parallel>, #tpu.dimension_semantics<parallel>, #tpu.dimension_semantics<arbitrary>], iteration_bounds = array<i64: 1, 1, 1>, scalar_prefetch = 0 : i64, scratch_operands = 0 : i64, tpu.core_type = #tpu.core_type<tc>, window_params = [{transform_indices = @transform_0, window_bounds = array<i64: 32, 128>}, {transform_indices = @transform_1, window_bounds = array<i64: 128, 128>}, {transform_indices = @transform_2, window_bounds = array<i64: 1, 128>}, {transform_indices = @transform_3, window_bounds = array<i64: 32, 128>}]} {
    %c0 = arith.constant 0 : index
    %c0_0 = arith.constant 0 : index
    %0 = vector.load %arg3[%c0, %c0_0] : memref<32x128xbf16, #tpu.memory_space<vmem>>, vector<32x128xbf16>
    %c0_1 = arith.constant 0 : index
    %c0_2 = arith.constant 0 : index
    %1 = vector.load %arg4[%c0_1, %c0_2] : memref<128x128xbf16, #tpu.memory_space<vmem>>, vector<128x128xbf16>
    %cst = arith.constant dense<0.000000e+00> : vector<32x128xf32>
    %2 = tpu.matmul %0, %1, %cst {dimension_numbers = #tpu.dot_dimension_numbers<[1], [0], [0], [1], [0, 0, 1, 1], [], []>} : vector<32x128xbf16>, vector<128x128xbf16>, vector<32x128xf32> -> vector<32x128xf32>
    %c0_3 = arith.constant 0 : index
    %c0_4 = arith.constant 0 : index
    %3 = vector.load %arg5[%c0_3, %c0_4] : memref<1x128xf32, #tpu.memory_space<vmem>>, vector<1x128xf32>
    %4 = vector.broadcast %3 : vector<1x128xf32> to vector<32x128xf32>
    %5 = arith.addf %2, %4 : vector<32x128xf32>
    %cst_5 = arith.constant 5.000000e-01 : f32
    %6 = vector.broadcast %cst_5 : f32 to vector<32x128xf32>
    %7 = arith.mulf %6, %5 : vector<32x128xf32>
    %cst_6 = arith.constant 0.707106769 : f32
    %8 = vector.broadcast %cst_6 : f32 to vector<32x128xf32>
    %9 = arith.mulf %5, %8 : vector<32x128xf32>
    %10 = math.erf %9 : vector<32x128xf32>
    %cst_7 = arith.constant 1.000000e+00 : f32
    %11 = vector.broadcast %cst_7 : f32 to vector<32x128xf32>
    %12 = arith.addf %11, %10 : vector<32x128xf32>
    %13 = arith.mulf %7, %12 : vector<32x128xf32>
    %14 = arith.truncf %13 : vector<32x128xf32> to vector<32x128xbf16>
    %c0_8 = arith.constant 0 : index
    %c0_9 = arith.constant 0 : index
    %15 = vector.load %arg6[%c0_8, %c0_9] : memref<32x128xbf16, #tpu.memory_space<vmem>>, vector<32x128xbf16>
    tpu.vector_store %arg6[%c0_8, %c0_9], %14 {strides = array<i32>} : memref<32x128xbf16, #tpu.memory_space<vmem>>, vector<32x128xbf16>,
    return
  }
  func.func @transform_0(%arg0: i32, %arg1: i32, %arg2: i32) -> (i32, i32) {
    %c0_i32 = arith.constant 0 : i32
    return %arg0, %arg2 : i32, i32
  }
  func.func @transform_1(%arg0: i32, %arg1: i32, %arg2: i32) -> (i32, i32) {
    %c0_i32 = arith.constant 0 : i32
    return %arg2, %arg1 : i32, i32
  }
  func.func @transform_2(%arg0: i32, %arg1: i32, %arg2: i32) -> (i32, i32) {
    %c0_i32 = arith.constant 0 : i32
    %c0_i32_0 = arith.constant 0 : i32
    return %c0_i32, %arg1 : i32, i32
  }
  func.func @transform_3(%arg0: i32, %arg1: i32, %arg2: i32) -> (i32, i32) {
    %c0_i32 = arith.constant 0 : i32
    return %arg0, %arg1 : i32, i32
  }
}

module attributes {stable_mosaic.version = 11 : i64} {
  func.func @_matmul_kernel(%arg0: i32, %arg1: i32, %arg2: i32, %arg3: memref<16x128xbf16, #tpu.memory_space<vmem>>, %arg4: memref<128x128xbf16, #tpu.memory_space<vmem>>, %arg5: memref<1x128xf32, #tpu.memory_space<vmem>>, %arg6: memref<16x128xbf16, #tpu.memory_space<vmem>>) attributes {dimension_semantics = [#tpu.dimension_semantics<parallel>, #tpu.dimension_semantics<parallel>, #tpu.dimension_semantics<arbitrary>], iteration_bounds = array<i64: 1, 1, 1>, scalar_prefetch = 0 : i64, scratch_operands = 0 : i64, tpu.core_type = #tpu.core_type<tc>, window_params = [{transform_indices = @transform_0, window_bounds = array<i64: 16, 128>}, {transform_indices = @transform_1, window_bounds = array<i64: 128, 128>}, {transform_indices = @transform_2, window_bounds = array<i64: 1, 128>}, {transform_indices = @transform_3, window_bounds = array<i64: 16, 128>}]} {
    %c0 = arith.constant 0 : index
    %c0_0 = arith.constant 0 : index
    %0 = vector.load %arg3[%c0, %c0_0] : memref<16x128xbf16, #tpu.memory_space<vmem>>, vector<16x128xbf16>
    %c0_1 = arith.constant 0 : index
    %c0_2 = arith.constant 0 : index
    %1 = vector.load %arg4[%c0_1, %c0_2] : memref<128x128xbf16, #tpu.memory_space<vmem>>, vector<128x128xbf16>
    %cst = arith.constant dense<0.000000e+00> : vector<16x128xf32>
    %2 = tpu.matmul %0, %1, %cst {dimension_numbers = #tpu.dot_dimension_numbers<[1], [0], [0], [1], [0, 0, 1, 1], [], []>} : vector<16x128xbf16>, vector<128x128xbf16>, vector<16x128xf32> -> vector<16x128xf32>
    %c0_3 = arith.constant 0 : index
    %c0_4 = arith.constant 0 : index
    %3 = vector.load %arg5[%c0_3, %c0_4] : memref<1x128xf32, #tpu.memory_space<vmem>>, vector<1x128xf32>
    %4 = vector.broadcast %3 : vector<1x128xf32> to vector<16x128xf32>
    %5 = arith.addf %2, %4 : vector<16x128xf32>
    %cst_5 = arith.constant 5.000000e-01 : f32
    %6 = vector.broadcast %cst_5 : f32 to vector<16x128xf32>
    %7 = arith.mulf %6, %5 : vector<16x128xf32>
    %cst_6 = arith.constant 0.707106769 : f32
    %8 = vector.broadcast %cst_6 : f32 to vector<16x128xf32>
    %9 = arith.mulf %5, %8 : vector<16x128xf32>
    %10 = math.erf %9 : vector<16x128xf32>
    %cst_7 = arith.constant 1.000000e+00 : f32
    %11 = vector.broadcast %cst_7 : f32 to vector<16x128xf32>
    %12 = arith.addf %11, %10 : vector<16x128xf32>
    %13 = arith.mulf %7, %12 : vector<16x128xf32>
    %14 = arith.truncf %13 : vector<16x128xf32> to vector<16x128xbf16>
    %c0_8 = arith.constant 0 : index
    %c0_9 = arith.constant 0 : index
    %15 = vector.load %arg6[%c0_8, %c0_9] : memref<16x128xbf16, #tpu.memory_space<vmem>>, vector<16x128xbf16>
    tpu.vector_store %arg6[%c0_8, %c0_9], %14 {strides = array<i32>} : memref<16x128xbf16, #tpu.memory_space<vmem>>, vector<16x128xbf16>,
    return
  }
  func.func @transform_0(%arg0: i32, %arg1: i32, %arg2: i32) -> (i32, i32) {
    %c0_i32 = arith.constant 0 : i32
    return %arg0, %arg2 : i32, i32
  }
  func.func @transform_1(%arg0: i32, %arg1: i32, %arg2: i32) -> (i32, i32) {
    %c0_i32 = arith.constant 0 : i32
    return %arg2, %arg1 : i32, i32
  }
  func.func @transform_2(%arg0: i32, %arg1: i32, %arg2: i32) -> (i32, i32) {
    %c0_i32 = arith.constant 0 : i32
    %c0_i32_0 = arith.constant 0 : i32
    return %c0_i32, %arg1 : i32, i32
  }
  func.func @transform_3(%arg0: i32, %arg1: i32, %arg2: i32) -> (i32, i32) {
    %c0_i32 = arith.constant 0 : i32
    return %arg0, %arg1 : i32, i32
  }
}

module attributes {stable_mosaic.version = 11 : i64} {
  func.func @_layernorm_kernel(%arg0: i32, %arg1: memref<16x32xbf16, #tpu.memory_space<vmem>>, %arg2: memref<1x32xf32, #tpu.memory_space<vmem>>, %arg3: memref<1x32xf32, #tpu.memory_space<vmem>>, %arg4: memref<16x32xbf16, #tpu.memory_space<vmem>>) attributes {dimension_semantics = [#tpu.dimension_semantics<parallel>], iteration_bounds = array<i64: 1>, scalar_prefetch = 0 : i64, scratch_operands = 0 : i64, tpu.core_type = #tpu.core_type<tc>, window_params = [{transform_indices = @transform_0, window_bounds = array<i64: 16, 32>}, {pipeline_mode = #tpu.pipeline_mode<synchronous>, transform_indices = @transform_1, window_bounds = array<i64: 1, 32>}, {pipeline_mode = #tpu.pipeline_mode<synchronous>, transform_indices = @transform_2, window_bounds = array<i64: 1, 32>}, {transform_indices = @transform_3, window_bounds = array<i64: 16, 32>}]} {
    %c0 = arith.constant 0 : index
    %c0_0 = arith.constant 0 : index
    %0 = vector.load %arg1[%c0, %c0_0] : memref<16x32xbf16, #tpu.memory_space<vmem>>, vector<16x32xbf16>
    %1 = arith.extf %0 : vector<16x32xbf16> to vector<16x32xf32>
    %cst = arith.constant dense<0.000000e+00> : vector<16xf32>
    %2 = vector.multi_reduction <add>, %1, %cst [1] : vector<16x32xf32> to vector<16xf32>
    %3 = vector.shape_cast %2 : vector<16xf32> to vector<16x1xf32>
    %cst_1 = arith.constant 3.200000e+01 : f32
    %4 = vector.broadcast %cst_1 : f32 to vector<16x1xf32>
    %5 = arith.divf %3, %4 : vector<16x1xf32>
    %6 = vector.broadcast %5 : vector<16x1xf32> to vector<16x32xf32>
    %7 = arith.subf %1, %6 : vector<16x32xf32>
    %8 = arith.mulf %7, %7 : vector<16x32xf32>
    %cst_2 = arith.constant dense<0.000000e+00> : vector<16xf32>
    %9 = vector.multi_reduction <add>, %8, %cst_2 [1] : vector<16x32xf32> to vector<16xf32>
    %10 = vector.shape_cast %9 : vector<16xf32> to vector<16x1xf32>
    %cst_3 = arith.constant 3.200000e+01 : f32
    %11 = vector.broadcast %cst_3 : f32 to vector<16x1xf32>
    %12 = arith.divf %10, %11 : vector<16x1xf32>
    %cst_4 = arith.constant 9.99999974E-6 : f32
    %13 = vector.broadcast %cst_4 : f32 to vector<16x1xf32>
    %14 = arith.addf %12, %13 : vector<16x1xf32>
    %15 = math.rsqrt %14 : vector<16x1xf32>
    %16 = vector.broadcast %15 : vector<16x1xf32> to vector<16x32xf32>
    %17 = arith.mulf %7, %16 : vector<16x32xf32>
    %c0_5 = arith.constant 0 : index
    %c0_6 = arith.constant 0 : index
    %18 = vector.load %arg2[%c0_5, %c0_6] : memref<1x32xf32, #tpu.memory_space<vmem>>, vector<1x32xf32>
    %19 = vector.broadcast %18 : vector<1x32xf32> to vector<16x32xf32>
    %20 = arith.mulf %17, %19 : vector<16x32xf32>
    %c0_7 = arith.constant 0 : index
    %c0_8 = arith.constant 0 : index
    %21 = vector.load %arg3[%c0_7, %c0_8] : memref<1x32xf32, #tpu.memory_space<vmem>>, vector<1x32xf32>
    %22 = vector.broadcast %21 : vector<1x32xf32> to vector<16x32xf32>
    %23 = arith.addf %20, %22 : vector<16x32xf32>
    %24 = arith.truncf %23 : vector<16x32xf32> to vector<16x32xbf16>
    %c0_9 = arith.constant 0 : index
    %c0_10 = arith.constant 0 : index
    %25 = vector.load %arg4[%c0_9, %c0_10] : memref<16x32xbf16, #tpu.memory_space<vmem>>, vector<16x32xbf16>
    tpu.vector_store %arg4[%c0_9, %c0_10], %24 {strides = array<i32>} : memref<16x32xbf16, #tpu.memory_space<vmem>>, vector<16x32xbf16>,
    return
  }
  func.func @transform_0(%arg0: i32) -> (i32, i32) {
    %c0_i32 = arith.constant 0 : i32
    %c0_i32_0 = arith.constant 0 : i32
    return %arg0, %c0_i32 : i32, i32
  }
  func.func @transform_1(%arg0: i32) -> (i32, i32) {
    %c0_i32 = arith.constant 0 : i32
    %c0_i32_0 = arith.constant 0 : i32
    %c0_i32_1 = arith.constant 0 : i32
    return %c0_i32, %c0_i32_0 : i32, i32
  }
  func.func @transform_2(%arg0: i32) -> (i32, i32) {
    %c0_i32 = arith.constant 0 : i32
    %c0_i32_0 = arith.constant 0 : i32
    %c0_i32_1 = arith.constant 0 : i32
    return %c0_i32, %c0_i32_0 : i32, i32
  }
  func.func @transform_3(%arg0: i32) -> (i32, i32) {
    %c0_i32 = arith.constant 0 : i32
    %c0_i32_0 = arith.constant 0 : i32
    return %arg0, %c0_i32 : i32, i32
  }
}

module attributes {stable_mosaic.version = 11 : i64} {
  func.func @_matmul_kernel(%arg0: i32, %arg1: i32, %arg2: i32, %arg3: memref<16x128xbf16, #tpu.memory_space<vmem>>, %arg4: memref<128x128xbf16, #tpu.memory_space<vmem>>, %arg5: memref<1x128xf32, #tpu.memory_space<vmem>>, %arg6: memref<16x128xbf16, #tpu.memory_space<vmem>>) attributes {dimension_semantics = [#tpu.dimension_semantics<parallel>, #tpu.dimension_semantics<parallel>, #tpu.dimension_semantics<arbitrary>], iteration_bounds = array<i64: 1, 1, 1>, scalar_prefetch = 0 : i64, scratch_operands = 0 : i64, tpu.core_type = #tpu.core_type<tc>, window_params = [{transform_indices = @transform_0, window_bounds = array<i64: 16, 128>}, {transform_indices = @transform_1, window_bounds = array<i64: 128, 128>}, {transform_indices = @transform_2, window_bounds = array<i64: 1, 128>}, {transform_indices = @transform_3, window_bounds = array<i64: 16, 128>}]} {
    %c0 = arith.constant 0 : index
    %c0_0 = arith.constant 0 : index
    %0 = vector.load %arg3[%c0, %c0_0] : memref<16x128xbf16, #tpu.memory_space<vmem>>, vector<16x128xbf16>
    %c0_1 = arith.constant 0 : index
    %c0_2 = arith.constant 0 : index
    %1 = vector.load %arg4[%c0_1, %c0_2] : memref<128x128xbf16, #tpu.memory_space<vmem>>, vector<128x128xbf16>
    %cst = arith.constant dense<0.000000e+00> : vector<16x128xf32>
    %2 = tpu.matmul %0, %1, %cst {dimension_numbers = #tpu.dot_dimension_numbers<[1], [0], [0], [1], [0, 0, 1, 1], [], []>} : vector<16x128xbf16>, vector<128x128xbf16>, vector<16x128xf32> -> vector<16x128xf32>
    %c0_3 = arith.constant 0 : index
    %c0_4 = arith.constant 0 : index
    %3 = vector.load %arg5[%c0_3, %c0_4] : memref<1x128xf32, #tpu.memory_space<vmem>>, vector<1x128xf32>
    %4 = vector.broadcast %3 : vector<1x128xf32> to vector<16x128xf32>
    %5 = arith.addf %2, %4 : vector<16x128xf32>
    %6 = arith.truncf %5 : vector<16x128xf32> to vector<16x128xbf16>
    %c0_5 = arith.constant 0 : index
    %c0_6 = arith.constant 0 : index
    %7 = vector.load %arg6[%c0_5, %c0_6] : memref<16x128xbf16, #tpu.memory_space<vmem>>, vector<16x128xbf16>
    tpu.vector_store %arg6[%c0_5, %c0_6], %6 {strides = array<i32>} : memref<16x128xbf16, #tpu.memory_space<vmem>>, vector<16x128xbf16>,
    return
  }
  func.func @transform_0(%arg0: i32, %arg1: i32, %arg2: i32) -> (i32, i32) {
    %c0_i32 = arith.constant 0 : i32
    return %arg0, %arg2 : i32, i32
  }
  func.func @transform_1(%arg0: i32, %arg1: i32, %arg2: i32) -> (i32, i32) {
    %c0_i32 = arith.constant 0 : i32
    return %arg2, %arg1 : i32, i32
  }
  func.func @transform_2(%arg0: i32, %arg1: i32, %arg2: i32) -> (i32, i32) {
    %c0_i32 = arith.constant 0 : i32
    %c0_i32_0 = arith.constant 0 : i32
    return %c0_i32, %arg1 : i32, i32
  }
  func.func @transform_3(%arg0: i32, %arg1: i32, %arg2: i32) -> (i32, i32) {
    %c0_i32 = arith.constant 0 : i32
    return %arg0, %arg1 : i32, i32
  }
}

module attributes {stable_mosaic.version = 11 : i64} {
  func.func @_matmul_kernel(%arg0: i32, %arg1: i32, %arg2: i32, %arg3: memref<16x128xbf16, #tpu.memory_space<vmem>>, %arg4: memref<128x128xbf16, #tpu.memory_space<vmem>>, %arg5: memref<1x128xf32, #tpu.memory_space<vmem>>, %arg6: memref<16x128xbf16, #tpu.memory_space<vmem>>, %arg7: memref<16x128xbf16, #tpu.memory_space<vmem>>) attributes {dimension_semantics = [#tpu.dimension_semantics<parallel>, #tpu.dimension_semantics<parallel>, #tpu.dimension_semantics<arbitrary>], iteration_bounds = array<i64: 1, 1, 1>, scalar_prefetch = 0 : i64, scratch_operands = 0 : i64, tpu.core_type = #tpu.core_type<tc>, window_params = [{transform_indices = @transform_0, window_bounds = array<i64: 16, 128>}, {transform_indices = @transform_1, window_bounds = array<i64: 128, 128>}, {transform_indices = @transform_2, window_bounds = array<i64: 1, 128>}, {transform_indices = @transform_3, window_bounds = array<i64: 16, 128>}, {transform_indices = @transform_4, window_bounds = array<i64: 16, 128>}]} {
    %c0 = arith.constant 0 : index
    %c0_0 = arith.constant 0 : index
    %0 = vector.load %arg3[%c0, %c0_0] : memref<16x128xbf16, #tpu.memory_space<vmem>>, vector<16x128xbf16>
    %c0_1 = arith.constant 0 : index
    %c0_2 = arith.constant 0 : index
    %1 = vector.load %arg4[%c0_1, %c0_2] : memref<128x128xbf16, #tpu.memory_space<vmem>>, vector<128x128xbf16>
    %cst = arith.constant dense<0.000000e+00> : vector<16x128xf32>
    %2 = tpu.matmul %0, %1, %cst {dimension_numbers = #tpu.dot_dimension_numbers<[1], [0], [0], [1], [0, 0, 1, 1], [], []>} : vector<16x128xbf16>, vector<128x128xbf16>, vector<16x128xf32> -> vector<16x128xf32>
    %c0_3 = arith.constant 0 : index
    %c0_4 = arith.constant 0 : index
    %3 = vector.load %arg5[%c0_3, %c0_4] : memref<1x128xf32, #tpu.memory_space<vmem>>, vector<1x128xf32>
    %4 = vector.broadcast %3 : vector<1x128xf32> to vector<16x128xf32>
    %5 = arith.addf %2, %4 : vector<16x128xf32>
    %c0_5 = arith.constant 0 : index
    %c0_6 = arith.constant 0 : index
    %6 = vector.load %arg6[%c0_5, %c0_6] : memref<16x128xbf16, #tpu.memory_space<vmem>>, vector<16x128xbf16>
    %7 = arith.extf %6 : vector<16x128xbf16> to vector<16x128xf32>
    %8 = arith.addf %5, %7 : vector<16x128xf32>
    %9 = arith.truncf %8 : vector<16x128xf32> to vector<16x128xbf16>
    %c0_7 = arith.constant 0 : index
    %c0_8 = arith.constant 0 : index
    %10 = vector.load %arg7[%c0_7, %c0_8] : memref<16x128xbf16, #tpu.memory_space<vmem>>, vector<16x128xbf16>
    tpu.vector_store %arg7[%c0_7, %c0_8], %9 {strides = array<i32>} : memref<16x128xbf16, #tpu.memory_space<vmem>>, vector<16x128xbf16>,
    return
  }
  func.func @transform_0(%arg0: i32, %arg1: i32, %arg2: i32) -> (i32, i32) {
    %c0_i32 = arith.constant 0 : i32
    return %arg0, %arg2 : i32, i32
  }
  func.func @transform_1(%arg0: i32, %arg1: i32, %arg2: i32) -> (i32, i32) {
    %c0_i32 = arith.constant 0 : i32
    return %arg2, %arg1 : i32, i32
  }
  func.func @transform_2(%arg0: i32, %arg1: i32, %arg2: i32) -> (i32, i32) {
    %c0_i32 = arith.constant 0 : i32
    %c0_i32_0 = arith.constant 0 : i32
    return %c0_i32, %arg1 : i32, i32
  }
  func.func @transform_3(%arg0: i32, %arg1: i32, %arg2: i32) -> (i32, i32) {
    %c0_i32 = arith.constant 0 : i32
    return %arg0, %arg1 : i32, i32
  }
  func.func @transform_4(%arg0: i32, %arg1: i32, %arg2: i32) -> (i32, i32) {
    %c0_i32 = arith.constant 0 : i32
    return %arg0, %arg1 : i32, i32
  }
}

module attributes {stable_mosaic.version = 11 : i64} {
  func.func @_attention_kernel(%arg0: i32, %arg1: i32, %arg2: i32, %arg3: memref<1x8x32xbf16, #tpu.memory_space<vmem>>, %arg4: memref<1x8x32xbf16, #tpu.memory_space<vmem>>, %arg5: memref<1x8x32xbf16, #tpu.memory_space<vmem>>, %arg6: memref<1x8x32xbf16, #tpu.memory_space<vmem>>, %arg7: memref<2x8x1xf32, #tpu.memory_space<vmem>>, %arg8: memref<2x8x1xf32, #tpu.memory_space<vmem>>, %arg9: memref<2x8x16xf32, #tpu.memory_space<vmem>>) attributes {dimension_semantics = [#tpu.dimension_semantics<parallel>, #tpu.dimension_semantics<parallel>, #tpu.dimension_semantics<arbitrary>], iteration_bounds = array<i64: 2, 1, 1>, scalar_prefetch = 0 : i64, scratch_operands = 3 : i64, tpu.core_type = #tpu.core_type<tc>, window_params = [{transform_indices = @transform_0, window_bounds = array<i64: 1, 8, 32>}, {transform_indices = @transform_1, window_bounds = array<i64: 1, 8, 32>}, {transform_indices = @transform_2, window_bounds = array<i64: 1, 8, 32>}, {transform_indices = @transform_3, window_bounds = array<i64: 1, 8, 32>}]} {
    %c0_i32 = arith.constant 0 : i32
    %0 = arith.cmpi eq, %arg2, %c0_i32 : i32
    %1 = arith.extui %0 : i1 to i32
    %c0_i32_0 = arith.constant 0 : i32
    %2 = arith.cmpi ne, %1, %c0_i32_0 : i32
    scf.if %2 {
      %cst_55 = arith.constant 0xFF800000 : f32
      %88 = vector.broadcast %cst_55 : f32 to vector<2x8x1xf32>
      %c0_56 = arith.constant 0 : index
      %c0_57 = arith.constant 0 : index
      %c0_58 = arith.constant 0 : index
      %89 = vector.load %arg7[%c0_56, %c0_57, %c0_58] : memref<2x8x1xf32, #tpu.memory_space<vmem>>, vector<2x8x1xf32>
      tpu.vector_store %arg7[%c0_56, %c0_57, %c0_58], %88 {strides = array<i32>} : memref<2x8x1xf32, #tpu.memory_space<vmem>>, vector<2x8x1xf32>,
      %cst_59 = arith.constant 0.000000e+00 : f32
      %90 = vector.broadcast %cst_59 : f32 to vector<2x8x1xf32>
      %c0_60 = arith.constant 0 : index
      %c0_61 = arith.constant 0 : index
      %c0_62 = arith.constant 0 : index
      %91 = vector.load %arg8[%c0_60, %c0_61, %c0_62] : memref<2x8x1xf32, #tpu.memory_space<vmem>>, vector<2x8x1xf32>
      tpu.vector_store %arg8[%c0_60, %c0_61, %c0_62], %90 {strides = array<i32>} : memref<2x8x1xf32, #tpu.memory_space<vmem>>, vector<2x8x1xf32>,
      %cst_63 = arith.constant 0.000000e+00 : f32
      %92 = vector.broadcast %cst_63 : f32 to vector<2x8x16xf32>
      %c0_64 = arith.constant 0 : index
      %c0_65 = arith.constant 0 : index
      %c0_66 = arith.constant 0 : index
      %93 = vector.load %arg9[%c0_64, %c0_65, %c0_66] : memref<2x8x16xf32, #tpu.memory_space<vmem>>, vector<2x8x16xf32>
      tpu.vector_store %arg9[%c0_64, %c0_65, %c0_66], %92 {strides = array<i32>} : memref<2x8x16xf32, #tpu.memory_space<vmem>>, vector<2x8x16xf32>,
    } else {
    }
    %c0 = arith.constant 0 : index
    %c0_1 = arith.constant 0 : index
    %c0_2 = arith.constant 0 : index
    %3 = vector.load %arg3[%c0, %c0_1, %c0_2] : memref<1x8x32xbf16, #tpu.memory_space<vmem>>, vector<1x8x32xbf16>
    %4 = vector.shape_cast %3 : vector<1x8x32xbf16> to vector<8x32xbf16>
    %c0_3 = arith.constant 0 : index
    %c0_4 = arith.constant 0 : index
    %c0_5 = arith.constant 0 : index
    %5 = vector.load %arg4[%c0_3, %c0_4, %c0_5] : memref<1x8x32xbf16, #tpu.memory_space<vmem>>, vector<1x8x32xbf16>
    %6 = vector.shape_cast %5 : vector<1x8x32xbf16> to vector<8x32xbf16>
    %c0_6 = arith.constant 0 : index
    %c0_7 = arith.constant 0 : index
    %c0_8 = arith.constant 0 : index
    %7 = vector.load %arg5[%c0_6, %c0_7, %c0_8] : memref<1x8x32xbf16, #tpu.memory_space<vmem>>, vector<1x8x32xbf16>
    %8 = vector.shape_cast %7 : vector<1x8x32xbf16> to vector<8x32xbf16>
    %9 = vector.extract_strided_slice %4 {offsets = [0, 0], sizes = [8, 16], strides = [1, 1]} : vector<8x32xbf16> to vector<8x16xbf16>
    %10 = vector.extract_strided_slice %6 {offsets = [0, 0], sizes = [8, 16], strides = [1, 1]} : vector<8x32xbf16> to vector<8x16xbf16>
    %11 = vector.extract_strided_slice %8 {offsets = [0, 0], sizes = [8, 16], strides = [1, 1]} : vector<8x32xbf16> to vector<8x16xbf16>
    %cst = arith.constant dense<0.000000e+00> : vector<8x8xf32>
    %12 = tpu.matmul %9, %10, %cst {dimension_numbers = #tpu.dot_dimension_numbers<[1], [1], [0], [0], [0, 0, 1, 0], [], []>} : vector<8x16xbf16>, vector<8x16xbf16>, vector<8x8xf32> -> vector<8x8xf32>
    %cst_9 = arith.constant 2.500000e-01 : f32
    %13 = vector.broadcast %cst_9 : f32 to vector<8x8xf32>
    %14 = arith.mulf %12, %13 : vector<8x8xf32>
    %c0_10 = arith.constant 0 : index
    %c0_11 = arith.constant 0 : index
    %c0_12 = arith.constant 0 : index
    %15 = vector.load %arg7[%c0_10, %c0_11, %c0_12] : memref<2x8x1xf32, #tpu.memory_space<vmem>>, vector<1x8x1xf32>
    %16 = vector.shape_cast %15 : vector<1x8x1xf32> to vector<8x1xf32>
    %cst_13 = arith.constant dense<0xFF800000> : vector<8xf32>
    %17 = vector.multi_reduction <maximumf>, %14, %cst_13 [1] : vector<8x8xf32> to vector<8xf32>
    %18 = vector.shape_cast %17 : vector<8xf32> to vector<8x1xf32>
    %19 = arith.maximumf %16, %18 : vector<8x1xf32>
    %20 = vector.broadcast %19 : vector<8x1xf32> to vector<8x8xf32>
    %21 = arith.subf %14, %20 : vector<8x8xf32>
    %22 = math.exp %21 : vector<8x8xf32>
    %23 = arith.subf %16, %19 : vector<8x1xf32>
    %24 = math.exp %23 : vector<8x1xf32>
    %c0_14 = arith.constant 0 : index
    %c0_15 = arith.constant 0 : index
    %c0_16 = arith.constant 0 : index
    %25 = vector.load %arg8[%c0_14, %c0_15, %c0_16] : memref<2x8x1xf32, #tpu.memory_space<vmem>>, vector<1x8x1xf32>
    %26 = vector.shape_cast %25 : vector<1x8x1xf32> to vector<8x1xf32>
    %27 = arith.mulf %24, %26 : vector<8x1xf32>
    %cst_17 = arith.constant dense<0.000000e+00> : vector<8xf32>
    %28 = vector.multi_reduction <add>, %22, %cst_17 [1] : vector<8x8xf32> to vector<8xf32>
    %29 = vector.shape_cast %28 : vector<8xf32> to vector<8x1xf32>
    %30 = arith.addf %27, %29 : vector<8x1xf32>
    %c0_18 = arith.constant 0 : index
    %c0_19 = arith.constant 0 : index
    %c0_20 = arith.constant 0 : index
    %31 = vector.load %arg8[%c0_18, %c0_19, %c0_20] : memref<2x8x1xf32, #tpu.memory_space<vmem>>, vector<1x8x1xf32>
    %32 = vector.shape_cast %31 : vector<1x8x1xf32> to vector<8x1xf32>
    %33 = vector.shape_cast %30 : vector<8x1xf32> to vector<1x8x1xf32>
    tpu.vector_store %arg8[%c0_18, %c0_19, %c0_20], %33 {strides = array<i32>} : memref<2x8x1xf32, #tpu.memory_space<vmem>>, vector<1x8x1xf32>,
    %c0_21 = arith.constant 0 : index
    %c0_22 = arith.constant 0 : index
    %c0_23 = arith.constant 0 : index
    %34 = vector.load %arg9[%c0_21, %c0_22, %c0_23] : memref<2x8x16xf32, #tpu.memory_space<vmem>>, vector<1x8x16xf32>
    %35 = vector.shape_cast %34 : vector<1x8x16xf32> to vector<8x16xf32>
    %36 = vector.broadcast %24 : vector<8x1xf32> to vector<8x16xf32>
    %37 = arith.mulf %36, %35 : vector<8x16xf32>
    %38 = arith.truncf %22 : vector<8x8xf32> to vector<8x8xbf16>
    %cst_24 = arith.constant dense<0.000000e+00> : vector<8x16xf32>
    %39 = tpu.matmul %38, %11, %cst_24 {dimension_numbers = #tpu.dot_dimension_numbers<[1], [0], [0], [1], [0, 0, 1, 1], [], []>} : vector<8x8xbf16>, vector<8x16xbf16>, vector<8x16xf32> -> vector<8x16xf32>
    %40 = arith.addf %37, %39 : vector<8x16xf32>
    %c0_25 = arith.constant 0 : index
    %c0_26 = arith.constant 0 : index
    %c0_27 = arith.constant 0 : index
    %41 = vector.load %arg9[%c0_25, %c0_26, %c0_27] : memref<2x8x16xf32, #tpu.memory_space<vmem>>, vector<1x8x16xf32>
    %42 = vector.shape_cast %41 : vector<1x8x16xf32> to vector<8x16xf32>
    %43 = vector.shape_cast %40 : vector<8x16xf32> to vector<1x8x16xf32>
    tpu.vector_store %arg9[%c0_25, %c0_26, %c0_27], %43 {strides = array<i32>} : memref<2x8x16xf32, #tpu.memory_space<vmem>>, vector<1x8x16xf32>,
    %c0_28 = arith.constant 0 : index
    %c0_29 = arith.constant 0 : index
    %c0_30 = arith.constant 0 : index
    %44 = vector.load %arg7[%c0_28, %c0_29, %c0_30] : memref<2x8x1xf32, #tpu.memory_space<vmem>>, vector<1x8x1xf32>
    %45 = vector.shape_cast %44 : vector<1x8x1xf32> to vector<8x1xf32>
    %46 = vector.shape_cast %19 : vector<8x1xf32> to vector<1x8x1xf32>
    tpu.vector_store %arg7[%c0_28, %c0_29, %c0_30], %46 {strides = array<i32>} : memref<2x8x1xf32, #tpu.memory_space<vmem>>, vector<1x8x1xf32>,
    %47 = vector.extract_strided_slice %4 {offsets = [0, 16], sizes = [8, 16], strides = [1, 1]} : vector<8x32xbf16> to vector<8x16xbf16>
    %48 = vector.extract_strided_slice %6 {offsets = [0, 16], sizes = [8, 16], strides = [1, 1]} : vector<8x32xbf16> to vector<8x16xbf16>
    %49 = vector.extract_strided_slice %8 {offsets = [0, 16], sizes = [8, 16], strides = [1, 1]} : vector<8x32xbf16> to vector<8x16xbf16>
    %cst_31 = arith.constant dense<0.000000e+00> : vector<8x8xf32>
    %50 = tpu.matmul %47, %48, %cst_31 {dimension_numbers = #tpu.dot_dimension_numbers<[1], [1], [0], [0], [0, 0, 1, 0], [], []>} : vector<8x16xbf16>, vector<8x16xbf16>, vector<8x8xf32> -> vector<8x8xf32>
    %cst_32 = arith.constant 2.500000e-01 : f32
    %51 = vector.broadcast %cst_32 : f32 to vector<8x8xf32>
    %52 = arith.mulf %50, %51 : vector<8x8xf32>
    %c1 = arith.constant 1 : index
    %c0_33 = arith.constant 0 : index
    %c0_34 = arith.constant 0 : index
    %53 = vector.load %arg7[%c1, %c0_33, %c0_34] : memref<2x8x1xf32, #tpu.memory_space<vmem>>, vector<1x8x1xf32>
    %54 = vector.shape_cast %53 : vector<1x8x1xf32> to vector<8x1xf32>
    %cst_35 = arith.constant dense<0xFF800000> : vector<8xf32>
    %55 = vector.multi_reduction <maximumf>, %52, %cst_35 [1] : vector<8x8xf32> to vector<8xf32>
    %56 = vector.shape_cast %55 : vector<8xf32> to vector<8x1xf32>
    %57 = arith.maximumf %54, %56 : vector<8x1xf32>
    %58 = vector.broadcast %57 : vector<8x1xf32> to vector<8x8xf32>
    %59 = arith.subf %52, %58 : vector<8x8xf32>
    %60 = math.exp %59 : vector<8x8xf32>
    %61 = arith.subf %54, %57 : vector<8x1xf32>
    %62 = math.exp %61 : vector<8x1xf32>
    %c1_36 = arith.constant 1 : index
    %c0_37 = arith.constant 0 : index
    %c0_38 = arith.constant 0 : index
    %63 = vector.load %arg8[%c1_36, %c0_37, %c0_38] : memref<2x8x1xf32, #tpu.memory_space<vmem>>, vector<1x8x1xf32>
    %64 = vector.shape_cast %63 : vector<1x8x1xf32> to vector<8x1xf32>
    %65 = arith.mulf %62, %64 : vector<8x1xf32>
    %cst_39 = arith.constant dense<0.000000e+00> : vector<8xf32>
    %66 = vector.multi_reduction <add>, %60, %cst_39 [1] : vector<8x8xf32> to vector<8xf32>
    %67 = vector.shape_cast %66 : vector<8xf32> to vector<8x1xf32>
    %68 = arith.addf %65, %67 : vector<8x1xf32>
    %c1_40 = arith.constant 1 : index
    %c0_41 = arith.constant 0 : index
    %c0_42 = arith.constant 0 : index
    %69 = vector.load %arg8[%c1_40, %c0_41, %c0_42] : memref<2x8x1xf32, #tpu.memory_space<vmem>>, vector<1x8x1xf32>
    %70 = vector.shape_cast %69 : vector<1x8x1xf32> to vector<8x1xf32>
    %71 = vector.shape_cast %68 : vector<8x1xf32> to vector<1x8x1xf32>
    tpu.vector_store %arg8[%c1_40, %c0_41, %c0_42], %71 {strides = array<i32>} : memref<2x8x1xf32, #tpu.memory_space<vmem>>, vector<1x8x1xf32>,
    %c1_43 = arith.constant 1 : index
    %c0_44 = arith.constant 0 : index
    %c0_45 = arith.constant 0 : index
    %72 = vector.load %arg9[%c1_43, %c0_44, %c0_45] : memref<2x8x16xf32, #tpu.memory_space<vmem>>, vector<1x8x16xf32>
    %73 = vector.shape_cast %72 : vector<1x8x16xf32> to vector<8x16xf32>
    %74 = vector.broadcast %62 : vector<8x1xf32> to vector<8x16xf32>
    %75 = arith.mulf %74, %73 : vector<8x16xf32>
    %76 = arith.truncf %60 : vector<8x8xf32> to vector<8x8xbf16>
    %cst_46 = arith.constant dense<0.000000e+00> : vector<8x16xf32>
    %77 = tpu.matmul %76, %49, %cst_46 {dimension_numbers = #tpu.dot_dimension_numbers<[1], [0], [0], [1], [0, 0, 1, 1], [], []>} : vector<8x8xbf16>, vector<8x16xbf16>, vector<8x16xf32> -> vector<8x16xf32>
    %78 = arith.addf %75, %77 : vector<8x16xf32>
    %c1_47 = arith.constant 1 : index
    %c0_48 = arith.constant 0 : index
    %c0_49 = arith.constant 0 : index
    %79 = vector.load %arg9[%c1_47, %c0_48, %c0_49] : memref<2x8x16xf32, #tpu.memory_space<vmem>>, vector<1x8x16xf32>
    %80 = vector.shape_cast %79 : vector<1x8x16xf32> to vector<8x16xf32>
    %81 = vector.shape_cast %78 : vector<8x16xf32> to vector<1x8x16xf32>
    tpu.vector_store %arg9[%c1_47, %c0_48, %c0_49], %81 {strides = array<i32>} : memref<2x8x16xf32, #tpu.memory_space<vmem>>, vector<1x8x16xf32>,
    %c1_50 = arith.constant 1 : index
    %c0_51 = arith.constant 0 : index
    %c0_52 = arith.constant 0 : index
    %82 = vector.load %arg7[%c1_50, %c0_51, %c0_52] : memref<2x8x1xf32, #tpu.memory_space<vmem>>, vector<1x8x1xf32>
    %83 = vector.shape_cast %82 : vector<1x8x1xf32> to vector<8x1xf32>
    %84 = vector.shape_cast %57 : vector<8x1xf32> to vector<1x8x1xf32>
    tpu.vector_store %arg7[%c1_50, %c0_51, %c0_52], %84 {strides = array<i32>} : memref<2x8x1xf32, #tpu.memory_space<vmem>>, vector<1x8x1xf32>,
    %c0_i32_53 = arith.constant 0 : i32
    %85 = arith.cmpi eq, %arg2, %c0_i32_53 : i32
    %86 = arith.extui %85 : i1 to i32
    %c0_i32_54 = arith.constant 0 : i32
    %87 = arith.cmpi ne, %86, %c0_i32_54 : i32
    scf.if %87 {
      %c0_55 = arith.constant 0 : index
      %c0_56 = arith.constant 0 : index
      %c0_57 = arith.constant 0 : index
      %88 = vector.load %arg9[%c0_55, %c0_56, %c0_57] : memref<2x8x16xf32, #tpu.memory_space<vmem>>, vector<1x8x16xf32>
      %89 = vector.shape_cast %88 : vector<1x8x16xf32> to vector<8x16xf32>
      %c0_58 = arith.constant 0 : index
      %c0_59 = arith.constant 0 : index
      %c0_60 = arith.constant 0 : index
      %90 = vector.load %arg8[%c0_58, %c0_59, %c0_60] : memref<2x8x1xf32, #tpu.memory_space<vmem>>, vector<1x8x1xf32>
      %91 = vector.shape_cast %90 : vector<1x8x1xf32> to vector<8x1xf32>
      %92 = vector.broadcast %91 : vector<8x1xf32> to vector<8x16xf32>
      %93 = arith.divf %89, %92 : vector<8x16xf32>
      %c1_61 = arith.constant 1 : index
      %c0_62 = arith.constant 0 : index
      %c0_63 = arith.constant 0 : index
      %94 = vector.load %arg9[%c1_61, %c0_62, %c0_63] : memref<2x8x16xf32, #tpu.memory_space<vmem>>, vector<1x8x16xf32>
      %95 = vector.shape_cast %94 : vector<1x8x16xf32> to vector<8x16xf32>
      %c1_64 = arith.constant 1 : index
      %c0_65 = arith.constant 0 : index
      %c0_66 = arith.constant 0 : index
      %96 = vector.load %arg8[%c1_64, %c0_65, %c0_66] : memref<2x8x1xf32, #tpu.memory_space<vmem>>, vector<1x8x1xf32>
      %97 = vector.shape_cast %96 : vector<1x8x1xf32> to vector<8x1xf32>
      %98 = vector.broadcast %97 : vector<8x1xf32> to vector<8x16xf32>
      %99 = arith.divf %95, %98 : vector<8x16xf32>
      %100 = tpu.concatenate %93, %99 in 1 : vector<8x16xf32>, vector<8x16xf32> -> vector<8x32xf32>
      %101 = arith.truncf %100 : vector<8x32xf32> to vector<8x32xbf16>
      %c0_67 = arith.constant 0 : index
      %c0_68 = arith.constant 0 : index
      %c0_69 = arith.constant 0 : index
      %102 = vector.load %arg6[%c0_67, %c0_68, %c0_69] : memref<1x8x32xbf16, #tpu.memory_space<vmem>>, vector<1x8x32xbf16>
      %103 = vector.shape_cast %102 : vector<1x8x32xbf16> to vector<8x32xbf16>
      %104 = vector.shape_cast %101 : vector<8x32xbf16> to vector<1x8x32xbf16>
      tpu.vector_store %arg6[%c0_67, %c0_68, %c0_69], %104 {strides = array<i32>} : memref<1x8x32xbf16, #tpu.memory_space<vmem>>, vector<1x8x32xbf16>,
    } else {
    }
    return
  }
  func.func @transform_0(%arg0: i32, %arg1: i32, %arg2: i32) -> (i32, i32, i32) {
    %c0_i32 = arith.constant 0 : i32
    %c0_i32_0 = arith.constant 0 : i32
    return %arg0, %arg1, %c0_i32 : i32, i32, i32
  }
  func.func @transform_1(%arg0: i32, %arg1: i32, %arg2: i32) -> (i32, i32, i32) {
    %c0_i32 = arith.constant 0 : i32
    %c0_i32_0 = arith.constant 0 : i32
    return %arg0, %arg2, %c0_i32 : i32, i32, i32
  }
  func.func @transform_2(%arg0: i32, %arg1: i32, %arg2: i32) -> (i32, i32, i32) {
    %c0_i32 = arith.constant 0 : i32
    %c0_i32_0 = arith.constant 0 : i32
    return %arg0, %arg2, %c0_i32 : i32, i32, i32
  }
  func.func @transform_3(%arg0: i32, %arg1: i32, %arg2: i32) -> (i32, i32, i32) {
    %c0_i32 = arith.constant 0 : i32
    %c0_i32_0 = arith.constant 0 : i32
    return %arg0, %arg1, %c0_i32 : i32, i32, i32
  }
}

module attributes {stable_mosaic.version = 11 : i64} {
  func.func @_matmul_kernel(%arg0: i32, %arg1: i32, %arg2: i32, %arg3: memref<16x128xbf16, #tpu.memory_space<vmem>>, %arg4: memref<128x128xbf16, #tpu.memory_space<vmem>>, %arg5: memref<16x128xf32, #tpu.memory_space<vmem>>) attributes {dimension_semantics = [#tpu.dimension_semantics<parallel>, #tpu.dimension_semantics<parallel>, #tpu.dimension_semantics<arbitrary>], iteration_bounds = array<i64: 1, 1, 1>, scalar_prefetch = 0 : i64, scratch_operands = 0 : i64, tpu.core_type = #tpu.core_type<tc>, window_params = [{transform_indices = @transform_0, window_bounds = array<i64: 16, 128>}, {transform_indices = @transform_1, window_bounds = array<i64: 128, 128>}, {transform_indices = @transform_2, window_bounds = array<i64: 16, 128>}]} {
    %c0 = arith.constant 0 : index
    %c0_0 = arith.constant 0 : index
    %0 = vector.load %arg3[%c0, %c0_0] : memref<16x128xbf16, #tpu.memory_space<vmem>>, vector<16x128xbf16>
    %c0_1 = arith.constant 0 : index
    %c0_2 = arith.constant 0 : index
    %1 = vector.load %arg4[%c0_1, %c0_2] : memref<128x128xbf16, #tpu.memory_space<vmem>>, vector<128x128xbf16>
    %cst = arith.constant dense<0.000000e+00> : vector<16x128xf32>
    %2 = tpu.matmul %0, %1, %cst {dimension_numbers = #tpu.dot_dimension_numbers<[1], [0], [0], [1], [0, 0, 1, 1], [], []>} : vector<16x128xbf16>, vector<128x128xbf16>, vector<16x128xf32> -> vector<16x128xf32>
    %c0_3 = arith.constant 0 : index
    %c0_4 = arith.constant 0 : index
    %3 = vector.load %arg5[%c0_3, %c0_4] : memref<16x128xf32, #tpu.memory_space<vmem>>, vector<16x128xf32>
    tpu.vector_store %arg5[%c0_3, %c0_4], %2 {strides = array<i32>} : memref<16x128xf32, #tpu.memory_space<vmem>>, vector<16x128xf32>,
    return
  }
  func.func @transform_0(%arg0: i32, %arg1: i32, %arg2: i32) -> (i32, i32) {
    %c0_i32 = arith.constant 0 : i32
    return %arg0, %arg2 : i32, i32
  }
  func.func @transform_1(%arg0: i32, %arg1: i32, %arg2: i32) -> (i32, i32) {
    %c0_i32 = arith.constant 0 : i32
    return %arg2, %arg1 : i32, i32
  }
  func.func @transform_2(%arg0: i32, %arg1: i32, %arg2: i32) -> (i32, i32) {
    %c0_i32 = arith.constant 0 : i32
    return %arg0, %arg1 : i32, i32
  }
}

module attributes {stable_mosaic.version = 11 : i64} {
  func.func @_attention_kernel(%arg0: i32, %arg1: i32, %arg2: i32, %arg3: memref<1x8x32xbf16, #tpu.memory_space<vmem>>, %arg4: memref<1x8x32xbf16, #tpu.memory_space<vmem>>, %arg5: memref<1x8x32xbf16, #tpu.memory_space<vmem>>, %arg6: memref<1x8x32xbf16, #tpu.memory_space<vmem>>, %arg7: memref<2x8x1xf32, #tpu.memory_space<vmem>>, %arg8: memref<2x8x1xf32, #tpu.memory_space<vmem>>, %arg9: memref<2x8x16xf32, #tpu.memory_space<vmem>>) attributes {dimension_semantics = [#tpu.dimension_semantics<parallel>, #tpu.dimension_semantics<parallel>, #tpu.dimension_semantics<arbitrary>], iteration_bounds = array<i64: 2, 1, 1>, scalar_prefetch = 0 : i64, scratch_operands = 3 : i64, tpu.core_type = #tpu.core_type<tc>, window_params = [{transform_indices = @transform_0, window_bounds = array<i64: 1, 8, 32>}, {transform_indices = @transform_1, window_bounds = array<i64: 1, 8, 32>}, {transform_indices = @transform_2, window_bounds = array<i64: 1, 8, 32>}, {transform_indices = @transform_3, window_bounds = array<i64: 1, 8, 32>}]} {
    %c0_i32 = arith.constant 0 : i32
    %0 = arith.cmpi eq, %arg2, %c0_i32 : i32
    %1 = arith.extui %0 : i1 to i32
    %c0_i32_0 = arith.constant 0 : i32
    %2 = arith.cmpi ne, %1, %c0_i32_0 : i32
    scf.if %2 {
      %cst = arith.constant 0xFF800000 : f32
      %13 = vector.broadcast %cst : f32 to vector<2x8x1xf32>
      %c0 = arith.constant 0 : index
      %c0_6 = arith.constant 0 : index
      %c0_7 = arith.constant 0 : index
      %14 = vector.load %arg7[%c0, %c0_6, %c0_7] : memref<2x8x1xf32, #tpu.memory_space<vmem>>, vector<2x8x1xf32>
      tpu.vector_store %arg7[%c0, %c0_6, %c0_7], %13 {strides = array<i32>} : memref<2x8x1xf32, #tpu.memory_space<vmem>>, vector<2x8x1xf32>,
      %cst_8 = arith.constant 0.000000e+00 : f32
      %15 = vector.broadcast %cst_8 : f32 to vector<2x8x1xf32>
      %c0_9 = arith.constant 0 : index
      %c0_10 = arith.constant 0 : index
      %c0_11 = arith.constant 0 : index
      %16 = vector.load %arg8[%c0_9, %c0_10, %c0_11] : memref<2x8x1xf32, #tpu.memory_space<vmem>>, vector<2x8x1xf32>
      tpu.vector_store %arg8[%c0_9, %c0_10, %c0_11], %15 {strides = array<i32>} : memref<2x8x1xf32, #tpu.memory_space<vmem>>, vector<2x8x1xf32>,
      %cst_12 = arith.constant 0.000000e+00 : f32
      %17 = vector.broadcast %cst_12 : f32 to vector<2x8x16xf32>
      %c0_13 = arith.constant 0 : index
      %c0_14 = arith.constant 0 : index
      %c0_15 = arith.constant 0 : index
      %18 = vector.load %arg9[%c0_13, %c0_14, %c0_15] : memref<2x8x16xf32, #tpu.memory_space<vmem>>, vector<2x8x16xf32>
      tpu.vector_store %arg9[%c0_13, %c0_14, %c0_15], %17 {strides = array<i32>} : memref<2x8x16xf32, #tpu.memory_space<vmem>>, vector<2x8x16xf32>,
    } else {
    }
    %c8_i32 = arith.constant 8 : i32
    %3 = arith.muli %arg2, %c8_i32 : i32
    %c1_i32 = arith.constant 1 : i32
    %4 = arith.addi %arg1, %c1_i32 : i32
    %c8_i32_1 = arith.constant 8 : i32
    %5 = arith.muli %4, %c8_i32_1 : i32
    %c1_i32_2 = arith.constant 1 : i32
    %6 = arith.subi %5, %c1_i32_2 : i32
    %7 = arith.cmpi sle, %3, %6 : i32
    %8 = arith.extui %7 : i1 to i32
    %c0_i32_3 = arith.constant 0 : i32
    %9 = arith.cmpi ne, %8, %c0_i32_3 : i32
    scf.if %9 {
      %c8_i32_6 = arith.constant 8 : i32
      %13 = arith.muli %arg2, %c8_i32_6 : i32
      %14 = tpu.iota {dimensions = array<i32: 1>} : vector<8x8xi32>
      %15 = vector.broadcast %13 : i32 to vector<8x8xi32>
      %16 = arith.addi %15, %14 : vector<8x8xi32>
      %c8_i32_7 = arith.constant 8 : i32
      %17 = vector.broadcast %c8_i32_7 : i32 to vector<8x8xi32>
      %18 = arith.cmpi slt, %16, %17 : vector<8x8xi32>
      %c8_i32_8 = arith.constant 8 : i32
      %19 = arith.muli %arg1, %c8_i32_8 : i32
      %20 = tpu.iota {dimensions = array<i32: 0>} : vector<8x8xi32>
      %21 = vector.broadcast %19 : i32 to vector<8x8xi32>
      %22 = arith.addi %21, %20 : vector<8x8xi32>
      %23 = arith.cmpi sle, %16, %22 : vector<8x8xi32>
      %24 = arith.andi %18, %23 : vector<8x8xi1>
      %c0 = arith.constant 0 : index
      %c0_9 = arith.constant 0 : index
      %c0_10 = arith.constant 0 : index
      %25 = vector.load %arg3[%c0, %c0_9, %c0_10] : memref<1x8x32xbf16, #tpu.memory_space<vmem>>, vector<1x8x32xbf16>
      %26 = vector.shape_cast %25 : vector<1x8x32xbf16> to vector<8x32xbf16>
      %c0_11 = arith.constant 0 : index
      %c0_12 = arith.constant 0 : index
      %c0_13 = arith.constant 0 : index
      %27 = vector.load %arg4[%c0_11, %c0_12, %c0_13] : memref<1x8x32xbf16, #tpu.memory_space<vmem>>, vector<1x8x32xbf16>
      %28 = vector.shape_cast %27 : vector<1x8x32xbf16> to vector<8x32xbf16>
      %c0_14 = arith.constant 0 : index
      %c0_15 = arith.constant 0 : index
      %c0_16 = arith.constant 0 : index
      %29 = vector.load %arg5[%c0_14, %c0_15, %c0_16] : memref<1x8x32xbf16, #tpu.memory_space<vmem>>, vector<1x8x32xbf16>
      %30 = vector.shape_cast %29 : vector<1x8x32xbf16> to vector<8x32xbf16>
      %31 = vector.extract_strided_slice %26 {offsets = [0, 0], sizes = [8, 16], strides = [1, 1]} : vector<8x32xbf16> to vector<8x16xbf16>
      %32 = vector.extract_strided_slice %28 {offsets = [0, 0], sizes = [8, 16], strides = [1, 1]} : vector<8x32xbf16> to vector<8x16xbf16>
      %33 = vector.extract_strided_slice %30 {offsets = [0, 0], sizes = [8, 16], strides = [1, 1]} : vector<8x32xbf16> to vector<8x16xbf16>
      %cst = arith.constant dense<0.000000e+00> : vector<8x8xf32>
      %34 = tpu.matmul %31, %32, %cst {dimension_numbers = #tpu.dot_dimension_numbers<[1], [1], [0], [0], [0, 0, 1, 0], [], []>} : vector<8x16xbf16>, vector<8x16xbf16>, vector<8x8xf32> -> vector<8x8xf32>
      %cst_17 = arith.constant 2.500000e-01 : f32
      %35 = vector.broadcast %cst_17 : f32 to vector<8x8xf32>
      %36 = arith.mulf %34, %35 : vector<8x8xf32>
      %cst_18 = arith.constant -1.000000e+30 : f32
      %37 = vector.broadcast %cst_18 : f32 to vector<8x8xf32>
      %38 = arith.select %24, %36, %37 : vector<8x8xi1>, vector<8x8xf32>
      %c0_19 = arith.constant 0 : index
      %c0_20 = arith.constant 0 : index
      %c0_21 = arith.constant 0 : index
      %39 = vector.load %arg7[%c0_19, %c0_20, %c0_21] : memref<2x8x1xf32, #tpu.memory_space<vmem>>, vector<1x8x1xf32>
      %40 = vector.shape_cast %39 : vector<1x8x1xf32> to vector<8x1xf32>
      %cst_22 = arith.constant dense<0xFF800000> : vector<8xf32>
      %41 = vector.multi_reduction <maximumf>, %38, %cst_22 [1] : vector<8x8xf32> to vector<8xf32>
      %42 = vector.shape_cast %41 : vector<8xf32> to vector<8x1xf32>
      %43 = arith.maximumf %40, %42 : vector<8x1xf32>
      %44 = vector.broadcast %43 : vector<8x1xf32> to vector<8x8xf32>
      %45 = arith.subf %38, %44 : vector<8x8xf32>
      %46 = math.exp %45 : vector<8x8xf32>
      %cst_23 = arith.constant 0.000000e+00 : f32
      %47 = vector.broadcast %cst_23 : f32 to vector<8x8xf32>
      %48 = arith.select %24, %46, %47 : vector<8x8xi1>, vector<8x8xf32>
      %49 = arith.subf %40, %43 : vector<8x1xf32>
      %50 = math.exp %49 : vector<8x1xf32>
      %c0_24 = arith.constant 0 : index
      %c0_25 = arith.constant 0 : index
      %c0_26 = arith.constant 0 : index
      %51 = vector.load %arg8[%c0_24, %c0_25, %c0_26] : memref<2x8x1xf32, #tpu.memory_space<vmem>>, vector<1x8x1xf32>
      %52 = vector.shape_cast %51 : vector<1x8x1xf32> to vector<8x1xf32>
      %53 = arith.mulf %50, %52 : vector<8x1xf32>
      %cst_27 = arith.constant dense<0.000000e+00> : vector<8xf32>
      %54 = vector.multi_reduction <add>, %48, %cst_27 [1] : vector<8x8xf32> to vector<8xf32>
      %55 = vector.shape_cast %54 : vector<8xf32> to vector<8x1xf32>
      %56 = arith.addf %53, %55 : vector<8x1xf32>
      %c0_28 = arith.constant 0 : index
      %c0_29 = arith.constant 0 : index
      %c0_30 = arith.constant 0 : index
      %57 = vector.load %arg8[%c0_28, %c0_29, %c0_30] : memref<2x8x1xf32, #tpu.memory_space<vmem>>, vector<1x8x1xf32>
      %58 = vector.shape_cast %57 : vector<1x8x1xf32> to vector<8x1xf32>
      %59 = vector.shape_cast %56 : vector<8x1xf32> to vector<1x8x1xf32>
      tpu.vector_store %arg8[%c0_28, %c0_29, %c0_30], %59 {strides = array<i32>} : memref<2x8x1xf32, #tpu.memory_space<vmem>>, vector<1x8x1xf32>,
      %c0_31 = arith.constant 0 : index
      %c0_32 = arith.constant 0 : index
      %c0_33 = arith.constant 0 : index
      %60 = vector.load %arg9[%c0_31, %c0_32, %c0_33] : memref<2x8x16xf32, #tpu.memory_space<vmem>>, vector<1x8x16xf32>
      %61 = vector.shape_cast %60 : vector<1x8x16xf32> to vector<8x16xf32>
      %62 = vector.broadcast %50 : vector<8x1xf32> to vector<8x16xf32>
      %63 = arith.mulf %62, %61 : vector<8x16xf32>
      %64 = arith.truncf %48 : vector<8x8xf32> to vector<8x8xbf16>
      %cst_34 = arith.constant dense<0.000000e+00> : vector<8x16xf32>
      %65 = tpu.matmul %64, %33, %cst_34 {dimension_numbers = #tpu.dot_dimension_numbers<[1], [0], [0], [1], [0, 0, 1, 1], [], []>} : vector<8x8xbf16>, vector<8x16xbf16>, vector<8x16xf32> -> vector<8x16xf32>
      %66 = arith.addf %63, %65 : vector<8x16xf32>
      %c0_35 = arith.constant 0 : index
      %c0_36 = arith.constant 0 : index
      %c0_37 = arith.constant 0 : index
      %67 = vector.load %arg9[%c0_35, %c0_36, %c0_37] : memref<2x8x16xf32, #tpu.memory_space<vmem>>, vector<1x8x16xf32>
      %68 = vector.shape_cast %67 : vector<1x8x16xf32> to vector<8x16xf32>
      %69 = vector.shape_cast %66 : vector<8x16xf32> to vector<1x8x16xf32>
      tpu.vector_store %arg9[%c0_35, %c0_36, %c0_37], %69 {strides = array<i32>} : memref<2x8x16xf32, #tpu.memory_space<vmem>>, vector<1x8x16xf32>,
      %c0_38 = arith.constant 0 : index
      %c0_39 = arith.constant 0 : index
      %c0_40 = arith.constant 0 : index
      %70 = vector.load %arg7[%c0_38, %c0_39, %c0_40] : memref<2x8x1xf32, #tpu.memory_space<vmem>>, vector<1x8x1xf32>
      %71 = vector.shape_cast %70 : vector<1x8x1xf32> to vector<8x1xf32>
      %72 = vector.shape_cast %43 : vector<8x1xf32> to vector<1x8x1xf32>
      tpu.vector_store %arg7[%c0_38, %c0_39, %c0_40], %72 {strides = array<i32>} : memref<2x8x1xf32, #tpu.memory_space<vmem>>, vector<1x8x1xf32>,
      %73 = vector.extract_strided_slice %26 {offsets = [0, 16], sizes = [8, 16], strides = [1, 1]} : vector<8x32xbf16> to vector<8x16xbf16>
      %74 = vector.extract_strided_slice %28 {offsets = [0, 16], sizes = [8, 16], strides = [1, 1]} : vector<8x32xbf16> to vector<8x16xbf16>
      %75 = vector.extract_strided_slice %30 {offsets = [0, 16], sizes = [8, 16], strides = [1, 1]} : vector<8x32xbf16> to vector<8x16xbf16>
      %cst_41 = arith.constant dense<0.000000e+00> : vector<8x8xf32>
      %76 = tpu.matmul %73, %74, %cst_41 {dimension_numbers = #tpu.dot_dimension_numbers<[1], [1], [0], [0], [0, 0, 1, 0], [], []>} : vector<8x16xbf16>, vector<8x16xbf16>, vector<8x8xf32> -> vector<8x8xf32>
      %cst_42 = arith.constant 2.500000e-01 : f32
      %77 = vector.broadcast %cst_42 : f32 to vector<8x8xf32>
      %78 = arith.mulf %76, %77 : vector<8x8xf32>
      %cst_43 = arith.constant -1.000000e+30 : f32
      %79 = vector.broadcast %cst_43 : f32 to vector<8x8xf32>
      %80 = arith.select %24, %78, %79 : vector<8x8xi1>, vector<8x8xf32>
      %c1 = arith.constant 1 : index
      %c0_44 = arith.constant 0 : index
      %c0_45 = arith.constant 0 : index
      %81 = vector.load %arg7[%c1, %c0_44, %c0_45] : memref<2x8x1xf32, #tpu.memory_space<vmem>>, vector<1x8x1xf32>
      %82 = vector.shape_cast %81 : vector<1x8x1xf32> to vector<8x1xf32>
      %cst_46 = arith.constant dense<0xFF800000> : vector<8xf32>
      %83 = vector.multi_reduction <maximumf>, %80, %cst_46 [1] : vector<8x8xf32> to vector<8xf32>
      %84 = vector.shape_cast %83 : vector<8xf32> to vector<8x1xf32>
      %85 = arith.maximumf %82, %84 : vector<8x1xf32>
      %86 = vector.broadcast %85 : vector<8x1xf32> to vector<8x8xf32>
      %87 = arith.subf %80, %86 : vector<8x8xf32>
      %88 = math.exp %87 : vector<8x8xf32>
      %cst_47 = arith.constant 0.000000e+00 : f32
      %89 = vector.broadcast %cst_47 : f32 to vector<8x8xf32>
      %90 = arith.select %24, %88, %89 : vector<8x8xi1>, vector<8x8xf32>
      %91 = arith.subf %82, %85 : vector<8x1xf32>
      %92 = math.exp %91 : vector<8x1xf32>
      %c1_48 = arith.constant 1 : index
      %c0_49 = arith.constant 0 : index
      %c0_50 = arith.constant 0 : index
      %93 = vector.load %arg8[%c1_48, %c0_49, %c0_50] : memref<2x8x1xf32, #tpu.memory_space<vmem>>, vector<1x8x1xf32>
      %94 = vector.shape_cast %93 : vector<1x8x1xf32> to vector<8x1xf32>
      %95 = arith.mulf %92, %94 : vector<8x1xf32>
      %cst_51 = arith.constant dense<0.000000e+00> : vector<8xf32>
      %96 = vector.multi_reduction <add>, %90, %cst_51 [1] : vector<8x8xf32> to vector<8xf32>
      %97 = vector.shape_cast %96 : vector<8xf32> to vector<8x1xf32>
      %98 = arith.addf %95, %97 : vector<8x1xf32>
      %c1_52 = arith.constant 1 : index
      %c0_53 = arith.constant 0 : index
      %c0_54 = arith.constant 0 : index
      %99 = vector.load %arg8[%c1_52, %c0_53, %c0_54] : memref<2x8x1xf32, #tpu.memory_space<vmem>>, vector<1x8x1xf32>
      %100 = vector.shape_cast %99 : vector<1x8x1xf32> to vector<8x1xf32>
      %101 = vector.shape_cast %98 : vector<8x1xf32> to vector<1x8x1xf32>
      tpu.vector_store %arg8[%c1_52, %c0_53, %c0_54], %101 {strides = array<i32>} : memref<2x8x1xf32, #tpu.memory_space<vmem>>, vector<1x8x1xf32>,
      %c1_55 = arith.constant 1 : index
      %c0_56 = arith.constant 0 : index
      %c0_57 = arith.constant 0 : index
      %102 = vector.load %arg9[%c1_55, %c0_56, %c0_57] : memref<2x8x16xf32, #tpu.memory_space<vmem>>, vector<1x8x16xf32>
      %103 = vector.shape_cast %102 : vector<1x8x16xf32> to vector<8x16xf32>
      %104 = vector.broadcast %92 : vector<8x1xf32> to vector<8x16xf32>
      %105 = arith.mulf %104, %103 : vector<8x16xf32>
      %106 = arith.truncf %90 : vector<8x8xf32> to vector<8x8xbf16>
      %cst_58 = arith.constant dense<0.000000e+00> : vector<8x16xf32>
      %107 = tpu.matmul %106, %75, %cst_58 {dimension_numbers = #tpu.dot_dimension_numbers<[1], [0], [0], [1], [0, 0, 1, 1], [], []>} : vector<8x8xbf16>, vector<8x16xbf16>, vector<8x16xf32> -> vector<8x16xf32>
      %108 = arith.addf %105, %107 : vector<8x16xf32>
      %c1_59 = arith.constant 1 : index
      %c0_60 = arith.constant 0 : index
      %c0_61 = arith.constant 0 : index
      %109 = vector.load %arg9[%c1_59, %c0_60, %c0_61] : memref<2x8x16xf32, #tpu.memory_space<vmem>>, vector<1x8x16xf32>
      %110 = vector.shape_cast %109 : vector<1x8x16xf32> to vector<8x16xf32>
      %111 = vector.shape_cast %108 : vector<8x16xf32> to vector<1x8x16xf32>
      tpu.vector_store %arg9[%c1_59, %c0_60, %c0_61], %111 {strides = array<i32>} : memref<2x8x16xf32, #tpu.memory_space<vmem>>, vector<1x8x16xf32>,
      %c1_62 = arith.constant 1 : index
      %c0_63 = arith.constant 0 : index
      %c0_64 = arith.constant 0 : index
      %112 = vector.load %arg7[%c1_62, %c0_63, %c0_64] : memref<2x8x1xf32, #tpu.memory_space<vmem>>, vector<1x8x1xf32>
      %113 = vector.shape_cast %112 : vector<1x8x1xf32> to vector<8x1xf32>
      %114 = vector.shape_cast %85 : vector<8x1xf32> to vector<1x8x1xf32>
      tpu.vector_store %arg7[%c1_62, %c0_63, %c0_64], %114 {strides = array<i32>} : memref<2x8x1xf32, #tpu.memory_space<vmem>>, vector<1x8x1xf32>,
    } else {
    }
    %c0_i32_4 = arith.constant 0 : i32
    %10 = arith.cmpi eq, %arg2, %c0_i32_4 : i32
    %11 = arith.extui %10 : i1 to i32
    %c0_i32_5 = arith.constant 0 : i32
    %12 = arith.cmpi ne, %11, %c0_i32_5 : i32
    scf.if %12 {
      %c0 = arith.constant 0 : index
      %c0_6 = arith.constant 0 : index
      %c0_7 = arith.constant 0 : index
      %13 = vector.load %arg9[%c0, %c0_6, %c0_7] : memref<2x8x16xf32, #tpu.memory_space<vmem>>, vector<1x8x16xf32>
      %14 = vector.shape_cast %13 : vector<1x8x16xf32> to vector<8x16xf32>
      %c0_8 = arith.constant 0 : index
      %c0_9 = arith.constant 0 : index
      %c0_10 = arith.constant 0 : index
      %15 = vector.load %arg8[%c0_8, %c0_9, %c0_10] : memref<2x8x1xf32, #tpu.memory_space<vmem>>, vector<1x8x1xf32>
      %16 = vector.shape_cast %15 : vector<1x8x1xf32> to vector<8x1xf32>
      %17 = vector.broadcast %16 : vector<8x1xf32> to vector<8x16xf32>
      %18 = arith.divf %14, %17 : vector<8x16xf32>
      %c1 = arith.constant 1 : index
      %c0_11 = arith.constant 0 : index
      %c0_12 = arith.constant 0 : index
      %19 = vector.load %arg9[%c1, %c0_11, %c0_12] : memref<2x8x16xf32, #tpu.memory_space<vmem>>, vector<1x8x16xf32>
      %20 = vector.shape_cast %19 : vector<1x8x16xf32> to vector<8x16xf32>
      %c1_13 = arith.constant 1 : index
      %c0_14 = arith.constant 0 : index
      %c0_15 = arith.constant 0 : index
      %21 = vector.load %arg8[%c1_13, %c0_14, %c0_15] : memref<2x8x1xf32, #tpu.memory_space<vmem>>, vector<1x8x1xf32>
      %22 = vector.shape_cast %21 : vector<1x8x1xf32> to vector<8x1xf32>
      %23 = vector.broadcast %22 : vector<8x1xf32> to vector<8x16xf32>
      %24 = arith.divf %20, %23 : vector<8x16xf32>
      %25 = tpu.concatenate %18, %24 in 1 : vector<8x16xf32>, vector<8x16xf32> -> vector<8x32xf32>
      %26 = arith.truncf %25 : vector<8x32xf32> to vector<8x32xbf16>
      %c0_16 = arith.constant 0 : index
      %c0_17 = arith.constant 0 : index
      %c0_18 = arith.constant 0 : index
      %27 = vector.load %arg6[%c0_16, %c0_17, %c0_18] : memref<1x8x32xbf16, #tpu.memory_space<vmem>>, vector<1x8x32xbf16>
      %28 = vector.shape_cast %27 : vector<1x8x32xbf16> to vector<8x32xbf16>
      %29 = vector.shape_cast %26 : vector<8x32xbf16> to vector<1x8x32xbf16>
      tpu.vector_store %arg6[%c0_16, %c0_17, %c0_18], %29 {strides = array<i32>} : memref<1x8x32xbf16, #tpu.memory_space<vmem>>, vector<1x8x32xbf16>,
    } else {
    }
    return
  }
  func.func @transform_0(%arg0: i32, %arg1: i32, %arg2: i32) -> (i32, i32, i32) {
    %c0_i32 = arith.constant 0 : i32
    %c0_i32_0 = arith.constant 0 : i32
    return %arg0, %arg1, %c0_i32 : i32, i32, i32
  }
  func.func @transform_1(%arg0: i32, %arg1: i32, %arg2: i32) -> (i32, i32, i32) {
    %c0_i32 = arith.constant 0 : i32
    %c0_i32_0 = arith.constant 0 : i32
    return %arg0, %arg2, %c0_i32 : i32, i32, i32
  }
  func.func @transform_2(%arg0: i32, %arg1: i32, %arg2: i32) -> (i32, i32, i32) {
    %c0_i32 = arith.constant 0 : i32
    %c0_i32_0 = arith.constant 0 : i32
    return %arg0, %arg2, %c0_i32 : i32, i32, i32
  }
  func.func @transform_3(%arg0: i32, %arg1: i32, %arg2: i32) -> (i32, i32, i32) {
    %c0_i32 = arith.constant 0 : i32
    %c0_i32_0 = arith.constant 0 : i32
    return %arg0, %arg1, %c0_i32 : i32, i32, i32
  }
}

</mosaic_0001>

<llo_original>
// kernel: _lambda_.45
$region0: #{_lambda_.45}
  #allocation0 [shape = 'u32[]', space=smem, size = 0x4, offset = 0x4, fixed_abs, tag = 'smem constant byte address 0x4 - core index']
  #allocation1 [shape = 'u32[144,128]{1,0:T(1,128)}', space=vmem, size = 0x12000, scoped, tag = 'internal scratch']
  %s0 = inlined_call_operand.vmem [shape: bf16[16,32], index: 0, kind: input, shape index: {}]
  %s1 = inlined_call_operand.vmem [shape: f32[1,32], index: 1, kind: input, shape index: {}]
  %s2 = inlined_call_operand.vmem [shape: f32[1,32], index: 2, kind: input, shape index: {}]
  %s3 = inlined_call_operand.vmem [shape: bf16[16,32], index: 3, kind: output, shape index: {}]
  %s4 = sld [smem:[#allocation0]]
  $region22: #{_lambda_.45} parent=0
    _
  %s6 = ssub.s32 1, %s4
  %s7 = scalar_select 0, %s6, %s4
  // Predicated region
  $region2: #{_lambda_.45} parent=0 // pred_check
    _
  $region3: #{_lambda_.45} parent=0 // pred_check_branch
    %9 = sbr.rel (0) target = $region5
  $region4: #{_lambda_.45} parent=0 // pred_region
    _
  $region5: #{_lambda_.45} parent=0 // pred_fallthru
    _
  // Predicated region
  $region6: #{_lambda_.45} parent=0 // pred_check
    _
  $region7: #{_lambda_.45} parent=0 // pred_check_branch
    %11 = sbr.rel (0) target = $region9
  $region8: #{_lambda_.45} parent=0 // pred_region
    _
  $region9: #{_lambda_.45} parent=0 // pred_fallthru
    _
  // Predicated region
  $region10: #{_lambda_.45} parent=0 // pred_check
    _
  $region11: #{_lambda_.45} parent=0 // pred_check_branch
    %13 = sbr.rel (0) target = $region13
  $region12: #{_lambda_.45} parent=0 // pred_region
    _
  $region13: #{_lambda_.45} parent=0 // pred_fallthru
    _
  %v14 = vld [vmem:[%s0] sm:$0xf]
  %v15 = vld [vmem:[%s0 + $0x4] sm:$0xf]
  %v16 = vunpack.c.l.bf16 %v14
  %v17 = vunpack.c.l.bf16 %v15
  %vm18 = vcmask 261120
  %v19 = vsel %vm18, %v16, 0.0
  %20 = vadd.xlane.f32.xlu0 %v19
  %v21 = vpop.xlane.xlu0 %20
  %v22 = vsel %vm18, %v17, 0.0
  %23 = vadd.xlane.f32.xlu0 %v22
  %v24 = vpop.xlane.xlu0 %23
  %v25 = vrcp.pop 32.0
  %v26 = vmul.f32 %v21, %v25
  %v27 = vmul.f32 %v24, %v25
  %v28 = vsub.f32 %v16, %v26
  %v29 = vsub.f32 %v17, %v27
  %v30 = vmul.f32 %v28, %v28
  %v31 = vmul.f32 %v29, %v29
  %v32 = vsel %vm18, %v30, 0.0
  %33 = vadd.xlane.f32.xlu0 %v32
  %v34 = vpop.xlane.xlu0 %33
  %v35 = vsel %vm18, %v31, 0.0
  %36 = vadd.xlane.f32.xlu0 %v35
  %v37 = vpop.xlane.xlu0 %36
  %v38 = vmul.f32 %v34, %v25
  %v39 = vmul.f32 %v37, %v25
  %v40 = vadd.f32 %v38, 1e-05
  %v41 = vadd.f32 %v39, 1e-05
  %v42 = vrsqrt.pop %v40
  %v43 = vrsqrt.pop %v41
  %v44 = vmul.f32 %v28, %v42
  %v45 = vmul.f32 %v29, %v43
  %v46 = vld [vmem:[%s1] sm:$0x1]
  %v48 = vlaneseq
  %v49 = vshrl.u32 %v48, 7
  %v50 = vsub.s32 0, %v49
  %v51 = vrot.slane %v46, %v50
  %v53 = vmul.f32 %v44, %v51
  %v54 = vmul.f32 %v45, %v51
  %v55 = vld [vmem:[%s2] sm:$0x1]
  %v57 = vlaneseq
  %v58 = vshrl.u32 %v57, 7
  %v59 = vsub.s32 0, %v58
  %v60 = vrot.slane %v55, %v59
  %v62 = vadd.f32 %v53, %v60
  %v63 = vadd.f32 %v54, %v60
  %v64 = vpack.c.bf16 %v63, %v62
  %v66 = vunpack.c.l.b16 %v64
  %v67 = vunpack.c.h.b16 %v64
  %v68 = vpack.c.b16 %v66, %v66
  %v69 = vpack.c.b16 %v67, %v67
  %vm72 = vcmask 257024
  %73 = vst.msk [vmem:[%s3] sm:$0xf] %vm72, %v68
  %74 = vst.msk [vmem:[%s3 + $0x4] sm:$0xf] %vm72, %v69
  // Predicated region
  $region14: #{_lambda_.45} parent=0 // pred_check
    _
  $region15: #{_lambda_.45} parent=0 // pred_check_branch
    %76 = sbr.rel (0) target = $region17
  $region16: #{_lambda_.45} parent=0 // pred_region
    _
  $region17: #{_lambda_.45} parent=0 // pred_fallthru
    _
  // Predicated region
  $region18: #{_lambda_.45} parent=0 // pred_check
    _
  $region19: #{_lambda_.45} parent=0 // pred_check_branch
    %78 = sbr.rel (0) target = $region21
  $region20: #{_lambda_.45} parent=0 // pred_region
    _
  $region21: #{_lambda_.45} parent=0 // pred_fallthru
    _

// kernel: _lambda_.44
$region0: #{_lambda_.44}
  #allocation0 [shape = 'u32[]', space=smem, size = 0x4, offset = 0x4, fixed_abs, tag = 'smem constant byte address 0x4 - core index']
  #allocation1 [shape = 'u32[144,128]{1,0:T(1,128)}', space=vmem, size = 0x12000, scoped, tag = 'internal scratch']
  %s0 = inlined_call_operand.vmem [shape: bf16[16,128], index: 0, kind: input, shape index: {}]
  %s1 = inlined_call_operand.vmem [shape: bf16[128,128], index: 1, kind: input, shape index: {}]
  %s2 = inlined_call_operand.vmem [shape: f32[1,128], index: 2, kind: input, shape index: {}]
  %s3 = inlined_call_operand.vmem [shape: bf16[16,128], index: 3, kind: output, shape index: {}]
  %s4 = sld [smem:[#allocation0]]
  $region22: #{_lambda_.44} parent=0
    _
  %s6 = ssub.s32 1, %s4
  %s7 = scalar_select 0, %s6, %s4
  // Predicated region
  $region2: #{_lambda_.44} parent=0 // pred_check
    _
  $region3: #{_lambda_.44} parent=0 // pred_check_branch
    %9 = sbr.rel (0) target = $region5
  $region4: #{_lambda_.44} parent=0 // pred_region
    _
  $region5: #{_lambda_.44} parent=0 // pred_fallthru
    _
  // Predicated region
  $region6: #{_lambda_.44} parent=0 // pred_check
    _
  $region7: #{_lambda_.44} parent=0 // pred_check_branch
    %11 = sbr.rel (0) target = $region9
  $region8: #{_lambda_.44} parent=0 // pred_region
    _
  $region9: #{_lambda_.44} parent=0 // pred_fallthru
    _
  // Predicated region
  $region10: #{_lambda_.44} parent=0 // pred_check
    _
  $region11: #{_lambda_.44} parent=0 // pred_check_branch
    %13 = sbr.rel (0) target = $region13
  $region12: #{_lambda_.44} parent=0 // pred_region
    _
  $region13: #{_lambda_.44} parent=0 // pred_fallthru
    _
  %v15 = vld [vmem:[%s0] sm:$0xf]
  %v16 = vld [vmem:[%s0 + $0x4] sm:$0xf]
  %v17 = vld [vmem:[%s1] sm:$0xf]
  %v18 = vld [vmem:[%s1 + $0x4] sm:$0xf]
  %v19 = vld [vmem:[%s1 + $0x8] sm:$0xf]
  %v20 = vld [vmem:[%s1 + $0xc] sm:$0xf]
  %v21 = vld [vmem:[%s1 + $0x10] sm:$0xf]
  %v22 = vld [vmem:[%s1 + $0x14] sm:$0xf]
  %v23 = vld [vmem:[%s1 + $0x18] sm:$0xf]
  %v24 = vld [vmem:[%s1 + $0x1c] sm:$0xf]
  %v25 = vld [vmem:[%s1 + $0x20] sm:$0xf]
  %v26 = vld [vmem:[%s1 + $0x24] sm:$0xf]
  %v27 = vld [vmem:[%s1 + $0x28] sm:$0xf]
  %v28 = vld [vmem:[%s1 + $0x2c] sm:$0xf]
  %v29 = vld [vmem:[%s1 + $0x30] sm:$0xf]
  %v30 = vld [vmem:[%s1 + $0x34] sm:$0xf]
  %v31 = vld [vmem:[%s1 + $0x38] sm:$0xf]
  %v32 = vld [vmem:[%s1 + $0x3c] sm:$0xf]
  %v33 = vld [vmem:[%s2] sm:$0x1]
  %v35 = vlaneseq
  %v36 = vshrl.u32 %v35, 7
  %v37 = vsub.s32 0, %v36
  %v38 = vrot.slane %v33, %v37
  %v42 = vunpack.c.l.b16 %v15
  %v43 = vunpack.c.l.b16 %v16
  %v44 = vpack.c.b16 %v43, %v42
  %v62 = vunpack.c.l.b16 %v17
  %v63 = vunpack.c.l.b16 %v18
  %v64 = vunpack.c.l.b16 %v19
  %v65 = vunpack.c.l.b16 %v20
  %v66 = vunpack.c.l.b16 %v21
  %v67 = vunpack.c.l.b16 %v22
  %v68 = vunpack.c.l.b16 %v23
  %v69 = vunpack.c.l.b16 %v24
  %v70 = vunpack.c.l.b16 %v25
  %v71 = vunpack.c.l.b16 %v26
  %v72 = vunpack.c.l.b16 %v27
  %v73 = vunpack.c.l.b16 %v28
  %v74 = vunpack.c.l.b16 %v29
  %v75 = vunpack.c.l.b16 %v30
  %v76 = vunpack.c.l.b16 %v31
  %v77 = vunpack.c.l.b16 %v32
  %v78 = vpack.c.b16 %v63, %v62
  %v79 = vpack.c.b16 %v65, %v64
  %v80 = vpack.c.b16 %v67, %v66
  %v81 = vpack.c.b16 %v69, %v68
  %v82 = vpack.c.b16 %v71, %v70
  %v83 = vpack.c.b16 %v73, %v72
  %v84 = vpack.c.b16 %v75, %v74
  %v85 = vpack.c.b16 %v77, %v76
  %94 = vmatprep.subr.bf16.mxu0 0
  %95 = vmatpush1.bf16.msra.mxu0 %v78
  %96 = vmatprep.subr.bf16.mxu0 0
  %97 = vmatpush1.bf16.msra.mxu0 %v79
  %98 = vmatprep.subr.bf16.mxu0 0
  %99 = vmatpush1.bf16.msra.mxu0 %v80
  %100 = vmatprep.subr.bf16.mxu0 0
  %101 = vmatpush1.bf16.msra.mxu0 %v81
  %102 = vmatprep.subr.bf16.mxu0 0
  %103 = vmatpush1.bf16.msra.mxu0 %v82
  %104 = vmatprep.subr.bf16.mxu0 0
  %105 = vmatpush1.bf16.msra.mxu0 %v83
  %106 = vmatprep.subr.bf16.mxu0 0
  %107 = vmatpush1.bf16.msra.mxu0 %v84
  %108 = vmatprep.subr.bf16.mxu0 0
  %109 = vmatpush1.bf16.msra.mxu0 %v85
  %110 = vmatprep.subr.bf16.mxu0 0
  %111 = vmatpush1.bf16.msra.mxu0 0
  %112 = vmatprep.subr.bf16.mxu0 0
  %113 = vmatpush1.bf16.msra.mxu0 0
  %114 = vmatprep.subr.bf16.mxu0 0
  %115 = vmatpush1.bf16.msra.mxu0 0
  %116 = vmatprep.subr.bf16.mxu0 0
  %117 = vmatpush1.bf16.msra.mxu0 0
  %118 = vmatprep.subr.bf16.mxu0 0
  %119 = vmatpush1.bf16.msra.mxu0 0
  %120 = vmatprep.subr.bf16.mxu0 0
  %121 = vmatpush1.bf16.msra.mxu0 0
  %122 = vmatprep.subr.bf16.mxu0 0
  %123 = vmatpush1.bf16.msra.mxu0 0
  %124 = vmatprep.subr.bf16.mxu0 0
  %125 = vmatpush1.bf16.msra.mxu0 0
  %126 = vmatprep.mubr.bf16.mxu0 0
  %127 = vmatmul.mubr.bf16.gmra.mrb[0].mxu0 %v44
  %v128 = vpop.f32.mrb[0].mxu0
  %v129 = vadd.f32 %v38, %v128
  %v130 = vpop.f32.mrb[0].mxu0
  %v131 = vpop.f32.mrb[0].mxu0
  %v132 = vadd.f32 %v38, %v131
  %v133 = vpop.f32.mrb[0].mxu0
  %134 = vdwg.mxu0
  %v135 = vmul.f32 %v129, 0.5
  %v136 = vmul.f32 %v132, 0.5
  %v137 = vmul.f32 %v129, 0.70710677
  %v138 = vmul.f32 %v132, 0.70710677
  %v139 = verf.f32.pop %v137
  %v140 = verf.f32.pop %v138
  %v141 = vadd.f32 %v139, 1.0
  %v142 = vadd.f32 %v140, 1.0
  %v143 = vmul.f32 %v135, %v141
  %v144 = vmul.f32 %v136, %v142
  %v145 = vpack.c.bf16 %v144, %v143
  %v147 = vunpack.c.l.b16 %v145
  %v148 = vunpack.c.h.b16 %v145
  %v149 = vpack.c.b16 %v147, %v147
  %v150 = vpack.c.b16 %v148, %v148
  %153 = vst [vmem:[%s3] sm:$0xf] %v149
  %154 = vst [vmem:[%s3 + $0x4] sm:$0xf] %v150
  // Predicated region
  $region14: #{_lambda_.44} parent=0 // pred_check
    _
  $region15: #{_lambda_.44} parent=0 // pred_check_branch
    %156 = sbr.rel (0) target = $region17
  $region16: #{_lambda_.44} parent=0 // pred_region
    _
  $region17: #{_lambda_.44} parent=0 // pred_fallthru
    _
  // Predicated region
  $region18: #{_lambda_.44} parent=0 // pred_check
    _
  $region19: #{_lambda_.44} parent=0 // pred_check_branch
    %158 = sbr.rel (0) target = $region21
  $region20: #{_lambda_.44} parent=0 // pred_region
    _
  $region21: #{_lambda_.44} parent=0 // pred_fallthru
    _

// kernel: _lambda_.43
$region0: #{_lambda_.43}
  #allocation0 [shape = 'u32[]', space=smem, size = 0x4, offset = 0x4, fixed_abs, tag = 'smem constant byte address 0x4 - core index']
  #allocation1 [shape = 'u32[144,128]{1,0:T(1,128)}', space=vmem, size = 0x12000, scoped, tag = 'internal scratch']
  %s0 = inlined_call_operand.vmem [shape: bf16[32,128], index: 0, kind: input, shape index: {}]
  %s1 = inlined_call_operand.vmem [shape: bf16[128,128], index: 1, kind: input, shape index: {}]
  %s2 = inlined_call_operand.vmem [shape: f32[1,128], index: 2, kind: input, shape index: {}]
  %s3 = inlined_call_operand.vmem [shape: bf16[32,128], index: 3, kind: output, shape index: {}]
  %s4 = sld [smem:[#allocation0]]
  $region22: #{_lambda_.43} parent=0
    _
  %s6 = ssub.s32 1, %s4
  %s7 = scalar_select 0, %s6, %s4
  // Predicated region
  $region2: #{_lambda_.43} parent=0 // pred_check
    _
  $region3: #{_lambda_.43} parent=0 // pred_check_branch
    %9 = sbr.rel (0) target = $region5
  $region4: #{_lambda_.43} parent=0 // pred_region
    _
  $region5: #{_lambda_.43} parent=0 // pred_fallthru
    _
  // Predicated region
  $region6: #{_lambda_.43} parent=0 // pred_check
    _
  $region7: #{_lambda_.43} parent=0 // pred_check_branch
    %11 = sbr.rel (0) target = $region9
  $region8: #{_lambda_.43} parent=0 // pred_region
    _
  $region9: #{_lambda_.43} parent=0 // pred_fallthru
    _
  // Predicated region
  $region10: #{_lambda_.43} parent=0 // pred_check
    _
  $region11: #{_lambda_.43} parent=0 // pred_check_branch
    %13 = sbr.rel (0) target = $region13
  $region12: #{_lambda_.43} parent=0 // pred_region
    _
  $region13: #{_lambda_.43} parent=0 // pred_fallthru
    _
  %v15 = vld [vmem:[%s0] sm:$0xf]
  %v16 = vld [vmem:[%s0 + $0x4] sm:$0xf]
  %v17 = vld [vmem:[%s0 + $0x8] sm:$0xf]
  %v18 = vld [vmem:[%s0 + $0xc] sm:$0xf]
  %v19 = vld [vmem:[%s1] sm:$0xf]
  %v20 = vld [vmem:[%s1 + $0x4] sm:$0xf]
  %v21 = vld [vmem:[%s1 + $0x8] sm:$0xf]
  %v22 = vld [vmem:[%s1 + $0xc] sm:$0xf]
  %v23 = vld [vmem:[%s1 + $0x10] sm:$0xf]
  %v24 = vld [vmem:[%s1 + $0x14] sm:$0xf]
  %v25 = vld [vmem:[%s1 + $0x18] sm:$0xf]
  %v26 = vld [vmem:[%s1 + $0x1c] sm:$0xf]
  %v27 = vld [vmem:[%s1 + $0x20] sm:$0xf]
  %v28 = vld [vmem:[%s1 + $0x24] sm:$0xf]
  %v29 = vld [vmem:[%s1 + $0x28] sm:$0xf]
  %v30 = vld [vmem:[%s1 + $0x2c] sm:$0xf]
  %v31 = vld [vmem:[%s1 + $0x30] sm:$0xf]
  %v32 = vld [vmem:[%s1 + $0x34] sm:$0xf]
  %v33 = vld [vmem:[%s1 + $0x38] sm:$0xf]
  %v34 = vld [vmem:[%s1 + $0x3c] sm:$0xf]
  %v35 = vld [vmem:[%s2] sm:$0x1]
  %v37 = vlaneseq
  %v38 = vshrl.u32 %v37, 7
  %v39 = vsub.s32 0, %v38
  %v40 = vrot.slane %v35, %v39
  %v46 = vunpack.c.l.b16 %v15
  %v47 = vunpack.c.l.b16 %v16
  %v48 = vunpack.c.l.b16 %v17
  %v49 = vunpack.c.l.b16 %v18
  %v50 = vpack.c.b16 %v47, %v46
  %v51 = vpack.c.b16 %v49, %v48
  %v70 = vunpack.c.l.b16 %v19
  %v71 = vunpack.c.l.b16 %v20
  %v72 = vunpack.c.l.b16 %v21
  %v73 = vunpack.c.l.b16 %v22
  %v74 = vunpack.c.l.b16 %v23
  %v75 = vunpack.c.l.b16 %v24
  %v76 = vunpack.c.l.b16 %v25
  %v77 = vunpack.c.l.b16 %v26
  %v78 = vunpack.c.l.b16 %v27
  %v79 = vunpack.c.l.b16 %v28
  %v80 = vunpack.c.l.b16 %v29
  %v81 = vunpack.c.l.b16 %v30
  %v82 = vunpack.c.l.b16 %v31
  %v83 = vunpack.c.l.b16 %v32
  %v84 = vunpack.c.l.b16 %v33
  %v85 = vunpack.c.l.b16 %v34
  %v86 = vpack.c.b16 %v71, %v70
  %v87 = vpack.c.b16 %v73, %v72
  %v88 = vpack.c.b16 %v75, %v74
  %v89 = vpack.c.b16 %v77, %v76
  %v90 = vpack.c.b16 %v79, %v78
  %v91 = vpack.c.b16 %v81, %v80
  %v92 = vpack.c.b16 %v83, %v82
  %v93 = vpack.c.b16 %v85, %v84
  %102 = vmatprep.subr.bf16.mxu0 0
  %103 = vmatpush1.bf16.msra.mxu0 %v86
  %104 = vmatprep.subr.bf16.mxu0 0
  %105 = vmatpush1.bf16.msra.mxu0 %v87
  %106 = vmatprep.subr.bf16.mxu0 0
  %107 = vmatpush1.bf16.msra.mxu0 %v88
  %108 = vmatprep.subr.bf16.mxu0 0
  %109 = vmatpush1.bf16.msra.mxu0 %v89
  %110 = vmatprep.subr.bf16.mxu0 0
  %111 = vmatpush1.bf16.msra.mxu0 %v90
  %112 = vmatprep.subr.bf16.mxu0 0
  %113 = vmatpush1.bf16.msra.mxu0 %v91
  %114 = vmatprep.subr.bf16.mxu0 0
  %115 = vmatpush1.bf16.msra.mxu0 %v92
  %116 = vmatprep.subr.bf16.mxu0 0
  %117 = vmatpush1.bf16.msra.mxu0 %v93
  %118 = vmatprep.subr.bf16.mxu0 0
  %119 = vmatpush1.bf16.msra.mxu0 0
  %120 = vmatprep.subr.bf16.mxu0 0
  %121 = vmatpush1.bf16.msra.mxu0 0
  %122 = vmatprep.subr.bf16.mxu0 0
  %123 = vmatpush1.bf16.msra.mxu0 0
  %124 = vmatprep.subr.bf16.mxu0 0
  %125 = vmatpush1.bf16.msra.mxu0 0
  %126 = vmatprep.subr.bf16.mxu0 0
  %127 = vmatpush1.bf16.msra.mxu0 0
  %128 = vmatprep.subr.bf16.mxu0 0
  %129 = vmatpush1.bf16.msra.mxu0 0
  %130 = vmatprep.subr.bf16.mxu0 0
  %131 = vmatpush1.bf16.msra.mxu0 0
  %132 = vmatprep.subr.bf16.mxu0 0
  %133 = vmatpush1.bf16.msra.mxu0 0
  %134 = vmatprep.mubr.bf16.mxu0 0
  %135 = vmatmul.mubr.bf16.gmra.mrb[0].mxu0 %v50
  %v136 = vpop.f32.mrb[0].mxu0
  %v137 = vadd.f32 %v40, %v136
  %v138 = vpop.f32.mrb[0].mxu0
  %v139 = vpop.f32.mrb[0].mxu0
  %v140 = vadd.f32 %v40, %v139
  %v141 = vpop.f32.mrb[0].mxu0
  %142 = vmatprep.mubr.bf16.mxu0 0
  %143 = vmatmul.mubr.bf16.gmra.mrb[0].mxu0 %v51
  %v144 = vpop.f32.mrb[0].mxu0
  %v145 = vadd.f32 %v40, %v144
  %v146 = vpop.f32.mrb[0].mxu0
  %v147 = vpop.f32.mrb[0].mxu0
  %v148 = vadd.f32 %v40, %v147
  %v149 = vpop.f32.mrb[0].mxu0
  %150 = vdwg.mxu0
  %v151 = vmul.f32 %v137, 0.5
  %v152 = vmul.f32 %v140, 0.5
  %v153 = vmul.f32 %v145, 0.5
  %v154 = vmul.f32 %v148, 0.5
  %v155 = vmul.f32 %v137, 0.70710677
  %v156 = vmul.f32 %v140, 0.70710677
  %v157 = vmul.f32 %v145, 0.70710677
  %v158 = vmul.f32 %v148, 0.70710677
  %v159 = verf.f32.pop %v155
  %v160 = verf.f32.pop %v156
  %v161 = verf.f32.pop %v157
  %v162 = verf.f32.pop %v158
  %v163 = vadd.f32 %v159, 1.0
  %v164 = vadd.f32 %v160, 1.0
  %v165 = vadd.f32 %v161, 1.0
  %v166 = vadd.f32 %v162, 1.0
  %v167 = vmul.f32 %v151, %v163
  %v168 = vmul.f32 %v152, %v164
  %v169 = vmul.f32 %v153, %v165
  %v170 = vmul.f32 %v154, %v166
  %v171 = vpack.c.bf16 %v168, %v167
  %v172 = vpack.c.bf16 %v170, %v169
  %v175 = vunpack.c.l.b16 %v171
  %v176 = vunpack.c.h.b16 %v171
  %v177 = vunpack.c.l.b16 %v172
  %v178 = vunpack.c.h.b16 %v172
  %v179 = vpack.c.b16 %v175, %v175
  %v180 = vpack.c.b16 %v176, %v176
  %v181 = vpack.c.b16 %v177, %v177
  %v182 = vpack.c.b16 %v178, %v178
  %187 = vst [vmem:[%s3] sm:$0xf] %v179
  %188 = vst [vmem:[%s3 + $0x4] sm:$0xf] %v180
  %189 = vst [vmem:[%s3 + $0x8] sm:$0xf] %v181
  %190 = vst [vmem:[%s3 + $0xc] sm:$0xf] %v182
  // Predicated region
  $region14: #{_lambda_.43} parent=0 // pred_check
    _
  $region15: #{_lambda_.43} parent=0 // pred_check_branch
    %192 = sbr.rel (0) target = $region17
  $region16: #{_lambda_.43} parent=0 // pred_region
    _
  $region17: #{_lambda_.43} parent=0 // pred_fallthru
    _
  // Predicated region
  $region18: #{_lambda_.43} parent=0 // pred_check
    _
  $region19: #{_lambda_.43} parent=0 // pred_check_branch
    %194 = sbr.rel (0) target = $region21
  $region20: #{_lambda_.43} parent=0 // pred_region
    _
  $region21: #{_lambda_.43} parent=0 // pred_fallthru
    _

// kernel: _lambda_.46
$region0: #{_lambda_.46}
  #allocation0 [shape = 'u32[]', space=smem, size = 0x4, offset = 0x4, fixed_abs, tag = 'smem constant byte address 0x4 - core index']
  #allocation1 [shape = 'u32[144,128]{1,0:T(1,128)}', space=vmem, size = 0x12000, scoped, tag = 'internal scratch']
  %s0 = inlined_call_operand.vmem [shape: bf16[16,128], index: 0, kind: input, shape index: {}]
  %s1 = inlined_call_operand.vmem [shape: bf16[128,128], index: 1, kind: input, shape index: {}]
  %s2 = inlined_call_operand.vmem [shape: f32[1,128], index: 2, kind: input, shape index: {}]
  %s3 = inlined_call_operand.vmem [shape: bf16[16,128], index: 3, kind: output, shape index: {}]
  %s4 = sld [smem:[#allocation0]]
  $region22: #{_lambda_.46} parent=0
    _
  %s6 = ssub.s32 1, %s4
  %s7 = scalar_select 0, %s6, %s4
  // Predicated region
  $region2: #{_lambda_.46} parent=0 // pred_check
    _
  $region3: #{_lambda_.46} parent=0 // pred_check_branch
    %9 = sbr.rel (0) target = $region5
  $region4: #{_lambda_.46} parent=0 // pred_region
    _
  $region5: #{_lambda_.46} parent=0 // pred_fallthru
    _
  // Predicated region
  $region6: #{_lambda_.46} parent=0 // pred_check
    _
  $region7: #{_lambda_.46} parent=0 // pred_check_branch
    %11 = sbr.rel (0) target = $region9
  $region8: #{_lambda_.46} parent=0 // pred_region
    _
  $region9: #{_lambda_.46} parent=0 // pred_fallthru
    _
  // Predicated region
  $region10: #{_lambda_.46} parent=0 // pred_check
    _
  $region11: #{_lambda_.46} parent=0 // pred_check_branch
    %13 = sbr.rel (0) target = $region13
  $region12: #{_lambda_.46} parent=0 // pred_region
    _
  $region13: #{_lambda_.46} parent=0 // pred_fallthru
    _
  %v15 = vld [vmem:[%s0] sm:$0xf]
  %v16 = vld [vmem:[%s0 + $0x4] sm:$0xf]
  %v17 = vld [vmem:[%s1] sm:$0xf]
  %v18 = vld [vmem:[%s1 + $0x4] sm:$0xf]
  %v19 = vld [vmem:[%s1 + $0x8] sm:$0xf]
  %v20 = vld [vmem:[%s1 + $0xc] sm:$0xf]
  %v21 = vld [vmem:[%s1 + $0x10] sm:$0xf]
  %v22 = vld [vmem:[%s1 + $0x14] sm:$0xf]
  %v23 = vld [vmem:[%s1 + $0x18] sm:$0xf]
  %v24 = vld [vmem:[%s1 + $0x1c] sm:$0xf]
  %v25 = vld [vmem:[%s1 + $0x20] sm:$0xf]
  %v26 = vld [vmem:[%s1 + $0x24] sm:$0xf]
  %v27 = vld [vmem:[%s1 + $0x28] sm:$0xf]
  %v28 = vld [vmem:[%s1 + $0x2c] sm:$0xf]
  %v29 = vld [vmem:[%s1 + $0x30] sm:$0xf]
  %v30 = vld [vmem:[%s1 + $0x34] sm:$0xf]
  %v31 = vld [vmem:[%s1 + $0x38] sm:$0xf]
  %v32 = vld [vmem:[%s1 + $0x3c] sm:$0xf]
  %v33 = vld [vmem:[%s2] sm:$0x1]
  %v35 = vlaneseq
  %v36 = vshrl.u32 %v35, 7
  %v37 = vsub.s32 0, %v36
  %v38 = vrot.slane %v33, %v37
  %v42 = vunpack.c.l.b16 %v15
  %v43 = vunpack.c.l.b16 %v16
  %v44 = vpack.c.b16 %v43, %v42
  %v62 = vunpack.c.l.b16 %v17
  %v63 = vunpack.c.l.b16 %v18
  %v64 = vunpack.c.l.b16 %v19
  %v65 = vunpack.c.l.b16 %v20
  %v66 = vunpack.c.l.b16 %v21
  %v67 = vunpack.c.l.b16 %v22
  %v68 = vunpack.c.l.b16 %v23
  %v69 = vunpack.c.l.b16 %v24
  %v70 = vunpack.c.l.b16 %v25
  %v71 = vunpack.c.l.b16 %v26
  %v72 = vunpack.c.l.b16 %v27
  %v73 = vunpack.c.l.b16 %v28
  %v74 = vunpack.c.l.b16 %v29
  %v75 = vunpack.c.l.b16 %v30
  %v76 = vunpack.c.l.b16 %v31
  %v77 = vunpack.c.l.b16 %v32
  %v78 = vpack.c.b16 %v63, %v62
  %v79 = vpack.c.b16 %v65, %v64
  %v80 = vpack.c.b16 %v67, %v66
  %v81 = vpack.c.b16 %v69, %v68
  %v82 = vpack.c.b16 %v71, %v70
  %v83 = vpack.c.b16 %v73, %v72
  %v84 = vpack.c.b16 %v75, %v74
  %v85 = vpack.c.b16 %v77, %v76
  %94 = vmatprep.subr.bf16.mxu0 0
  %95 = vmatpush1.bf16.msra.mxu0 %v78
  %96 = vmatprep.subr.bf16.mxu0 0
  %97 = vmatpush1.bf16.msra.mxu0 %v79
  %98 = vmatprep.subr.bf16.mxu0 0
  %99 = vmatpush1.bf16.msra.mxu0 %v80
  %100 = vmatprep.subr.bf16.mxu0 0
  %101 = vmatpush1.bf16.msra.mxu0 %v81
  %102 = vmatprep.subr.bf16.mxu0 0
  %103 = vmatpush1.bf16.msra.mxu0 %v82
  %104 = vmatprep.subr.bf16.mxu0 0
  %105 = vmatpush1.bf16.msra.mxu0 %v83
  %106 = vmatprep.subr.bf16.mxu0 0
  %107 = vmatpush1.bf16.msra.mxu0 %v84
  %108 = vmatprep.subr.bf16.mxu0 0
  %109 = vmatpush1.bf16.msra.mxu0 %v85
  %110 = vmatprep.subr.bf16.mxu0 0
  %111 = vmatpush1.bf16.msra.mxu0 0
  %112 = vmatprep.subr.bf16.mxu0 0
  %113 = vmatpush1.bf16.msra.mxu0 0
  %114 = vmatprep.subr.bf16.mxu0 0
  %115 = vmatpush1.bf16.msra.mxu0 0
  %116 = vmatprep.subr.bf16.mxu0 0
  %117 = vmatpush1.bf16.msra.mxu0 0
  %118 = vmatprep.subr.bf16.mxu0 0
  %119 = vmatpush1.bf16.msra.mxu0 0
  %120 = vmatprep.subr.bf16.mxu0 0
  %121 = vmatpush1.bf16.msra.mxu0 0
  %122 = vmatprep.subr.bf16.mxu0 0
  %123 = vmatpush1.bf16.msra.mxu0 0
  %124 = vmatprep.subr.bf16.mxu0 0
  %125 = vmatpush1.bf16.msra.mxu0 0
  %126 = vmatprep.mubr.bf16.mxu0 0
  %127 = vmatmul.mubr.bf16.gmra.mrb[0].mxu0 %v44
  %v128 = vpop.f32.mrb[0].mxu0
  %v129 = vadd.f32 %v38, %v128
  %v130 = vpop.f32.mrb[0].mxu0
  %v131 = vpop.f32.mrb[0].mxu0
  %v132 = vadd.f32 %v38, %v131
  %v133 = vpop.f32.mrb[0].mxu0
  %134 = vdwg.mxu0
  %v135 = vpack.c.bf16 %v132, %v129
  %v137 = vunpack.c.l.b16 %v135
  %v138 = vunpack.c.h.b16 %v135
  %v139 = vpack.c.b16 %v137, %v137
  %v140 = vpack.c.b16 %v138, %v138
  %143 = vst [vmem:[%s3] sm:$0xf] %v139
  %144 = vst [vmem:[%s3 + $0x4] sm:$0xf] %v140
  // Predicated region
  $region14: #{_lambda_.46} parent=0 // pred_check
    _
  $region15: #{_lambda_.46} parent=0 // pred_check_branch
    %146 = sbr.rel (0) target = $region17
  $region16: #{_lambda_.46} parent=0 // pred_region
    _
  $region17: #{_lambda_.46} parent=0 // pred_fallthru
    _
  // Predicated region
  $region18: #{_lambda_.46} parent=0 // pred_check
    _
  $region19: #{_lambda_.46} parent=0 // pred_check_branch
    %148 = sbr.rel (0) target = $region21
  $region20: #{_lambda_.46} parent=0 // pred_region
    _
  $region21: #{_lambda_.46} parent=0 // pred_fallthru
    _

// kernel: _lambda_.48
$region0: #{_lambda_.48}
  #allocation0 [shape = 'u32[]', space=smem, size = 0x4, offset = 0x4, fixed_abs, tag = 'smem constant byte address 0x4 - core index']
  #allocation1 [shape = 'u32[144,128]{1,0:T(1,128)}', space=vmem, size = 0x12000, scoped, tag = 'internal scratch']
  %s0 = inlined_call_operand.vmem [shape: bf16[16,128], index: 0, kind: input, shape index: {}]
  %s1 = inlined_call_operand.vmem [shape: bf16[128,128], index: 1, kind: input, shape index: {}]
  %s2 = inlined_call_operand.vmem [shape: f32[1,128], index: 2, kind: input, shape index: {}]
  %s3 = inlined_call_operand.vmem [shape: bf16[16,128], index: 3, kind: input, shape index: {}]
  %s4 = inlined_call_operand.vmem [shape: bf16[16,128], index: 4, kind: output, shape index: {}]
  %s5 = sld [smem:[#allocation0]]
  $region26: #{_lambda_.48} parent=0
    _
  %s7 = ssub.s32 1, %s5
  %s8 = scalar_select 0, %s7, %s5
  // Predicated region
  $region2: #{_lambda_.48} parent=0 // pred_check
    _
  $region3: #{_lambda_.48} parent=0 // pred_check_branch
    %10 = sbr.rel (0) target = $region5
  $region4: #{_lambda_.48} parent=0 // pred_region
    _
  $region5: #{_lambda_.48} parent=0 // pred_fallthru
    _
  // Predicated region
  $region6: #{_lambda_.48} parent=0 // pred_check
    _
  $region7: #{_lambda_.48} parent=0 // pred_check_branch
    %12 = sbr.rel (0) target = $region9
  $region8: #{_lambda_.48} parent=0 // pred_region
    _
  $region9: #{_lambda_.48} parent=0 // pred_fallthru
    _
  // Predicated region
  $region10: #{_lambda_.48} parent=0 // pred_check
    _
  $region11: #{_lambda_.48} parent=0 // pred_check_branch
    %14 = sbr.rel (0) target = $region13
  $region12: #{_lambda_.48} parent=0 // pred_region
    _
  $region13: #{_lambda_.48} parent=0 // pred_fallthru
    _
  // Predicated region
  $region14: #{_lambda_.48} parent=0 // pred_check
    _
  $region15: #{_lambda_.48} parent=0 // pred_check_branch
    %16 = sbr.rel (0) target = $region17
  $region16: #{_lambda_.48} parent=0 // pred_region
    _
  $region17: #{_lambda_.48} parent=0 // pred_fallthru
    _
  %v18 = vld [vmem:[%s0] sm:$0xf]
  %v19 = vld [vmem:[%s0 + $0x4] sm:$0xf]
  %v20 = vld [vmem:[%s1] sm:$0xf]
  %v21 = vld [vmem:[%s1 + $0x4] sm:$0xf]
  %v22 = vld [vmem:[%s1 + $0x8] sm:$0xf]
  %v23 = vld [vmem:[%s1 + $0xc] sm:$0xf]
  %v24 = vld [vmem:[%s1 + $0x10] sm:$0xf]
  %v25 = vld [vmem:[%s1 + $0x14] sm:$0xf]
  %v26 = vld [vmem:[%s1 + $0x18] sm:$0xf]
  %v27 = vld [vmem:[%s1 + $0x1c] sm:$0xf]
  %v28 = vld [vmem:[%s1 + $0x20] sm:$0xf]
  %v29 = vld [vmem:[%s1 + $0x24] sm:$0xf]
  %v30 = vld [vmem:[%s1 + $0x28] sm:$0xf]
  %v31 = vld [vmem:[%s1 + $0x2c] sm:$0xf]
  %v32 = vld [vmem:[%s1 + $0x30] sm:$0xf]
  %v33 = vld [vmem:[%s1 + $0x34] sm:$0xf]
  %v34 = vld [vmem:[%s1 + $0x38] sm:$0xf]
  %v35 = vld [vmem:[%s1 + $0x3c] sm:$0xf]
  %v36 = vld [vmem:[%s2] sm:$0x1]
  %v38 = vlaneseq
  %v39 = vshrl.u32 %v38, 7
  %v40 = vsub.s32 0, %v39
  %v41 = vrot.slane %v36, %v40
  %v45 = vunpack.c.l.b16 %v18
  %v46 = vunpack.c.l.b16 %v19
  %v47 = vpack.c.b16 %v46, %v45
  %v65 = vunpack.c.l.b16 %v20
  %v66 = vunpack.c.l.b16 %v21
  %v67 = vunpack.c.l.b16 %v22
  %v68 = vunpack.c.l.b16 %v23
  %v69 = vunpack.c.l.b16 %v24
  %v70 = vunpack.c.l.b16 %v25
  %v71 = vunpack.c.l.b16 %v26
  %v72 = vunpack.c.l.b16 %v27
  %v73 = vunpack.c.l.b16 %v28
  %v74 = vunpack.c.l.b16 %v29
  %v75 = vunpack.c.l.b16 %v30
  %v76 = vunpack.c.l.b16 %v31
  %v77 = vunpack.c.l.b16 %v32
  %v78 = vunpack.c.l.b16 %v33
  %v79 = vunpack.c.l.b16 %v34
  %v80 = vunpack.c.l.b16 %v35
  %v81 = vpack.c.b16 %v66, %v65
  %v82 = vpack.c.b16 %v68, %v67
  %v83 = vpack.c.b16 %v70, %v69
  %v84 = vpack.c.b16 %v72, %v71
  %v85 = vpack.c.b16 %v74, %v73
  %v86 = vpack.c.b16 %v76, %v75
  %v87 = vpack.c.b16 %v78, %v77
  %v88 = vpack.c.b16 %v80, %v79
  %97 = vmatprep.subr.bf16.mxu0 0
  %98 = vmatpush1.bf16.msra.mxu0 %v81
  %99 = vmatprep.subr.bf16.mxu0 0
  %100 = vmatpush1.bf16.msra.mxu0 %v82
  %101 = vmatprep.subr.bf16.mxu0 0
  %102 = vmatpush1.bf16.msra.mxu0 %v83
  %103 = vmatprep.subr.bf16.mxu0 0
  %104 = vmatpush1.bf16.msra.mxu0 %v84
  %105 = vmatprep.subr.bf16.mxu0 0
  %106 = vmatpush1.bf16.msra.mxu0 %v85
  %107 = vmatprep.subr.bf16.mxu0 0
  %108 = vmatpush1.bf16.msra.mxu0 %v86
  %109 = vmatprep.subr.bf16.mxu0 0
  %110 = vmatpush1.bf16.msra.mxu0 %v87
  %111 = vmatprep.subr.bf16.mxu0 0
  %112 = vmatpush1.bf16.msra.mxu0 %v88
  %113 = vmatprep.subr.bf16.mxu0 0
  %114 = vmatpush1.bf16.msra.mxu0 0
  %115 = vmatprep.subr.bf16.mxu0 0
  %116 = vmatpush1.bf16.msra.mxu0 0
  %117 = vmatprep.subr.bf16.mxu0 0
  %118 = vmatpush1.bf16.msra.mxu0 0
  %119 = vmatprep.subr.bf16.mxu0 0
  %120 = vmatpush1.bf16.msra.mxu0 0
  %121 = vmatprep.subr.bf16.mxu0 0
  %122 = vmatpush1.bf16.msra.mxu0 0
  %123 = vmatprep.subr.bf16.mxu0 0
  %124 = vmatpush1.bf16.msra.mxu0 0
  %125 = vmatprep.subr.bf16.mxu0 0
  %126 = vmatpush1.bf16.msra.mxu0 0
  %127 = vmatprep.subr.bf16.mxu0 0
  %128 = vmatpush1.bf16.msra.mxu0 0
  %129 = vmatprep.mubr.bf16.mxu0 0
  %130 = vmatmul.mubr.bf16.gmra.mrb[0].mxu0 %v47
  %v131 = vpop.f32.mrb[0].mxu0
  %v132 = vadd.f32 %v41, %v131
  %v133 = vpop.f32.mrb[0].mxu0
  %v134 = vpop.f32.mrb[0].mxu0
  %v135 = vadd.f32 %v41, %v134
  %v136 = vpop.f32.mrb[0].mxu0
  %137 = vdwg.mxu0
  %v138 = vld [vmem:[%s3] sm:$0xf]
  %v139 = vld [vmem:[%s3 + $0x4] sm:$0xf]
  %v140 = vunpack.c.l.bf16 %v138
  %v141 = vunpack.c.l.bf16 %v139
  %v142 = vadd.f32 %v132, %v140
  %v143 = vadd.f32 %v135, %v141
  %v144 = vpack.c.bf16 %v143, %v142
  %v146 = vunpack.c.l.b16 %v144
  %v147 = vunpack.c.h.b16 %v144
  %v148 = vpack.c.b16 %v146, %v146
  %v149 = vpack.c.b16 %v147, %v147
  %152 = vst [vmem:[%s4] sm:$0xf] %v148
  %153 = vst [vmem:[%s4 + $0x4] sm:$0xf] %v149
  // Predicated region
  $region18: #{_lambda_.48} parent=0 // pred_check
    _
  $region19: #{_lambda_.48} parent=0 // pred_check_branch
    %155 = sbr.rel (0) target = $region21
  $region20: #{_lambda_.48} parent=0 // pred_region
    _
  $region21: #{_lambda_.48} parent=0 // pred_fallthru
    _
  // Predicated region
  $region22: #{_lambda_.48} parent=0 // pred_check
    _
  $region23: #{_lambda_.48} parent=0 // pred_check_branch
    %157 = sbr.rel (0) target = $region25
  $region24: #{_lambda_.48} parent=0 // pred_region
    _
  $region25: #{_lambda_.48} parent=0 // pred_fallthru
    _

// kernel: _lambda_.47
$region0: #{_lambda_.47}
  #allocation0 [shape = 'u32[]', space=smem, size = 0x4, offset = 0x4, fixed_abs, tag = 'smem constant byte address 0x4 - core index']
  #allocation1 [shape = 'u32[144,128]{1,0:T(1,128)}', space=vmem, size = 0x12000, scoped, tag = 'internal scratch']
  #allocation2 [shape = 'f32[2,8,1]{2,1,0:T(8,128)}', space=vmem, size = 0x2000, scoped, tag = 'scratch operand']
  #allocation3 [shape = 'f32[2,8,1]{2,1,0:T(8,128)}', space=vmem, size = 0x2000, scoped, tag = 'scratch operand']
  #allocation4 [shape = 'f32[2,8,16]{2,1,0:T(8,128)}', space=vmem, size = 0x2000, scoped, tag = 'scratch operand']
  %s0 = inlined_call_operand.vmem [shape: bf16[2,8,32], index: 0, kind: input, shape index: {}]
  %s1 = inlined_call_operand.vmem [shape: bf16[2,8,32], index: 1, kind: input, shape index: {}]
  %s2 = inlined_call_operand.vmem [shape: bf16[2,8,32], index: 2, kind: input, shape index: {}]
  %s3 = inlined_call_operand.vmem [shape: bf16[2,8,32], index: 3, kind: output, shape index: {}]
  %s4 = sld [smem:[#allocation0]]
  $region53: #{_lambda_.47} parent=0
    _
  %s6 = ssub.s32 1, %s4
  %s7 = scalar_select 0, %s6, %s4
  loop: start=0, step=1, limit=4
  $region2: #{_lambda_.47} parent=0 // loop_pre_header
    _
  $region3: #{_lambda_.47} parent=0 // loop_header
    %s9 = sphi 0, %s13
    %p10 = scmp.ge.s32.totalorder %s9, 4
    %s16 = sphi 0, %s35
    %s17 = sphi 0, %s31
    %s18 = sphi 0, %s27
    %s19 = sphi 0, %s16
    %s20 = sphi 0, %s17
    %s21 = sphi 0, %s18
    %s22 = sphi 0, %s19
    %s23 = sphi 0, %s20
    %s24 = sphi 0, %s21
    %s40 = sphi 0, %s42
    %s43 = sphi 0, %s40
    %s44 = sphi 0, %s43
    %s60 = sphi 0, %s44
    %s68 = sphi 0, %s70
    %s71 = sphi 0, %s68
    %s72 = sphi 0, %s71
    %s88 = sphi 0, %s72
    %s96 = sphi 0, %s98
    %s99 = sphi 0, %s96
    %s100 = sphi 0, %s99
    %s116 = sphi 0, %s100
    %s124 = sphi 0, %s126
    %s127 = sphi 0, %s124
    %s128 = sphi 0, %s127
    %s144 = sphi 0, %s128
  $region4: #{_lambda_.47} parent=0 // loop_header_branch
    %12 = sbr.rel (%p10) target = $region8
  $region5: #{_lambda_.47} parent=0 // loop_body
    %s14 = ssub.s32 %s9, 1
    %s15 = ssub.s32 %s9, 2
    %s25 = sadd.s32 1, %s18
    %p26 = scmp.ge.s32.totalorder %s25, 1
    %s27 = scalar_select %p26, 0, %s25
    %s28 = sadd.s32 1, %s17
    %s29 = scalar_select %p26, %s28, %s17
    %p30 = scmp.ge.s32.totalorder %s29, 1
    %s31 = scalar_select %p30, 0, %s29
    %s32 = sadd.s32 1, %s16
    %s33 = scalar_select %p30, %s32, %s16
    %p34 = scmp.ge.s32.totalorder %s33, 2
    %s35 = scalar_select %p34, 0, %s33
    %s36 = ssub.s32 %s16, %s35
    %s37 = ssub.s32 %s17, %s31
    %s38 = sor.u32 %s36, %s37
    %p39 = scmp.eq.s32.totalorder %s38, 0
    %s41 = sadd.s32 %s40, 1
    %s42 = scalar_select %p39, %s40, %s41
    %p45 = pneg %p39
    %p46 = scmp.eq.s32.totalorder %s9, 1
    %p47 = por %p45, %p46
    %p48 = scmp.ne.s32.totalorder %s40, %s43
    %p49 = scmp.eq.s32.totalorder %s9, 0
    %p50 = por %p48, %p49
    %p51 = scmp.ne.s32.totalorder %s40, %s43
    %p52 = scmp.eq.s32.totalorder %s14, 1
    %p53 = por %p51, %p52
    %p54 = scmp.ne.s32.totalorder %s43, %s44
    %p55 = scmp.eq.s32.totalorder %s14, 0
    %p56 = por %p54, %p55
    %p57 = scmp.ne.s32.totalorder %s43, %s44
    %p58 = scmp.eq.s32.totalorder %s15, 1
    %p59 = por %p57, %p58
    %p61 = scmp.ne.s32.totalorder %s44, %s60
    %p62 = scmp.eq.s32.totalorder %s15, 0
    %p63 = por %p61, %p62
    %s64 = ssub.s32 %s16, %s35
    %s65 = ssub.s32 %s18, %s27
    %s66 = sor.u32 %s64, %s65
    %p67 = scmp.eq.s32.totalorder %s66, 0
    %s69 = sadd.s32 %s68, 1
    %s70 = scalar_select %p67, %s68, %s69
    %p73 = pneg %p67
    %p74 = scmp.eq.s32.totalorder %s9, 1
    %p75 = por %p73, %p74
    %p76 = scmp.ne.s32.totalorder %s68, %s71
    %p77 = scmp.eq.s32.totalorder %s9, 0
    %p78 = por %p76, %p77
    %p79 = scmp.ne.s32.totalorder %s68, %s71
    %p80 = scmp.eq.s32.totalorder %s14, 1
    %p81 = por %p79, %p80
    %p82 = scmp.ne.s32.totalorder %s71, %s72
    %p83 = scmp.eq.s32.totalorder %s14, 0
    %p84 = por %p82, %p83
    %p85 = scmp.ne.s32.totalorder %s71, %s72
    %p86 = scmp.eq.s32.totalorder %s15, 1
    %p87 = por %p85, %p86
    %p89 = scmp.ne.s32.totalorder %s72, %s88
    %p90 = scmp.eq.s32.totalorder %s15, 0
    %p91 = por %p89, %p90
    %s92 = ssub.s32 %s16, %s35
    %s93 = ssub.s32 %s18, %s27
    %s94 = sor.u32 %s92, %s93
    %p95 = scmp.eq.s32.totalorder %s94, 0
    %s97 = sadd.s32 %s96, 1
    %s98 = scalar_select %p95, %s96, %s97
    %p101 = pneg %p95
    %p102 = scmp.eq.s32.totalorder %s9, 1
    %p103 = por %p101, %p102
    %p104 = scmp.ne.s32.totalorder %s96, %s99
    %p105 = scmp.eq.s32.totalorder %s9, 0
    %p106 = por %p104, %p105
    %p107 = scmp.ne.s32.totalorder %s96, %s99
    %p108 = scmp.eq.s32.totalorder %s14, 1
    %p109 = por %p107, %p108
    %p110 = scmp.ne.s32.totalorder %s99, %s100
    %p111 = scmp.eq.s32.totalorder %s14, 0
    %p112 = por %p110, %p111
    %p113 = scmp.ne.s32.totalorder %s99, %s100
    %p114 = scmp.eq.s32.totalorder %s15, 1
    %p115 = por %p113, %p114
    %p117 = scmp.ne.s32.totalorder %s100, %s116
    %p118 = scmp.eq.s32.totalorder %s15, 0
    %p119 = por %p117, %p118
    %s120 = ssub.s32 %s16, %s35
    %s121 = ssub.s32 %s17, %s31
    %s122 = sor.u32 %s120, %s121
    %p123 = scmp.eq.s32.totalorder %s122, 0
    %s125 = sadd.s32 %s124, 1
    %s126 = scalar_select %p123, %s124, %s125
    %p129 = pneg %p123
    %p130 = scmp.eq.s32.totalorder %s9, 1
    %p131 = por %p129, %p130
    %p132 = scmp.ne.s32.totalorder %s124, %s127
    %p133 = scmp.eq.s32.totalorder %s9, 0
    %p134 = por %p132, %p133
    %p135 = scmp.ne.s32.totalorder %s124, %s127
    %p136 = scmp.eq.s32.totalorder %s14, 1
    %p137 = por %p135, %p136
    %p138 = scmp.ne.s32.totalorder %s127, %s128
    %p139 = scmp.eq.s32.totalorder %s14, 0
    %p140 = por %p138, %p139
    %p141 = scmp.ne.s32.totalorder %s127, %s128
    %p142 = scmp.eq.s32.totalorder %s15, 1
    %p143 = por %p141, %p142
    %p145 = scmp.ne.s32.totalorder %s128, %s144
    %p146 = scmp.eq.s32.totalorder %s15, 0
    %p147 = por %p145, %p146
    %p148 = scmp.le.s32.totalorder 1, %s9
    %p149 = scmp.lt.s32.totalorder %s9, 3
    %p150 = pnand %p148, %p149
    %p151 = pneg %p150
    // Predicated region
    $region9: #{_lambda_.47} parent=5 // pred_check
      _
    $region10: #{_lambda_.47} parent=5 // pred_check_branch
      %153 = sbr.rel (%p150) target = $region12
    $region11: #{_lambda_.47} parent=5 // pred_region
      %s154 = ssub.s32 %s9, 1
    $region12: #{_lambda_.47} parent=5 // pred_fallthru
      _
    %p155 = scmp.lt.s32.totalorder %s9, 2
    // Predicated region
    $region13: #{_lambda_.47} parent=5 // pred_check
      %p156 = pneg %p155
    $region14: #{_lambda_.47} parent=5 // pred_check_branch
      %158 = sbr.rel (%p156) target = $region16
    $region15: #{_lambda_.47} parent=5 // pred_region
      // Predicated region
      $region17: #{_lambda_.47} parent=15 // pred_check
        %p159 = pneg %p50
      $region18: #{_lambda_.47} parent=15 // pred_check_branch
        %161 = sbr.rel (%p159) target = $region20
      $region19: #{_lambda_.47} parent=15 // pred_region
        %p162 = scmp.lt.s32.totalorder %s16, 1
        %s163 = scalar_select %p162, %s16, 1
        %p164 = scmp.lt.s32.totalorder %s17, 0
        %s165 = scalar_select %p164, %s17, 0
        %s166 = sadd.s32 %s165, %s163
        %s167 = smul.addr %s166, 4
        %s168 = scalar_lea.vmem %s0, %s167
      $region20: #{_lambda_.47} parent=15 // pred_fallthru
        _
      // Predicated region
      $region21: #{_lambda_.47} parent=15 // pred_check
        %p169 = pneg %p78
      $region22: #{_lambda_.47} parent=15 // pred_check_branch
        %171 = sbr.rel (%p169) target = $region24
      $region23: #{_lambda_.47} parent=15 // pred_region
        %p172 = scmp.lt.s32.totalorder %s16, 1
        %s173 = scalar_select %p172, %s16, 1
        %p174 = scmp.lt.s32.totalorder %s18, 0
        %s175 = scalar_select %p174, %s18, 0
        %s176 = sadd.s32 %s175, %s173
        %s177 = smul.addr %s176, 4
        %s178 = scalar_lea.vmem %s1, %s177
      $region24: #{_lambda_.47} parent=15 // pred_fallthru
        _
      // Predicated region
      $region25: #{_lambda_.47} parent=15 // pred_check
        %p179 = pneg %p106
      $region26: #{_lambda_.47} parent=15 // pred_check_branch
        %181 = sbr.rel (%p179) target = $region28
      $region27: #{_lambda_.47} parent=15 // pred_region
        %p182 = scmp.lt.s32.totalorder %s16, 1
        %s183 = scalar_select %p182, %s16, 1
        %p184 = scmp.lt.s32.totalorder %s18, 0
        %s185 = scalar_select %p184, %s18, 0
        %s186 = sadd.s32 %s185, %s183
        %s187 = smul.addr %s186, 4
        %s188 = scalar_lea.vmem %s2, %s187
      $region28: #{_lambda_.47} parent=15 // pred_fallthru
        _
    $region16: #{_lambda_.47} parent=5 // pred_fallthru
      _
    %p189 = scmp.le.s32.totalorder 1, %s9
    %p190 = scmp.lt.s32.totalorder %s9, 3
    %p191 = pnand %p189, %p190
    %p192 = pneg %p191
    // Predicated region
    $region29: #{_lambda_.47} parent=5 // pred_check
      _
    $region30: #{_lambda_.47} parent=5 // pred_check_branch
      %194 = sbr.rel (%p191) target = $region32
    $region31: #{_lambda_.47} parent=5 // pred_region
      %s195 = ssub.s32 %s9, 1
      %p196 = scmp.lt.s32.totalorder %s19, 1
      %s197 = scalar_select %p196, %s19, 1
      %p198 = scmp.lt.s32.totalorder %s20, 0
      %s199 = scalar_select %p198, %s20, 0
      %s200 = sadd.s32 %s199, %s197
      %s201 = smul.addr %s200, 4
      %s202 = scalar_lea.vmem %s0, %s201
      %p203 = pneg %p56
      %p204 = pneg %p53
      %p205 = scmp.lt.s32.totalorder %s19, 1
      %s206 = scalar_select %p205, %s19, 1
      %p207 = scmp.lt.s32.totalorder %s21, 0
      %s208 = scalar_select %p207, %s21, 0
      %s209 = sadd.s32 %s208, %s206
      %s210 = smul.addr %s209, 4
      %s211 = scalar_lea.vmem %s1, %s210
      %p212 = pneg %p84
      %p213 = pneg %p81
      %p214 = scmp.lt.s32.totalorder %s19, 1
      %s215 = scalar_select %p214, %s19, 1
      %p216 = scmp.lt.s32.totalorder %s21, 0
      %s217 = scalar_select %p216, %s21, 0
      %s218 = sadd.s32 %s217, %s215
      %s219 = smul.addr %s218, 4
      %s220 = scalar_lea.vmem %s2, %s219
      %p221 = pneg %p112
      %p222 = pneg %p109
      %p223 = pneg %p140
      %p224 = pneg %p137
      %p225 = scmp.lt.s32.totalorder %s19, 1
      %s226 = scalar_select %p225, %s19, 1
      %p227 = scmp.lt.s32.totalorder %s20, 0
      %s228 = scalar_select %p227, %s20, 0
      %s229 = sadd.s32 %s228, %s226
      %s230 = smul.addr %s229, 4
      %s231 = scalar_lea.vmem %s3, %s230
      %p232 = scmp.lt.s32.totalorder %s19, 1
      %s233 = scalar_select %p232, %s19, 1
      %p234 = scmp.lt.s32.totalorder %s20, 0
      %s235 = scalar_select %p234, %s20, 0
      %s236 = sadd.s32 %s235, %s233
      %s237 = smul.addr %s236, 4
      %s238 = scalar_lea.vmem %s0, %s237
      %p239 = scmp.lt.s32.totalorder %s19, 1
      %s240 = scalar_select %p239, %s19, 1
      %p241 = scmp.lt.s32.totalorder %s21, 0
      %s242 = scalar_select %p241, %s21, 0
      %s243 = sadd.s32 %s242, %s240
      %s244 = smul.addr %s243, 4
      %s245 = scalar_lea.vmem %s1, %s244
      %p246 = scmp.lt.s32.totalorder %s19, 1
      %s247 = scalar_select %p246, %s19, 1
      %p248 = scmp.lt.s32.totalorder %s21, 0
      %s249 = scalar_select %p248, %s21, 0
      %s250 = sadd.s32 %s249, %s247
      %s251 = smul.addr %s250, 4
      %s252 = scalar_lea.vmem %s2, %s251
      %p253 = scmp.lt.s32.totalorder %s19, 1
      %s254 = scalar_select %p253, %s19, 1
      %p255 = scmp.lt.s32.totalorder %s20, 0
      %s256 = scalar_select %p255, %s20, 0
      %s257 = sadd.s32 %s256, %s254
      %s258 = smul.addr %s257, 4
      %s259 = scalar_lea.vmem %s3, %s258
      %p261 = scmp.eq.s32.totalorder %s21, 0
      // Predicated region
      $region33: #{_lambda_.47} parent=31 // pred_check
        %p262 = pneg %p261
      $region34: #{_lambda_.47} parent=31 // pred_check_branch
        %264 = sbr.rel (%p262) target = $region36
      $region35: #{_lambda_.47} parent=31 // pred_region
        %vm265 = vcmask 7168
        %266 = vst.msk [vmem:[#allocation2] sm:$0xff] %vm265, -inf
        %267 = vst.msk [vmem:[#allocation2 + $0x8] sm:$0xff] %vm265, -inf
        %268 = vst.msk [vmem:[#allocation3] sm:$0xff] %vm265, 0.0
        %269 = vst.msk [vmem:[#allocation3 + $0x8] sm:$0xff] %vm265, 0.0
        %vm270 = vcmask 130048
        %271 = vst.msk [vmem:[#allocation4] sm:$0xff] %vm270, 0.0
        %272 = vst.msk [vmem:[#allocation4 + $0x8] sm:$0xff] %vm270, 0.0
      $region36: #{_lambda_.47} parent=31 // pred_fallthru
        _
      %v273 = vld [vmem:[%s238] sm:$0xf]
      %v274 = vld [vmem:[%s245] sm:$0xf]
      %v275 = vld [vmem:[%s252] sm:$0xf]
      %vm276 = vcmask 130048
      %v278 = vsel %vm276, %v273, 0
      %v281 = vsel %vm276, %v274, 0
      %283 = vmatprep.subr.bf16.mxu0 0
      %284 = vmatpush1.bf16.xpose.msra.mxu0 %v281
      %285 = vmatprep.subr.bf16.mxu0 0
      %286 = vmatpush1.bf16.xpose.msra.mxu0 0
      %287 = vmatprep.subr.bf16.mxu0 0
      %288 = vmatpush1.bf16.xpose.msra.mxu0 0
      %289 = vmatprep.subr.bf16.mxu0 0
      %290 = vmatpush1.bf16.xpose.msra.mxu0 0
      %291 = vmatprep.subr.bf16.mxu0 0
      %292 = vmatpush1.bf16.xpose.msra.mxu0 0
      %293 = vmatprep.subr.bf16.mxu0 0
      %294 = vmatpush1.bf16.xpose.msra.mxu0 0
      %295 = vmatprep.subr.bf16.mxu0 0
      %296 = vmatpush1.bf16.xpose.msra.mxu0 0
      %297 = vmatprep.subr.bf16.mxu0 0
      %298 = vmatpush1.bf16.xpose.msra.mxu0 0
      %299 = vmatprep.subr.bf16.mxu0 0
      %300 = vmatpush1.bf16.xpose.msra.mxu0 0
      %301 = vmatprep.subr.bf16.mxu0 0
      %302 = vmatpush1.bf16.xpose.msra.mxu0 0
      %303 = vmatprep.subr.bf16.mxu0 0
      %304 = vmatpush1.bf16.xpose.msra.mxu0 0
      %305 = vmatprep.subr.bf16.mxu0 0
      %306 = vmatpush1.bf16.xpose.msra.mxu0 0
      %307 = vmatprep.subr.bf16.mxu0 0
      %308 = vmatpush1.bf16.xpose.msra.mxu0 0
      %309 = vmatprep.subr.bf16.mxu0 0
      %310 = vmatpush1.bf16.xpose.msra.mxu0 0
      %311 = vmatprep.subr.bf16.mxu0 0
      %312 = vmatpush1.bf16.xpose.msra.mxu0 0
      %313 = vmatprep.subr.bf16.mxu0 0
      %314 = vmatpush1.bf16.xpose.msra.mxu0 0
      %315 = vmatprep.mubr.bf16.mxu0 0
      %316 = vmatmul.mubr.bf16.gmra.mrb[0].mxu0 %v278
      %v317 = vpop.f32.mrb[0].mxu0
      %v318 = vadd.f32 0.0, %v317
      %v319 = vpop.f32.mrb[0].mxu0
      %v320 = vpop.f32.mrb[0].mxu0
      %v321 = vpop.f32.mrb[0].mxu0
      %322 = vdwg.mxu0
      %v323 = vmul.f32 %v318, 0.25
      %v324 = vld [vmem:[#allocation2] sm:$0xff]
      %vm325 = vcmask 64512
      %v326 = vsel %vm325, %v323, -inf
      %327 = vmax.xlane.f32.xlu0 %v326
      %v328 = vpop.xlane.xlu0 %327
      %v329 = vmax.f32 %v324, %v328
      %331 = vset.pattern.permute.xlu0 0
      %332 = vperm.xlu0 %331, %v329
      %v333 = vpop.permute.xlu0 %332
      %v335 = vsub.f32 %v323, %v333
      %v336 = vmul.f32 %v335, 1.442695
      %v337 = vpow.pop %v336
      %v338 = vsub.f32 %v324, %v329
      %v339 = vmul.f32 %v338, 1.442695
      %v340 = vpow.pop %v339
      %v341 = vld [vmem:[#allocation3] sm:$0xff]
      %v342 = vmul.f32 %v340, %v341
      %v343 = vsel %vm325, %v337, 0.0
      %344 = vadd.xlane.f32.xlu0 %v343
      %v345 = vpop.xlane.xlu0 %344
      %v346 = vadd.f32 %v342, %v345
      %vm347 = vcmask 7168
      %348 = vst.msk [vmem:[#allocation3] sm:$0xff] %vm347, %v346
      %v349 = vld [vmem:[#allocation4] sm:$0xff]
      %351 = vset.pattern.permute.xlu0 0
      %352 = vperm.xlu0 %351, %v340
      %v353 = vpop.permute.xlu0 %352
      %v355 = vmul.f32 %v353, %v349
      %v356 = vpack.c.bf16 %v337, %v337
      %v358 = vsel %vm325, %v356, 0
      %vm360 = vcmask 1043456
      %v362 = vsel %vm360, %v275, 0
      %364 = vmatprep.subr.bf16.mxu0 0
      %365 = vmatpush1.bf16.msra.mxu0 %v362
      %366 = vmatprep.subr.bf16.mxu0 0
      %367 = vmatpush1.bf16.msra.mxu0 0
      %368 = vmatprep.subr.bf16.mxu0 0
      %369 = vmatpush1.bf16.msra.mxu0 0
      %370 = vmatprep.subr.bf16.mxu0 0
      %371 = vmatpush1.bf16.msra.mxu0 0
      %372 = vmatprep.subr.bf16.mxu0 0
      %373 = vmatpush1.bf16.msra.mxu0 0
      %374 = vmatprep.subr.bf16.mxu0 0
      %375 = vmatpush1.bf16.msra.mxu0 0
      %376 = vmatprep.subr.bf16.mxu0 0
      %377 = vmatpush1.bf16.msra.mxu0 0
      %378 = vmatprep.subr.bf16.mxu0 0
      %379 = vmatpush1.bf16.msra.mxu0 0
      %380 = vmatprep.subr.bf16.mxu0 0
      %381 = vmatpush1.bf16.msra.mxu0 0
      %382 = vmatprep.subr.bf16.mxu0 0
      %383 = vmatpush1.bf16.msra.mxu0 0
      %384 = vmatprep.subr.bf16.mxu0 0
      %385 = vmatpush1.bf16.msra.mxu0 0
      %386 = vmatprep.subr.bf16.mxu0 0
      %387 = vmatpush1.bf16.msra.mxu0 0
      %388 = vmatprep.subr.bf16.mxu0 0
      %389 = vmatpush1.bf16.msra.mxu0 0
      %390 = vmatprep.subr.bf16.mxu0 0
      %391 = vmatpush1.bf16.msra.mxu0 0
      %392 = vmatprep.subr.bf16.mxu0 0
      %393 = vmatpush1.bf16.msra.mxu0 0
      %394 = vmatprep.subr.bf16.mxu0 0
      %395 = vmatpush1.bf16.msra.mxu0 0
      %396 = vmatprep.mubr.bf16.mxu0 0
      %397 = vmatmul.mubr.bf16.gmra.mrb[0].mxu0 %v358
      %v398 = vpop.f32.mrb[0].mxu0
      %v399 = vadd.f32 0.0, %v398
      %v400 = vpop.f32.mrb[0].mxu0
      %v401 = vpop.f32.mrb[0].mxu0
      %v402 = vpop.f32.mrb[0].mxu0
      %403 = vdwg.mxu0
      %v404 = vadd.f32 %v355, %v399
      %405 = vst.msk [vmem:[#allocation4] sm:$0xff] %vm276, %v404
      %406 = vst.msk [vmem:[#allocation2] sm:$0xff] %vm347, %v329
      %v408 = vunpack.c.l.b16 %v273
      %v409 = vpack.c.b16 %v408, %v408
      %410 = vrot.lane.b32.xlu0 %v409, 112
      %v411 = vpop.permute.xlu0 %410
      %v413 = vunpack.c.l.b16 %v274
      %v414 = vpack.c.b16 %v413, %v413
      %415 = vrot.lane.b32.xlu0 %v414, 112
      %v416 = vpop.permute.xlu0 %415
      %v418 = vsel %vm276, %v411, 0
      %v421 = vsel %vm276, %v416, 0
      %423 = vmatprep.subr.bf16.mxu0 0
      %424 = vmatpush1.bf16.xpose.msra.mxu0 %v421
      %425 = vmatprep.subr.bf16.mxu0 0
      %426 = vmatpush1.bf16.xpose.msra.mxu0 0
      %427 = vmatprep.subr.bf16.mxu0 0
      %428 = vmatpush1.bf16.xpose.msra.mxu0 0
      %429 = vmatprep.subr.bf16.mxu0 0
      %430 = vmatpush1.bf16.xpose.msra.mxu0 0
      %431 = vmatprep.subr.bf16.mxu0 0
      %432 = vmatpush1.bf16.xpose.msra.mxu0 0
      %433 = vmatprep.subr.bf16.mxu0 0
      %434 = vmatpush1.bf16.xpose.msra.mxu0 0
      %435 = vmatprep.subr.bf16.mxu0 0
      %436 = vmatpush1.bf16.xpose.msra.mxu0 0
      %437 = vmatprep.subr.bf16.mxu0 0
      %438 = vmatpush1.bf16.xpose.msra.mxu0 0
      %439 = vmatprep.subr.bf16.mxu0 0
      %440 = vmatpush1.bf16.xpose.msra.mxu0 0
      %441 = vmatprep.subr.bf16.mxu0 0
      %442 = vmatpush1.bf16.xpose.msra.mxu0 0
      %443 = vmatprep.subr.bf16.mxu0 0
      %444 = vmatpush1.bf16.xpose.msra.mxu0 0
      %445 = vmatprep.subr.bf16.mxu0 0
      %446 = vmatpush1.bf16.xpose.msra.mxu0 0
      %447 = vmatprep.subr.bf16.mxu0 0
      %448 = vmatpush1.bf16.xpose.msra.mxu0 0
      %449 = vmatprep.subr.bf16.mxu0 0
      %450 = vmatpush1.bf16.xpose.msra.mxu0 0
      %451 = vmatprep.subr.bf16.mxu0 0
      %452 = vmatpush1.bf16.xpose.msra.mxu0 0
      %453 = vmatprep.subr.bf16.mxu0 0
      %454 = vmatpush1.bf16.xpose.msra.mxu0 0
      %455 = vmatprep.mubr.bf16.mxu0 0
      %456 = vmatmul.mubr.bf16.gmra.mrb[0].mxu0 %v418
      %v457 = vpop.f32.mrb[0].mxu0
      %v458 = vadd.f32 0.0, %v457
      %v459 = vpop.f32.mrb[0].mxu0
      %v460 = vpop.f32.mrb[0].mxu0
      %v461 = vpop.f32.mrb[0].mxu0
      %462 = vdwg.mxu0
      %v463 = vmul.f32 %v458, 0.25
      %s464 = scalar_lea.vmem [#allocation2], 8
      %v465 = vld [vmem:[%s464] sm:$0xff]
      %v466 = vsel %vm325, %v463, -inf
      %467 = vmax.xlane.f32.xlu0 %v466
      %v468 = vpop.xlane.xlu0 %467
      %v469 = vmax.f32 %v465, %v468
      %471 = vset.pattern.permute.xlu0 0
      %472 = vperm.xlu0 %471, %v469
      %v473 = vpop.permute.xlu0 %472
      %v475 = vsub.f32 %v463, %v473
      %v476 = vmul.f32 %v475, 1.442695
      %v477 = vpow.pop %v476
      %v478 = vsub.f32 %v465, %v469
      %v479 = vmul.f32 %v478, 1.442695
      %v480 = vpow.pop %v479
      %s481 = scalar_lea.vmem [#allocation3], 8
      %v482 = vld [vmem:[%s481] sm:$0xff]
      %v483 = vmul.f32 %v480, %v482
      %v484 = vsel %vm325, %v477, 0.0
      %485 = vadd.xlane.f32.xlu0 %v484
      %v486 = vpop.xlane.xlu0 %485
      %v487 = vadd.f32 %v483, %v486
      %488 = vst.msk [vmem:[%s481] sm:$0xff] %vm347, %v487
      %s489 = scalar_lea.vmem [#allocation4], 8
      %v490 = vld [vmem:[%s489] sm:$0xff]
      %492 = vset.pattern.permute.xlu0 0
      %493 = vperm.xlu0 %492, %v480
      %v494 = vpop.permute.xlu0 %493
      %v496 = vmul.f32 %v494, %v490
      %v497 = vpack.c.bf16 %v477, %v477
      %v499 = vunpack.c.l.b16 %v275
      %v500 = vpack.c.b16 %v499, %v499
      %501 = vrot.lane.b32.xlu0 %v500, 112
      %v502 = vpop.permute.xlu0 %501
      %v504 = vsel %vm325, %v497, 0
      %v507 = vsel %vm360, %v502, 0
      %509 = vmatprep.subr.bf16.mxu0 0
      %510 = vmatpush1.bf16.msra.mxu0 %v507
      %511 = vmatprep.subr.bf16.mxu0 0
      %512 = vmatpush1.bf16.msra.mxu0 0
      %513 = vmatprep.subr.bf16.mxu0 0
      %514 = vmatpush1.bf16.msra.mxu0 0
      %515 = vmatprep.subr.bf16.mxu0 0
      %516 = vmatpush1.bf16.msra.mxu0 0
      %517 = vmatprep.subr.bf16.mxu0 0
      %518 = vmatpush1.bf16.msra.mxu0 0
      %519 = vmatprep.subr.bf16.mxu0 0
      %520 = vmatpush1.bf16.msra.mxu0 0
      %521 = vmatprep.subr.bf16.mxu0 0
      %522 = vmatpush1.bf16.msra.mxu0 0
      %523 = vmatprep.subr.bf16.mxu0 0
      %524 = vmatpush1.bf16.msra.mxu0 0
      %525 = vmatprep.subr.bf16.mxu0 0
      %526 = vmatpush1.bf16.msra.mxu0 0
      %527 = vmatprep.subr.bf16.mxu0 0
      %528 = vmatpush1.bf16.msra.mxu0 0
      %529 = vmatprep.subr.bf16.mxu0 0
      %530 = vmatpush1.bf16.msra.mxu0 0
      %531 = vmatprep.subr.bf16.mxu0 0
      %532 = vmatpush1.bf16.msra.mxu0 0
      %533 = vmatprep.subr.bf16.mxu0 0
      %534 = vmatpush1.bf16.msra.mxu0 0
      %535 = vmatprep.subr.bf16.mxu0 0
      %536 = vmatpush1.bf16.msra.mxu0 0
      %537 = vmatprep.subr.bf16.mxu0 0
      %538 = vmatpush1.bf16.msra.mxu0 0
      %539 = vmatprep.subr.bf16.mxu0 0
      %540 = vmatpush1.bf16.msra.mxu0 0
      %541 = vmatprep.mubr.bf16.mxu0 0
      %542 = vmatmul.mubr.bf16.gmra.mrb[0].mxu0 %v504
      %v543 = vpop.f32.mrb[0].mxu0
      %v544 = vadd.f32 0.0, %v543
      %v545 = vpop.f32.mrb[0].mxu0
      %v546 = vpop.f32.mrb[0].mxu0
      %v547 = vpop.f32.mrb[0].mxu0
      %548 = vdwg.mxu0
      %v549 = vadd.f32 %v496, %v544
      %550 = vst.msk [vmem:[%s489] sm:$0xff] %vm276, %v549
      %551 = vst.msk [vmem:[%s464] sm:$0xff] %vm347, %v469
      // Predicated region
      $region37: #{_lambda_.47} parent=31 // pred_check
        %p552 = pneg %p261
      $region38: #{_lambda_.47} parent=31 // pred_check_branch
        %554 = sbr.rel (%p552) target = $region40
      $region39: #{_lambda_.47} parent=31 // pred_region
        %v555 = vld [vmem:[#allocation4] sm:$0xff]
        %v556 = vld [vmem:[#allocation3] sm:$0xff]
        %558 = vset.pattern.permute.xlu0 0
        %559 = vperm.xlu0 %558, %v556
        %v560 = vpop.permute.xlu0 %559
        %v562 = vrcp.pop %v560
        %v563 = vmul.f32 %v555, %v562
        %v564 = vld [vmem:[%s489] sm:$0xff]
        %v565 = vld [vmem:[%s481] sm:$0xff]
        %567 = vset.pattern.permute.xlu0 0
        %568 = vperm.xlu0 %567, %v565
        %v569 = vpop.permute.xlu0 %568
        %v571 = vrcp.pop %v569
        %v572 = vmul.f32 %v564, %v571
        %574 = vrot.lane.b32.xlu0 %v572, 16
        %v575 = vpop.permute.xlu0 %574
        %v577 = vsel %vm276, %v563, %v575
        %v578 = vpack.c.bf16 %v577, %v577
        %vm579 = vcmask 257024
        %580 = vst.msk [vmem:[%s259] sm:$0xf] %vm579, %v578
      $region40: #{_lambda_.47} parent=31 // pred_fallthru
        _
      %p581 = scmp.lt.s32.totalorder %s19, 1
      %s582 = scalar_select %p581, %s19, 1
      %p583 = scmp.lt.s32.totalorder %s20, 0
      %s584 = scalar_select %p583, %s20, 0
      %s585 = sadd.s32 %s584, %s582
      %s586 = smul.addr %s585, 4
      %s587 = scalar_lea.vmem %s3, %s586
      // Predicated region
      $region41: #{_lambda_.47} parent=31 // pred_check
        %p588 = pneg %p137
      $region42: #{_lambda_.47} parent=31 // pred_check_branch
        %590 = sbr.rel (%p588) target = $region44
      $region43: #{_lambda_.47} parent=31 // pred_region
        _
      $region44: #{_lambda_.47} parent=31 // pred_fallthru
        _
    $region32: #{_lambda_.47} parent=5 // pred_fallthru
      _
    %p591 = scmp.le.s32.totalorder 2, %s9
    // Predicated region
    $region45: #{_lambda_.47} parent=5 // pred_check
      %p592 = pneg %p591
    $region46: #{_lambda_.47} parent=5 // pred_check_branch
      %594 = sbr.rel (%p592) target = $region48
    $region47: #{_lambda_.47} parent=5 // pred_region
      %s595 = ssub.s32 %s9, 2
      // Predicated region
      $region49: #{_lambda_.47} parent=47 // pred_check
        %p596 = pneg %p143
      $region50: #{_lambda_.47} parent=47 // pred_check_branch
        %598 = sbr.rel (%p596) target = $region52
      $region51: #{_lambda_.47} parent=47 // pred_region
        %p599 = scmp.lt.s32.totalorder %s22, 1
        %s600 = scalar_select %p599, %s22, 1
        %p601 = scmp.lt.s32.totalorder %s23, 0
        %s602 = scalar_select %p601, %s23, 0
        %s603 = sadd.s32 %s602, %s600
        %s604 = smul.addr %s603, 4
        %s605 = scalar_lea.vmem %s3, %s604
      $region52: #{_lambda_.47} parent=47 // pred_fallthru
        _
    $region48: #{_lambda_.47} parent=5 // pred_fallthru
      _
  $region6: #{_lambda_.47} parent=0 // loop_footer
    %s13 = sadd.s32 1, %s9
  $region7: #{_lambda_.47} parent=0 // loop_footer_branch
    %8 = sbr.rel target = $region3
  $region8: #{_lambda_.47} parent=0 // loop_exit
    _

// kernel: _lambda_.85
$region0: #{_lambda_.85}
  #allocation0 [shape = 'u32[]', space=smem, size = 0x4, offset = 0x4, fixed_abs, tag = 'smem constant byte address 0x4 - core index']
  #allocation1 [shape = 'u32[144,128]{1,0:T(1,128)}', space=vmem, size = 0x12000, scoped, tag = 'internal scratch']
  %s0 = inlined_call_operand.vmem [shape: bf16[16,128], index: 0, kind: input, shape index: {}]
  %s1 = inlined_call_operand.vmem [shape: bf16[128,128], index: 1, kind: input, shape index: {}]
  %s2 = inlined_call_operand.vmem [shape: f32[16,128], index: 2, kind: output, shape index: {}]
  %s3 = sld [smem:[#allocation0]]
  $region18: #{_lambda_.85} parent=0
    _
  %s5 = ssub.s32 1, %s3
  %s6 = scalar_select 0, %s5, %s3
  // Predicated region
  $region2: #{_lambda_.85} parent=0 // pred_check
    _
  $region3: #{_lambda_.85} parent=0 // pred_check_branch
    %8 = sbr.rel (0) target = $region5
  $region4: #{_lambda_.85} parent=0 // pred_region
    _
  $region5: #{_lambda_.85} parent=0 // pred_fallthru
    _
  // Predicated region
  $region6: #{_lambda_.85} parent=0 // pred_check
    _
  $region7: #{_lambda_.85} parent=0 // pred_check_branch
    %10 = sbr.rel (0) target = $region9
  $region8: #{_lambda_.85} parent=0 // pred_region
    _
  $region9: #{_lambda_.85} parent=0 // pred_fallthru
    _
  %v12 = vld [vmem:[%s0] sm:$0xf]
  %v13 = vld [vmem:[%s0 + $0x4] sm:$0xf]
  %v14 = vld [vmem:[%s1] sm:$0xf]
  %v15 = vld [vmem:[%s1 + $0x4] sm:$0xf]
  %v16 = vld [vmem:[%s1 + $0x8] sm:$0xf]
  %v17 = vld [vmem:[%s1 + $0xc] sm:$0xf]
  %v18 = vld [vmem:[%s1 + $0x10] sm:$0xf]
  %v19 = vld [vmem:[%s1 + $0x14] sm:$0xf]
  %v20 = vld [vmem:[%s1 + $0x18] sm:$0xf]
  %v21 = vld [vmem:[%s1 + $0x1c] sm:$0xf]
  %v22 = vld [vmem:[%s1 + $0x20] sm:$0xf]
  %v23 = vld [vmem:[%s1 + $0x24] sm:$0xf]
  %v24 = vld [vmem:[%s1 + $0x28] sm:$0xf]
  %v25 = vld [vmem:[%s1 + $0x2c] sm:$0xf]
  %v26 = vld [vmem:[%s1 + $0x30] sm:$0xf]
  %v27 = vld [vmem:[%s1 + $0x34] sm:$0xf]
  %v28 = vld [vmem:[%s1 + $0x38] sm:$0xf]
  %v29 = vld [vmem:[%s1 + $0x3c] sm:$0xf]
  %v32 = vunpack.c.l.b16 %v12
  %v33 = vunpack.c.l.b16 %v13
  %v34 = vpack.c.b16 %v33, %v32
  %v52 = vunpack.c.l.b16 %v14
  %v53 = vunpack.c.l.b16 %v15
  %v54 = vunpack.c.l.b16 %v16
  %v55 = vunpack.c.l.b16 %v17
  %v56 = vunpack.c.l.b16 %v18
  %v57 = vunpack.c.l.b16 %v19
  %v58 = vunpack.c.l.b16 %v20
  %v59 = vunpack.c.l.b16 %v21
  %v60 = vunpack.c.l.b16 %v22
  %v61 = vunpack.c.l.b16 %v23
  %v62 = vunpack.c.l.b16 %v24
  %v63 = vunpack.c.l.b16 %v25
  %v64 = vunpack.c.l.b16 %v26
  %v65 = vunpack.c.l.b16 %v27
  %v66 = vunpack.c.l.b16 %v28
  %v67 = vunpack.c.l.b16 %v29
  %v68 = vpack.c.b16 %v53, %v52
  %v69 = vpack.c.b16 %v55, %v54
  %v70 = vpack.c.b16 %v57, %v56
  %v71 = vpack.c.b16 %v59, %v58
  %v72 = vpack.c.b16 %v61, %v60
  %v73 = vpack.c.b16 %v63, %v62
  %v74 = vpack.c.b16 %v65, %v64
  %v75 = vpack.c.b16 %v67, %v66
  %84 = vmatprep.subr.bf16.mxu0 0
  %85 = vmatpush1.bf16.msra.mxu0 %v68
  %86 = vmatprep.subr.bf16.mxu0 0
  %87 = vmatpush1.bf16.msra.mxu0 %v69
  %88 = vmatprep.subr.bf16.mxu0 0
  %89 = vmatpush1.bf16.msra.mxu0 %v70
  %90 = vmatprep.subr.bf16.mxu0 0
  %91 = vmatpush1.bf16.msra.mxu0 %v71
  %92 = vmatprep.subr.bf16.mxu0 0
  %93 = vmatpush1.bf16.msra.mxu0 %v72
  %94 = vmatprep.subr.bf16.mxu0 0
  %95 = vmatpush1.bf16.msra.mxu0 %v73
  %96 = vmatprep.subr.bf16.mxu0 0
  %97 = vmatpush1.bf16.msra.mxu0 %v74
  %98 = vmatprep.subr.bf16.mxu0 0
  %99 = vmatpush1.bf16.msra.mxu0 %v75
  %100 = vmatprep.subr.bf16.mxu0 0
  %101 = vmatpush1.bf16.msra.mxu0 0
  %102 = vmatprep.subr.bf16.mxu0 0
  %103 = vmatpush1.bf16.msra.mxu0 0
  %104 = vmatprep.subr.bf16.mxu0 0
  %105 = vmatpush1.bf16.msra.mxu0 0
  %106 = vmatprep.subr.bf16.mxu0 0
  %107 = vmatpush1.bf16.msra.mxu0 0
  %108 = vmatprep.subr.bf16.mxu0 0
  %109 = vmatpush1.bf16.msra.mxu0 0
  %110 = vmatprep.subr.bf16.mxu0 0
  %111 = vmatpush1.bf16.msra.mxu0 0
  %112 = vmatprep.subr.bf16.mxu0 0
  %113 = vmatpush1.bf16.msra.mxu0 0
  %114 = vmatprep.subr.bf16.mxu0 0
  %115 = vmatpush1.bf16.msra.mxu0 0
  %116 = vmatprep.mubr.bf16.mxu0 0
  %117 = vmatmul.mubr.bf16.gmra.mrb[0].mxu0 %v34
  %v118 = vpop.f32.mrb[0].mxu0
  %v119 = vadd.f32 0.0, %v118
  %v120 = vpop.f32.mrb[0].mxu0
  %v121 = vpop.f32.mrb[0].mxu0
  %v122 = vadd.f32 0.0, %v121
  %v123 = vpop.f32.mrb[0].mxu0
  %124 = vdwg.mxu0
  %125 = vst [vmem:[%s2] sm:$0xff] %v119
  %126 = vst [vmem:[%s2 + $0x8] sm:$0xff] %v122
  // Predicated region
  $region10: #{_lambda_.85} parent=0 // pred_check
    _
  $region11: #{_lambda_.85} parent=0 // pred_check_branch
    %128 = sbr.rel (0) target = $region13
  $region12: #{_lambda_.85} parent=0 // pred_region
    _
  $region13: #{_lambda_.85} parent=0 // pred_fallthru
    _
  // Predicated region
  $region14: #{_lambda_.85} parent=0 // pred_check
    _
  $region15: #{_lambda_.85} parent=0 // pred_check_branch
    %130 = sbr.rel (0) target = $region17
  $region16: #{_lambda_.85} parent=0 // pred_region
    _
  $region17: #{_lambda_.85} parent=0 // pred_fallthru
    _

// kernel: _lambda_.62
$region0: #{_lambda_.62}
  #allocation0 [shape = 'u32[]', space=smem, size = 0x4, offset = 0x4, fixed_abs, tag = 'smem constant byte address 0x4 - core index']
  #allocation1 [shape = 'u32[144,128]{1,0:T(1,128)}', space=vmem, size = 0x12000, scoped, tag = 'internal scratch']
  #allocation2 [shape = 'f32[2,8,1]{2,1,0:T(8,128)}', space=vmem, size = 0x2000, scoped, tag = 'scratch operand']
  #allocation3 [shape = 'f32[2,8,1]{2,1,0:T(8,128)}', space=vmem, size = 0x2000, scoped, tag = 'scratch operand']
  #allocation4 [shape = 'f32[2,8,16]{2,1,0:T(8,128)}', space=vmem, size = 0x2000, scoped, tag = 'scratch operand']
  %s0 = inlined_call_operand.vmem [shape: bf16[2,8,32], index: 0, kind: input, shape index: {}]
  %s1 = inlined_call_operand.vmem [shape: bf16[2,8,32], index: 1, kind: input, shape index: {}]
  %s2 = inlined_call_operand.vmem [shape: bf16[2,8,32], index: 2, kind: input, shape index: {}]
  %s3 = inlined_call_operand.vmem [shape: bf16[2,8,32], index: 3, kind: output, shape index: {}]
  %s4 = sld [smem:[#allocation0]]
  $region57: #{_lambda_.62} parent=0
    _
  %s6 = ssub.s32 1, %s4
  %s7 = scalar_select 0, %s6, %s4
  loop: start=0, step=1, limit=4
  $region2: #{_lambda_.62} parent=0 // loop_pre_header
    _
  $region3: #{_lambda_.62} parent=0 // loop_header
    %s9 = sphi 0, %s13
    %p10 = scmp.ge.s32.totalorder %s9, 4
    %s16 = sphi 0, %s35
    %s17 = sphi 0, %s31
    %s18 = sphi 0, %s27
    %s19 = sphi 0, %s16
    %s20 = sphi 0, %s17
    %s21 = sphi 0, %s18
    %s22 = sphi 0, %s19
    %s23 = sphi 0, %s20
    %s24 = sphi 0, %s21
    %s40 = sphi 0, %s42
    %s43 = sphi 0, %s40
    %s44 = sphi 0, %s43
    %s60 = sphi 0, %s44
    %s68 = sphi 0, %s70
    %s71 = sphi 0, %s68
    %s72 = sphi 0, %s71
    %s88 = sphi 0, %s72
    %s96 = sphi 0, %s98
    %s99 = sphi 0, %s96
    %s100 = sphi 0, %s99
    %s116 = sphi 0, %s100
    %s124 = sphi 0, %s126
    %s127 = sphi 0, %s124
    %s128 = sphi 0, %s127
    %s144 = sphi 0, %s128
  $region4: #{_lambda_.62} parent=0 // loop_header_branch
    %12 = sbr.rel (%p10) target = $region8
  $region5: #{_lambda_.62} parent=0 // loop_body
    %s14 = ssub.s32 %s9, 1
    %s15 = ssub.s32 %s9, 2
    %s25 = sadd.s32 1, %s18
    %p26 = scmp.ge.s32.totalorder %s25, 1
    %s27 = scalar_select %p26, 0, %s25
    %s28 = sadd.s32 1, %s17
    %s29 = scalar_select %p26, %s28, %s17
    %p30 = scmp.ge.s32.totalorder %s29, 1
    %s31 = scalar_select %p30, 0, %s29
    %s32 = sadd.s32 1, %s16
    %s33 = scalar_select %p30, %s32, %s16
    %p34 = scmp.ge.s32.totalorder %s33, 2
    %s35 = scalar_select %p34, 0, %s33
    %s36 = ssub.s32 %s16, %s35
    %s37 = ssub.s32 %s17, %s31
    %s38 = sor.u32 %s36, %s37
    %p39 = scmp.eq.s32.totalorder %s38, 0
    %s41 = sadd.s32 %s40, 1
    %s42 = scalar_select %p39, %s40, %s41
    %p45 = pneg %p39
    %p46 = scmp.eq.s32.totalorder %s9, 1
    %p47 = por %p45, %p46
    %p48 = scmp.ne.s32.totalorder %s40, %s43
    %p49 = scmp.eq.s32.totalorder %s9, 0
    %p50 = por %p48, %p49
    %p51 = scmp.ne.s32.totalorder %s40, %s43
    %p52 = scmp.eq.s32.totalorder %s14, 1
    %p53 = por %p51, %p52
    %p54 = scmp.ne.s32.totalorder %s43, %s44
    %p55 = scmp.eq.s32.totalorder %s14, 0
    %p56 = por %p54, %p55
    %p57 = scmp.ne.s32.totalorder %s43, %s44
    %p58 = scmp.eq.s32.totalorder %s15, 1
    %p59 = por %p57, %p58
    %p61 = scmp.ne.s32.totalorder %s44, %s60
    %p62 = scmp.eq.s32.totalorder %s15, 0
    %p63 = por %p61, %p62
    %s64 = ssub.s32 %s16, %s35
    %s65 = ssub.s32 %s18, %s27
    %s66 = sor.u32 %s64, %s65
    %p67 = scmp.eq.s32.totalorder %s66, 0
    %s69 = sadd.s32 %s68, 1
    %s70 = scalar_select %p67, %s68, %s69
    %p73 = pneg %p67
    %p74 = scmp.eq.s32.totalorder %s9, 1
    %p75 = por %p73, %p74
    %p76 = scmp.ne.s32.totalorder %s68, %s71
    %p77 = scmp.eq.s32.totalorder %s9, 0
    %p78 = por %p76, %p77
    %p79 = scmp.ne.s32.totalorder %s68, %s71
    %p80 = scmp.eq.s32.totalorder %s14, 1
    %p81 = por %p79, %p80
    %p82 = scmp.ne.s32.totalorder %s71, %s72
    %p83 = scmp.eq.s32.totalorder %s14, 0
    %p84 = por %p82, %p83
    %p85 = scmp.ne.s32.totalorder %s71, %s72
    %p86 = scmp.eq.s32.totalorder %s15, 1
    %p87 = por %p85, %p86
    %p89 = scmp.ne.s32.totalorder %s72, %s88
    %p90 = scmp.eq.s32.totalorder %s15, 0
    %p91 = por %p89, %p90
    %s92 = ssub.s32 %s16, %s35
    %s93 = ssub.s32 %s18, %s27
    %s94 = sor.u32 %s92, %s93
    %p95 = scmp.eq.s32.totalorder %s94, 0
    %s97 = sadd.s32 %s96, 1
    %s98 = scalar_select %p95, %s96, %s97
    %p101 = pneg %p95
    %p102 = scmp.eq.s32.totalorder %s9, 1
    %p103 = por %p101, %p102
    %p104 = scmp.ne.s32.totalorder %s96, %s99
    %p105 = scmp.eq.s32.totalorder %s9, 0
    %p106 = por %p104, %p105
    %p107 = scmp.ne.s32.totalorder %s96, %s99
    %p108 = scmp.eq.s32.totalorder %s14, 1
    %p109 = por %p107, %p108
    %p110 = scmp.ne.s32.totalorder %s99, %s100
    %p111 = scmp.eq.s32.totalorder %s14, 0
    %p112 = por %p110, %p111
    %p113 = scmp.ne.s32.totalorder %s99, %s100
    %p114 = scmp.eq.s32.totalorder %s15, 1
    %p115 = por %p113, %p114
    %p117 = scmp.ne.s32.totalorder %s100, %s116
    %p118 = scmp.eq.s32.totalorder %s15, 0
    %p119 = por %p117, %p118
    %s120 = ssub.s32 %s16, %s35
    %s121 = ssub.s32 %s17, %s31
    %s122 = sor.u32 %s120, %s121
    %p123 = scmp.eq.s32.totalorder %s122, 0
    %s125 = sadd.s32 %s124, 1
    %s126 = scalar_select %p123, %s124, %s125
    %p129 = pneg %p123
    %p130 = scmp.eq.s32.totalorder %s9, 1
    %p131 = por %p129, %p130
    %p132 = scmp.ne.s32.totalorder %s124, %s127
    %p133 = scmp.eq.s32.totalorder %s9, 0
    %p134 = por %p132, %p133
    %p135 = scmp.ne.s32.totalorder %s124, %s127
    %p136 = scmp.eq.s32.totalorder %s14, 1
    %p137 = por %p135, %p136
    %p138 = scmp.ne.s32.totalorder %s127, %s128
    %p139 = scmp.eq.s32.totalorder %s14, 0
    %p140 = por %p138, %p139
    %p141 = scmp.ne.s32.totalorder %s127, %s128
    %p142 = scmp.eq.s32.totalorder %s15, 1
    %p143 = por %p141, %p142
    %p145 = scmp.ne.s32.totalorder %s128, %s144
    %p146 = scmp.eq.s32.totalorder %s15, 0
    %p147 = por %p145, %p146
    %p148 = scmp.le.s32.totalorder 1, %s9
    %p149 = scmp.lt.s32.totalorder %s9, 3
    %p150 = pnand %p148, %p149
    %p151 = pneg %p150
    // Predicated region
    $region9: #{_lambda_.62} parent=5 // pred_check
      _
    $region10: #{_lambda_.62} parent=5 // pred_check_branch
      %153 = sbr.rel (%p150) target = $region12
    $region11: #{_lambda_.62} parent=5 // pred_region
      %s154 = ssub.s32 %s9, 1
    $region12: #{_lambda_.62} parent=5 // pred_fallthru
      _
    %p155 = scmp.lt.s32.totalorder %s9, 2
    // Predicated region
    $region13: #{_lambda_.62} parent=5 // pred_check
      %p156 = pneg %p155
    $region14: #{_lambda_.62} parent=5 // pred_check_branch
      %158 = sbr.rel (%p156) target = $region16
    $region15: #{_lambda_.62} parent=5 // pred_region
      // Predicated region
      $region17: #{_lambda_.62} parent=15 // pred_check
        %p159 = pneg %p50
      $region18: #{_lambda_.62} parent=15 // pred_check_branch
        %161 = sbr.rel (%p159) target = $region20
      $region19: #{_lambda_.62} parent=15 // pred_region
        %p162 = scmp.lt.s32.totalorder %s16, 1
        %s163 = scalar_select %p162, %s16, 1
        %p164 = scmp.lt.s32.totalorder %s17, 0
        %s165 = scalar_select %p164, %s17, 0
        %s166 = sadd.s32 %s165, %s163
        %s167 = smul.addr %s166, 4
        %s168 = scalar_lea.vmem %s0, %s167
      $region20: #{_lambda_.62} parent=15 // pred_fallthru
        _
      // Predicated region
      $region21: #{_lambda_.62} parent=15 // pred_check
        %p169 = pneg %p78
      $region22: #{_lambda_.62} parent=15 // pred_check_branch
        %171 = sbr.rel (%p169) target = $region24
      $region23: #{_lambda_.62} parent=15 // pred_region
        %p172 = scmp.lt.s32.totalorder %s16, 1
        %s173 = scalar_select %p172, %s16, 1
        %p174 = scmp.lt.s32.totalorder %s18, 0
        %s175 = scalar_select %p174, %s18, 0
        %s176 = sadd.s32 %s175, %s173
        %s177 = smul.addr %s176, 4
        %s178 = scalar_lea.vmem %s1, %s177
      $region24: #{_lambda_.62} parent=15 // pred_fallthru
        _
      // Predicated region
      $region25: #{_lambda_.62} parent=15 // pred_check
        %p179 = pneg %p106
      $region26: #{_lambda_.62} parent=15 // pred_check_branch
        %181 = sbr.rel (%p179) target = $region28
      $region27: #{_lambda_.62} parent=15 // pred_region
        %p182 = scmp.lt.s32.totalorder %s16, 1
        %s183 = scalar_select %p182, %s16, 1
        %p184 = scmp.lt.s32.totalorder %s18, 0
        %s185 = scalar_select %p184, %s18, 0
        %s186 = sadd.s32 %s185, %s183
        %s187 = smul.addr %s186, 4
        %s188 = scalar_lea.vmem %s2, %s187
      $region28: #{_lambda_.62} parent=15 // pred_fallthru
        _
    $region16: #{_lambda_.62} parent=5 // pred_fallthru
      _
    %p189 = scmp.le.s32.totalorder 1, %s9
    %p190 = scmp.lt.s32.totalorder %s9, 3
    %p191 = pnand %p189, %p190
    %p192 = pneg %p191
    // Predicated region
    $region29: #{_lambda_.62} parent=5 // pred_check
      _
    $region30: #{_lambda_.62} parent=5 // pred_check_branch
      %194 = sbr.rel (%p191) target = $region32
    $region31: #{_lambda_.62} parent=5 // pred_region
      %s195 = ssub.s32 %s9, 1
      %p196 = scmp.lt.s32.totalorder %s19, 1
      %s197 = scalar_select %p196, %s19, 1
      %p198 = scmp.lt.s32.totalorder %s20, 0
      %s199 = scalar_select %p198, %s20, 0
      %s200 = sadd.s32 %s199, %s197
      %s201 = smul.addr %s200, 4
      %s202 = scalar_lea.vmem %s0, %s201
      %p203 = pneg %p56
      %p204 = pneg %p53
      %p205 = scmp.lt.s32.totalorder %s19, 1
      %s206 = scalar_select %p205, %s19, 1
      %p207 = scmp.lt.s32.totalorder %s21, 0
      %s208 = scalar_select %p207, %s21, 0
      %s209 = sadd.s32 %s208, %s206
      %s210 = smul.addr %s209, 4
      %s211 = scalar_lea.vmem %s1, %s210
      %p212 = pneg %p84
      %p213 = pneg %p81
      %p214 = scmp.lt.s32.totalorder %s19, 1
      %s215 = scalar_select %p214, %s19, 1
      %p216 = scmp.lt.s32.totalorder %s21, 0
      %s217 = scalar_select %p216, %s21, 0
      %s218 = sadd.s32 %s217, %s215
      %s219 = smul.addr %s218, 4
      %s220 = scalar_lea.vmem %s2, %s219
      %p221 = pneg %p112
      %p222 = pneg %p109
      %p223 = pneg %p140
      %p224 = pneg %p137
      %p225 = scmp.lt.s32.totalorder %s19, 1
      %s226 = scalar_select %p225, %s19, 1
      %p227 = scmp.lt.s32.totalorder %s20, 0
      %s228 = scalar_select %p227, %s20, 0
      %s229 = sadd.s32 %s228, %s226
      %s230 = smul.addr %s229, 4
      %s231 = scalar_lea.vmem %s3, %s230
      %p232 = scmp.lt.s32.totalorder %s19, 1
      %s233 = scalar_select %p232, %s19, 1
      %p234 = scmp.lt.s32.totalorder %s20, 0
      %s235 = scalar_select %p234, %s20, 0
      %s236 = sadd.s32 %s235, %s233
      %s237 = smul.addr %s236, 4
      %s238 = scalar_lea.vmem %s0, %s237
      %p239 = scmp.lt.s32.totalorder %s19, 1
      %s240 = scalar_select %p239, %s19, 1
      %p241 = scmp.lt.s32.totalorder %s21, 0
      %s242 = scalar_select %p241, %s21, 0
      %s243 = sadd.s32 %s242, %s240
      %s244 = smul.addr %s243, 4
      %s245 = scalar_lea.vmem %s1, %s244
      %p246 = scmp.lt.s32.totalorder %s19, 1
      %s247 = scalar_select %p246, %s19, 1
      %p248 = scmp.lt.s32.totalorder %s21, 0
      %s249 = scalar_select %p248, %s21, 0
      %s250 = sadd.s32 %s249, %s247
      %s251 = smul.addr %s250, 4
      %s252 = scalar_lea.vmem %s2, %s251
      %p253 = scmp.lt.s32.totalorder %s19, 1
      %s254 = scalar_select %p253, %s19, 1
      %p255 = scmp.lt.s32.totalorder %s20, 0
      %s256 = scalar_select %p255, %s20, 0
      %s257 = sadd.s32 %s256, %s254
      %s258 = smul.addr %s257, 4
      %s259 = scalar_lea.vmem %s3, %s258
      %p261 = scmp.eq.s32.totalorder %s21, 0
      // Predicated region
      $region33: #{_lambda_.62} parent=31 // pred_check
        %p262 = pneg %p261
      $region34: #{_lambda_.62} parent=31 // pred_check_branch
        %264 = sbr.rel (%p262) target = $region36
      $region35: #{_lambda_.62} parent=31 // pred_region
        %vm265 = vcmask 7168
        %266 = vst.msk [vmem:[#allocation2] sm:$0xff] %vm265, -inf
        %267 = vst.msk [vmem:[#allocation2 + $0x8] sm:$0xff] %vm265, -inf
        %268 = vst.msk [vmem:[#allocation3] sm:$0xff] %vm265, 0.0
        %269 = vst.msk [vmem:[#allocation3 + $0x8] sm:$0xff] %vm265, 0.0
        %vm270 = vcmask 130048
        %271 = vst.msk [vmem:[#allocation4] sm:$0xff] %vm270, 0.0
        %272 = vst.msk [vmem:[#allocation4 + $0x8] sm:$0xff] %vm270, 0.0
      $region36: #{_lambda_.62} parent=31 // pred_fallthru
        _
      %s273 = smul.u32 %s21, 8
      %s274 = sadd.s32 %s20, 1
      %s275 = smul.u32 %s274, 8
      %s276 = ssub.s32 %s275, 1
      %p277 = scmp.le.s32.totalorder %s273, %s276
      // Predicated region
      $region37: #{_lambda_.62} parent=31 // pred_check
        %p278 = pneg %p277
      $region38: #{_lambda_.62} parent=31 // pred_check_branch
        %280 = sbr.rel (%p278) target = $region40
      $region39: #{_lambda_.62} parent=31 // pred_region
        %v281 = vlaneseq
        %v282 = vand.u32 %v281, 127
        %v283 = vstv %s273
        %v284 = vadd.s32 %v283, %v282
        %vm285 = vcmp.lt.s32.totalorder %v284, 8
        %s286 = smul.u32 %s20, 8
        %v287 = vlaneseq
        %v288 = vshrl.u32 %v287, 7
        %v289 = vstv %s286
        %v290 = vadd.s32 %v289, %v288
        %vm291 = vcmp.le.s32.totalorder %v284, %v290
        %vm292 = vmand %vm285, %vm291
        %v293 = vld [vmem:[%s238] sm:$0xf]
        %v294 = vld [vmem:[%s245] sm:$0xf]
        %v295 = vld [vmem:[%s252] sm:$0xf]
        %vm296 = vcmask 130048
        %v298 = vsel %vm296, %v293, 0
        %v301 = vsel %vm296, %v294, 0
        %303 = vmatprep.subr.bf16.mxu0 0
        %304 = vmatpush1.bf16.xpose.msra.mxu0 %v301
        %305 = vmatprep.subr.bf16.mxu0 0
        %306 = vmatpush1.bf16.xpose.msra.mxu0 0
        %307 = vmatprep.subr.bf16.mxu0 0
        %308 = vmatpush1.bf16.xpose.msra.mxu0 0
        %309 = vmatprep.subr.bf16.mxu0 0
        %310 = vmatpush1.bf16.xpose.msra.mxu0 0
        %311 = vmatprep.subr.bf16.mxu0 0
        %312 = vmatpush1.bf16.xpose.msra.mxu0 0
        %313 = vmatprep.subr.bf16.mxu0 0
        %314 = vmatpush1.bf16.xpose.msra.mxu0 0
        %315 = vmatprep.subr.bf16.mxu0 0
        %316 = vmatpush1.bf16.xpose.msra.mxu0 0
        %317 = vmatprep.subr.bf16.mxu0 0
        %318 = vmatpush1.bf16.xpose.msra.mxu0 0
        %319 = vmatprep.subr.bf16.mxu0 0
        %320 = vmatpush1.bf16.xpose.msra.mxu0 0
        %321 = vmatprep.subr.bf16.mxu0 0
        %322 = vmatpush1.bf16.xpose.msra.mxu0 0
        %323 = vmatprep.subr.bf16.mxu0 0
        %324 = vmatpush1.bf16.xpose.msra.mxu0 0
        %325 = vmatprep.subr.bf16.mxu0 0
        %326 = vmatpush1.bf16.xpose.msra.mxu0 0
        %327 = vmatprep.subr.bf16.mxu0 0
        %328 = vmatpush1.bf16.xpose.msra.mxu0 0
        %329 = vmatprep.subr.bf16.mxu0 0
        %330 = vmatpush1.bf16.xpose.msra.mxu0 0
        %331 = vmatprep.subr.bf16.mxu0 0
        %332 = vmatpush1.bf16.xpose.msra.mxu0 0
        %333 = vmatprep.subr.bf16.mxu0 0
        %334 = vmatpush1.bf16.xpose.msra.mxu0 0
        %335 = vmatprep.mubr.bf16.mxu0 0
        %336 = vmatmul.mubr.bf16.gmra.mrb[0].mxu0 %v298
        %v337 = vpop.f32.mrb[0].mxu0
        %v338 = vadd.f32 0.0, %v337
        %v339 = vpop.f32.mrb[0].mxu0
        %v340 = vpop.f32.mrb[0].mxu0
        %v341 = vpop.f32.mrb[0].mxu0
        %342 = vdwg.mxu0
        %v343 = vmul.f32 %v338, 0.25
        %v344 = vsel %vm292, %v343, -1e+30
        %v345 = vld [vmem:[#allocation2] sm:$0xff]
        %vm346 = vcmask 64512
        %v347 = vsel %vm346, %v344, -inf
        %348 = vmax.xlane.f32.xlu0 %v347
        %v349 = vpop.xlane.xlu0 %348
        %v350 = vmax.f32 %v345, %v349
        %352 = vset.pattern.permute.xlu0 0
        %353 = vperm.xlu0 %352, %v350
        %v354 = vpop.permute.xlu0 %353
        %v356 = vsub.f32 %v344, %v354
        %v357 = vmul.f32 %v356, 1.442695
        %v358 = vpow.pop %v357
        %v359 = vsel %vm292, %v358, 0.0
        %v360 = vsub.f32 %v345, %v350
        %v361 = vmul.f32 %v360, 1.442695
        %v362 = vpow.pop %v361
        %v363 = vld [vmem:[#allocation3] sm:$0xff]
        %v364 = vmul.f32 %v362, %v363
        %v365 = vsel %vm346, %v359, 0.0
        %366 = vadd.xlane.f32.xlu0 %v365
        %v367 = vpop.xlane.xlu0 %366
        %v368 = vadd.f32 %v364, %v367
        %vm369 = vcmask 7168
        %370 = vst.msk [vmem:[#allocation3] sm:$0xff] %vm369, %v368
        %v371 = vld [vmem:[#allocation4] sm:$0xff]
        %373 = vset.pattern.permute.xlu0 0
        %374 = vperm.xlu0 %373, %v362
        %v375 = vpop.permute.xlu0 %374
        %v377 = vmul.f32 %v375, %v371
        %v378 = vpack.c.bf16 %v359, %v359
        %v380 = vsel %vm346, %v378, 0
        %vm382 = vcmask 1043456
        %v384 = vsel %vm382, %v295, 0
        %386 = vmatprep.subr.bf16.mxu0 0
        %387 = vmatpush1.bf16.msra.mxu0 %v384
        %388 = vmatprep.subr.bf16.mxu0 0
        %389 = vmatpush1.bf16.msra.mxu0 0
        %390 = vmatprep.subr.bf16.mxu0 0
        %391 = vmatpush1.bf16.msra.mxu0 0
        %392 = vmatprep.subr.bf16.mxu0 0
        %393 = vmatpush1.bf16.msra.mxu0 0
        %394 = vmatprep.subr.bf16.mxu0 0
        %395 = vmatpush1.bf16.msra.mxu0 0
        %396 = vmatprep.subr.bf16.mxu0 0
        %397 = vmatpush1.bf16.msra.mxu0 0
        %398 = vmatprep.subr.bf16.mxu0 0
        %399 = vmatpush1.bf16.msra.mxu0 0
        %400 = vmatprep.subr.bf16.mxu0 0
        %401 = vmatpush1.bf16.msra.mxu0 0
        %402 = vmatprep.subr.bf16.mxu0 0
        %403 = vmatpush1.bf16.msra.mxu0 0
        %404 = vmatprep.subr.bf16.mxu0 0
        %405 = vmatpush1.bf16.msra.mxu0 0
        %406 = vmatprep.subr.bf16.mxu0 0
        %407 = vmatpush1.bf16.msra.mxu0 0
        %408 = vmatprep.subr.bf16.mxu0 0
        %409 = vmatpush1.bf16.msra.mxu0 0
        %410 = vmatprep.subr.bf16.mxu0 0
        %411 = vmatpush1.bf16.msra.mxu0 0
        %412 = vmatprep.subr.bf16.mxu0 0
        %413 = vmatpush1.bf16.msra.mxu0 0
        %414 = vmatprep.subr.bf16.mxu0 0
        %415 = vmatpush1.bf16.msra.mxu0 0
        %416 = vmatprep.subr.bf16.mxu0 0
        %417 = vmatpush1.bf16.msra.mxu0 0
        %418 = vmatprep.mubr.bf16.mxu0 0
        %419 = vmatmul.mubr.bf16.gmra.mrb[0].mxu0 %v380
        %v420 = vpop.f32.mrb[0].mxu0
        %v421 = vadd.f32 0.0, %v420
        %v422 = vpop.f32.mrb[0].mxu0
        %v423 = vpop.f32.mrb[0].mxu0
        %v424 = vpop.f32.mrb[0].mxu0
        %425 = vdwg.mxu0
        %v426 = vadd.f32 %v377, %v421
        %427 = vst.msk [vmem:[#allocation4] sm:$0xff] %vm296, %v426
        %428 = vst.msk [vmem:[#allocation2] sm:$0xff] %vm369, %v350
        %v430 = vunpack.c.l.b16 %v293
        %v431 = vpack.c.b16 %v430, %v430
        %432 = vrot.lane.b32.xlu0 %v431, 112
        %v433 = vpop.permute.xlu0 %432
        %v435 = vunpack.c.l.b16 %v294
        %v436 = vpack.c.b16 %v435, %v435
        %437 = vrot.lane.b32.xlu0 %v436, 112
        %v438 = vpop.permute.xlu0 %437
        %v440 = vsel %vm296, %v433, 0
        %v443 = vsel %vm296, %v438, 0
        %445 = vmatprep.subr.bf16.mxu0 0
        %446 = vmatpush1.bf16.xpose.msra.mxu0 %v443
        %447 = vmatprep.subr.bf16.mxu0 0
        %448 = vmatpush1.bf16.xpose.msra.mxu0 0
        %449 = vmatprep.subr.bf16.mxu0 0
        %450 = vmatpush1.bf16.xpose.msra.mxu0 0
        %451 = vmatprep.subr.bf16.mxu0 0
        %452 = vmatpush1.bf16.xpose.msra.mxu0 0
        %453 = vmatprep.subr.bf16.mxu0 0
        %454 = vmatpush1.bf16.xpose.msra.mxu0 0
        %455 = vmatprep.subr.bf16.mxu0 0
        %456 = vmatpush1.bf16.xpose.msra.mxu0 0
        %457 = vmatprep.subr.bf16.mxu0 0
        %458 = vmatpush1.bf16.xpose.msra.mxu0 0
        %459 = vmatprep.subr.bf16.mxu0 0
        %460 = vmatpush1.bf16.xpose.msra.mxu0 0
        %461 = vmatprep.subr.bf16.mxu0 0
        %462 = vmatpush1.bf16.xpose.msra.mxu0 0
        %463 = vmatprep.subr.bf16.mxu0 0
        %464 = vmatpush1.bf16.xpose.msra.mxu0 0
        %465 = vmatprep.subr.bf16.mxu0 0
        %466 = vmatpush1.bf16.xpose.msra.mxu0 0
        %467 = vmatprep.subr.bf16.mxu0 0
        %468 = vmatpush1.bf16.xpose.msra.mxu0 0
        %469 = vmatprep.subr.bf16.mxu0 0
        %470 = vmatpush1.bf16.xpose.msra.mxu0 0
        %471 = vmatprep.subr.bf16.mxu0 0
        %472 = vmatpush1.bf16.xpose.msra.mxu0 0
        %473 = vmatprep.subr.bf16.mxu0 0
        %474 = vmatpush1.bf16.xpose.msra.mxu0 0
        %475 = vmatprep.subr.bf16.mxu0 0
        %476 = vmatpush1.bf16.xpose.msra.mxu0 0
        %477 = vmatprep.mubr.bf16.mxu0 0
        %478 = vmatmul.mubr.bf16.gmra.mrb[0].mxu0 %v440
        %v479 = vpop.f32.mrb[0].mxu0
        %v480 = vadd.f32 0.0, %v479
        %v481 = vpop.f32.mrb[0].mxu0
        %v482 = vpop.f32.mrb[0].mxu0
        %v483 = vpop.f32.mrb[0].mxu0
        %484 = vdwg.mxu0
        %v485 = vmul.f32 %v480, 0.25
        %v486 = vsel %vm292, %v485, -1e+30
        %s487 = scalar_lea.vmem [#allocation2], 8
        %v488 = vld [vmem:[%s487] sm:$0xff]
        %v489 = vsel %vm346, %v486, -inf
        %490 = vmax.xlane.f32.xlu0 %v489
        %v491 = vpop.xlane.xlu0 %490
        %v492 = vmax.f32 %v488, %v491
        %494 = vset.pattern.permute.xlu0 0
        %495 = vperm.xlu0 %494, %v492
        %v496 = vpop.permute.xlu0 %495
        %v498 = vsub.f32 %v486, %v496
        %v499 = vmul.f32 %v498, 1.442695
        %v500 = vpow.pop %v499
        %v501 = vsel %vm292, %v500, 0.0
        %v502 = vsub.f32 %v488, %v492
        %v503 = vmul.f32 %v502, 1.442695
        %v504 = vpow.pop %v503
        %s505 = scalar_lea.vmem [#allocation3], 8
        %v506 = vld [vmem:[%s505] sm:$0xff]
        %v507 = vmul.f32 %v504, %v506
        %v508 = vsel %vm346, %v501, 0.0
        %509 = vadd.xlane.f32.xlu0 %v508
        %v510 = vpop.xlane.xlu0 %509
        %v511 = vadd.f32 %v507, %v510
        %512 = vst.msk [vmem:[%s505] sm:$0xff] %vm369, %v511
        %s513 = scalar_lea.vmem [#allocation4], 8
        %v514 = vld [vmem:[%s513] sm:$0xff]
        %516 = vset.pattern.permute.xlu0 0
        %517 = vperm.xlu0 %516, %v504
        %v518 = vpop.permute.xlu0 %517
        %v520 = vmul.f32 %v518, %v514
        %v521 = vpack.c.bf16 %v501, %v501
        %v523 = vunpack.c.l.b16 %v295
        %v524 = vpack.c.b16 %v523, %v523
        %525 = vrot.lane.b32.xlu0 %v524, 112
        %v526 = vpop.permute.xlu0 %525
        %v528 = vsel %vm346, %v521, 0
        %v531 = vsel %vm382, %v526, 0
        %533 = vmatprep.subr.bf16.mxu0 0
        %534 = vmatpush1.bf16.msra.mxu0 %v531
        %535 = vmatprep.subr.bf16.mxu0 0
        %536 = vmatpush1.bf16.msra.mxu0 0
        %537 = vmatprep.subr.bf16.mxu0 0
        %538 = vmatpush1.bf16.msra.mxu0 0
        %539 = vmatprep.subr.bf16.mxu0 0
        %540 = vmatpush1.bf16.msra.mxu0 0
        %541 = vmatprep.subr.bf16.mxu0 0
        %542 = vmatpush1.bf16.msra.mxu0 0
        %543 = vmatprep.subr.bf16.mxu0 0
        %544 = vmatpush1.bf16.msra.mxu0 0
        %545 = vmatprep.subr.bf16.mxu0 0
        %546 = vmatpush1.bf16.msra.mxu0 0
        %547 = vmatprep.subr.bf16.mxu0 0
        %548 = vmatpush1.bf16.msra.mxu0 0
        %549 = vmatprep.subr.bf16.mxu0 0
        %550 = vmatpush1.bf16.msra.mxu0 0
        %551 = vmatprep.subr.bf16.mxu0 0
        %552 = vmatpush1.bf16.msra.mxu0 0
        %553 = vmatprep.subr.bf16.mxu0 0
        %554 = vmatpush1.bf16.msra.mxu0 0
        %555 = vmatprep.subr.bf16.mxu0 0
        %556 = vmatpush1.bf16.msra.mxu0 0
        %557 = vmatprep.subr.bf16.mxu0 0
        %558 = vmatpush1.bf16.msra.mxu0 0
        %559 = vmatprep.subr.bf16.mxu0 0
        %560 = vmatpush1.bf16.msra.mxu0 0
        %561 = vmatprep.subr.bf16.mxu0 0
        %562 = vmatpush1.bf16.msra.mxu0 0
        %563 = vmatprep.subr.bf16.mxu0 0
        %564 = vmatpush1.bf16.msra.mxu0 0
        %565 = vmatprep.mubr.bf16.mxu0 0
        %566 = vmatmul.mubr.bf16.gmra.mrb[0].mxu0 %v528
        %v567 = vpop.f32.mrb[0].mxu0
        %v568 = vadd.f32 0.0, %v567
        %v569 = vpop.f32.mrb[0].mxu0
        %v570 = vpop.f32.mrb[0].mxu0
        %v571 = vpop.f32.mrb[0].mxu0
        %572 = vdwg.mxu0
        %v573 = vadd.f32 %v520, %v568
        %574 = vst.msk [vmem:[%s513] sm:$0xff] %vm296, %v573
        %575 = vst.msk [vmem:[%s487] sm:$0xff] %vm369, %v492
      $region40: #{_lambda_.62} parent=31 // pred_fallthru
        _
      // Predicated region
      $region41: #{_lambda_.62} parent=31 // pred_check
        %p576 = pneg %p261
      $region42: #{_lambda_.62} parent=31 // pred_check_branch
        %578 = sbr.rel (%p576) target = $region44
      $region43: #{_lambda_.62} parent=31 // pred_region
        %v579 = vld [vmem:[#allocation4] sm:$0xff]
        %v580 = vld [vmem:[#allocation3] sm:$0xff]
        %582 = vset.pattern.permute.xlu0 0
        %583 = vperm.xlu0 %582, %v580
        %v584 = vpop.permute.xlu0 %583
        %v586 = vrcp.pop %v584
        %v587 = vmul.f32 %v579, %v586
        %s588 = scalar_lea.vmem [#allocation4], 8
        %v589 = vld [vmem:[%s588] sm:$0xff]
        %s590 = scalar_lea.vmem [#allocation3], 8
        %v591 = vld [vmem:[%s590] sm:$0xff]
        %593 = vset.pattern.permute.xlu0 0
        %594 = vperm.xlu0 %593, %v591
        %v595 = vpop.permute.xlu0 %594
        %v597 = vrcp.pop %v595
        %v598 = vmul.f32 %v589, %v597
        %600 = vrot.lane.b32.xlu0 %v598, 16
        %v601 = vpop.permute.xlu0 %600
        %vm603 = vcmask 130048
        %v604 = vsel %vm603, %v587, %v601
        %v605 = vpack.c.bf16 %v604, %v604
        %vm606 = vcmask 257024
        %607 = vst.msk [vmem:[%s259] sm:$0xf] %vm606, %v605
      $region44: #{_lambda_.62} parent=31 // pred_fallthru
        _
      %p608 = scmp.lt.s32.totalorder %s19, 1
      %s609 = scalar_select %p608, %s19, 1
      %p610 = scmp.lt.s32.totalorder %s20, 0
      %s611 = scalar_select %p610, %s20, 0
      %s612 = sadd.s32 %s611, %s609
      %s613 = smul.addr %s612, 4
      %s614 = scalar_lea.vmem %s3, %s613
      // Predicated region
      $region45: #{_lambda_.62} parent=31 // pred_check
        %p615 = pneg %p137
      $region46: #{_lambda_.62} parent=31 // pred_check_branch
        %617 = sbr.rel (%p615) target = $region48
      $region47: #{_lambda_.62} parent=31 // pred_region
        _
      $region48: #{_lambda_.62} parent=31 // pred_fallthru
        _
    $region32: #{_lambda_.62} parent=5 // pred_fallthru
      _
    %p618 = scmp.le.s32.totalorder 2, %s9
    // Predicated region
    $region49: #{_lambda_.62} parent=5 // pred_check
      %p619 = pneg %p618
    $region50: #{_lambda_.62} parent=5 // pred_check_branch
      %621 = sbr.rel (%p619) target = $region52
    $region51: #{_lambda_.62} parent=5 // pred_region
      %s622 = ssub.s32 %s9, 2
      // Predicated region
      $region53: #{_lambda_.62} parent=51 // pred_check
        %p623 = pneg %p143
      $region54: #{_lambda_.62} parent=51 // pred_check_branch
        %625 = sbr.rel (%p623) target = $region56
      $region55: #{_lambda_.62} parent=51 // pred_region
        %p626 = scmp.lt.s32.totalorder %s22, 1
        %s627 = scalar_select %p626, %s22, 1
        %p628 = scmp.lt.s32.totalorder %s23, 0
        %s629 = scalar_select %p628, %s23, 0
        %s630 = sadd.s32 %s629, %s627
        %s631 = smul.addr %s630, 4
        %s632 = scalar_lea.vmem %s3, %s631
      $region56: #{_lambda_.62} parent=51 // pred_fallthru
        _
    $region52: #{_lambda_.62} parent=5 // pred_fallthru
      _
  $region6: #{_lambda_.62} parent=0 // loop_footer
    %s13 = sadd.s32 1, %s9
  $region7: #{_lambda_.62} parent=0 // loop_footer_branch
    %8 = sbr.rel target = $region3
  $region8: #{_lambda_.62} parent=0 // loop_exit
    _

</llo_original>
